<compile_context>
chip_gen: v7x
topology: tpu7x:2x2x1
jax: 0.10.0
libtpu: 0.0.40
codegen_flags: <defaults>
</compile_context>

<pallas_src>
import jax
import jax.numpy as jnp
from jax import lax
from jax.experimental import pallas as pl
from jax.experimental.pallas import tpu as pltpu


_LANE = 128       # TPU lane width; channel/contraction dims padded to a multiple
_ROW_CHUNK = 128  # rows accumulated in vregs per store (16 f32 vregs for the acc)


def _round_up(x, m):
    return ((x + m - 1) // m) * m


def _make_block_kernel(W, M1, M2, y_rows, bblk, row_chunk):
    """Fused conv1(im2col GEMM) -> ReLU -> conv2(9 shifted-window taps) kernel."""
    halo = y_rows - M1
    offs = [kh * W + kw for kh in range(3) for kw in range(3)]

    def kernel(xcol_ref, w1_ref, b1_ref, w2_ref, b2_ref, o_ref, y_ref):
        # xcol_ref: (bblk, M1, K1p)   im2col'd conv1 operand (taps folded into lanes)
        # w1_ref  : (K1p, Cout_p)     folded conv1 weight
        # b1_ref  : (1, Cout_p) f32   b2_ref: (1, Cout_p) f32
        # w2_ref  : (9, Cout_p, Cout_p)
        # o_ref   : (bblk, M2, Cout_p)
        # y_ref   : VMEM (y_rows, Cout_p) scratch for the conv1 output (+ zero halo)
        cout_p = o_ref.shape[-1]

        # Zero the halo rows; conv2's bottom-right taps read rows [M1, M1+2) for
        # output columns the wrapper crops.  Done every step (scratch is per-core).
        y_ref[pl.ds(M1, halo), :] = jnp.zeros((halo, cout_p), y_ref.dtype)

        # Hoist the bias loads/broadcasts out of the per-image loop.
        b1v = b1_ref[...]
        b2v = b2_ref[...]

        for b in range(bblk):
            # ---- conv1: single tap-folded GEMM per chunk, bias+ReLU fused, one store
            for m0 in range(0, M1, row_chunk):
                mlen = min(row_chunk, M1 - m0)
                acc = jnp.dot(xcol_ref[b, pl.ds(m0, mlen), :], w1_ref[...],
                              preferred_element_type=jnp.float32)
                y_ref[pl.ds(m0, mlen), :] = jnp.maximum(
                    acc + b1v, 0.0).astype(y_ref.dtype)

            # ---- conv2: 9 shifted sublane windows of y, value-level accumulation,
            #      b2 fused into the single chunk store.
            for m0 in range(0, M2, row_chunk):
                mlen = min(row_chunk, M2 - m0)
                acc = jnp.dot(y_ref[pl.ds(m0 + offs[0], mlen), :], w2_ref[0],
                              preferred_element_type=jnp.float32)
                for k in range(1, 9):
                    acc = acc + jnp.dot(y_ref[pl.ds(m0 + offs[k], mlen), :], w2_ref[k],
                                        preferred_element_type=jnp.float32)
                o_ref[b, pl.ds(m0, mlen), :] = (acc + b2v).astype(o_ref.dtype)

    return kernel


def block_forward(x_nchw, w1, b1, w2, b2, *, compute_dtype=None):
    """Fused Conv2d(3x3, valid) -> ReLU -> Conv2d(3x3, valid).

    x_nchw: (N, Cin, H, W); w1: (3,3,Cin,Cout); b1: (Cout,);
    w2: (3,3,Cout,Cout); b2: (Cout,).  Returns (N, Cout, H-4, W-4).
    compute_dtype: optional MXU operand dtype (e.g. jnp.bfloat16); accumulation and
    the returned output stay float32.
    """
    N, Cin, H, W = x_nchw.shape
    Cout = w1.shape[-1]
    Ho2, Wo2 = H - 4, W - 4
    assert Ho2 > 0 and Wo2 > 0, "input spatial dims must be >= 5"

    out_dtype = x_nchw.dtype
    op_dtype = jnp.dtype(compute_dtype) if compute_dtype is not None else jnp.dtype(out_dtype)
    op_bytes = op_dtype.itemsize
    out_bytes = jnp.dtype(out_dtype).itemsize

    M1 = (H - 2) * W            # conv1 rows (full width; last 2 cols garbage, cropped)
    M2 = Ho2 * W                # conv2 rows (full width; last 4 cols garbage, cropped)
    K1 = 9 * Cin                # folded conv1 contraction dim
    K1p = _round_up(K1, _LANE)
    cout_p = _round_up(Cout, _LANE)
    y_rows = _round_up(M1 + 2, 8)   # conv2 reads up to y row M1+1; extra rows zeroed

    # ---- VMEM-budgeted, generation-aware batch blocking -------------------------
    per_img_in = M1 * K1p * op_bytes
    per_img_out = M2 * cout_p * out_bytes
    fixed = (2 * (K1p * cout_p + 9 * cout_p * cout_p) * op_bytes   # double-buffered weights
             + 2 * 2 * cout_p * 4                                  # biases
             + y_rows * cout_p * op_bytes)                         # y scratch
    budget = 20 << 20
    bblk_cap = 1
    for cand in range(1, N + 1):
        if 2 * cand * (per_img_in + per_img_out) + fixed <= budget:
            bblk_cap = cand
    try:
        kind = jax.devices()[0].device_kind.lower()
    except Exception:
        kind = ""
    single_tc = any(t in kind for t in ("v5e", "v5 lite", "v5lite", "v6e", "v6 lite", "v6lite"))
    if single_tc or N == 1:
        bblk = bblk_cap                       # fatter blocks: fewer fixed-overhead steps
    else:
        bblk = max(1, min(bblk_cap, N // 2))  # keep >=2 grid steps for 2-TC chips (v7x)
    n_steps = pl.cdiv(N, bblk)
    n_pad = n_steps * bblk
    vmem_needed = 2 * bblk * (per_img_in + per_img_out) + fixed
    vmem_limit = int(min(max(2 * vmem_needed, 32 << 20), 48 << 20))

    # ---- wrapper-side im2col for conv1 (tap folding) -----------------------------
    # xcol[n, r, k*Cin + c] = x_flat[n, r + kh*W + kw, c],  k = kh*3 + kw
    x_rows = jnp.transpose(x_nchw, (0, 2, 3, 1)).astype(op_dtype).reshape(N, H * W, Cin)
    x_rows = jnp.pad(x_rows, ((0, 0), (0, 2), (0, 0)))   # bottom-right taps of garbage cols
    offs = [kh * W + kw for kh in range(3) for kw in range(3)]
    xcol = jnp.concatenate([x_rows[:, o:o + M1, :] for o in offs], axis=-1)  # (N, M1, 9*Cin)
    xcol = jnp.pad(xcol, ((0, n_pad - N), (0, 0), (0, K1p - K1)))

    # ---- weights / biases ---------------------------------------------------------
    w1_fold = jnp.pad(w1.astype(op_dtype).reshape(K1, Cout),
                      ((0, K1p - K1), (0, cout_p - Cout)))
    w2_p = jnp.pad(w2.astype(op_dtype),
                   ((0, 0), (0, 0), (0, cout_p - Cout), (0, cout_p - Cout)))
    w2_p = w2_p.reshape(9, cout_p, cout_p)
    b1_p = jnp.pad(b1.astype(jnp.float32), (0, cout_p - Cout)).reshape(1, cout_p)
    b2_p = jnp.pad(b2.astype(jnp.float32), (0, cout_p - Cout)).reshape(1, cout_p)

    kernel = _make_block_kernel(W, M1, M2, y_rows, bblk, _ROW_CHUNK)

    # Cost estimate of the *padded* work actually executed.
    flops = 2 * n_pad * (M1 * K1p * cout_p + 9 * M2 * cout_p * cout_p)
    bytes_accessed = (n_pad * M1 * K1p * op_bytes
                      + (K1p * cout_p + 9 * cout_p * cout_p) * op_bytes
                      + 2 * cout_p * 4
                      + n_pad * M2 * cout_p * out_bytes)

    out_flat = pl.pallas_call(
        kernel,
        out_shape=jax.ShapeDtypeStruct((n_pad, M2, cout_p), out_dtype),
        grid_spec=pltpu.PrefetchScalarGridSpec(
            num_scalar_prefetch=0,
            grid=(n_pad // bblk,),
            in_specs=[
                pl.BlockSpec((bblk, M1, K1p), lambda n: (n, 0, 0)),
                pl.BlockSpec((K1p, cout_p), lambda n: (0, 0)),
                pl.BlockSpec((1, cout_p), lambda n: (0, 0)),
                pl.BlockSpec((9, cout_p, cout_p), lambda n: (0, 0, 0)),
                pl.BlockSpec((1, cout_p), lambda n: (0, 0)),
            ],
            out_specs=pl.BlockSpec((bblk, M2, cout_p), lambda n: (n, 0, 0)),
            scratch_shapes=[
                pltpu.VMEM((y_rows, cout_p), op_dtype),   # conv1 output + zero halo
            ],
        ),
        compiler_params=pltpu.CompilerParams(
            dimension_semantics=("parallel",),
            vmem_limit_bytes=vmem_limit),
        cost_estimate=pl.CostEstimate(
            flops=flops, transcendentals=0, bytes_accessed=bytes_accessed),
    )(xcol, w1_fold, b1_p, w2_p, b2_p)

    # (n_pad, Ho2*W, cout_p) -> crop garbage columns / padding -> NCHW.
    out = out_flat.reshape(n_pad, Ho2, W, cout_p)[:N, :, :Wo2, :Cout]
    return jnp.transpose(out, (0, 3, 1, 2)).astype(out_dtype)


def _reference_forward(x_nchw, w1, b1, w2, b2):
    """Pure-JAX reference using lax.conv (NCHW / OIHW, like PyTorch)."""
    w1_oihw = jnp.transpose(w1, (3, 2, 0, 1))
    w2_oihw = jnp.transpose(w2, (3, 2, 0, 1))
    y = lax.conv_general_dilated(x_nchw, w1_oihw, (1, 1), "VALID",
                                 dimension_numbers=("NCHW", "OIHW", "NCHW"),
                                 precision=lax.Precision.HIGHEST)
    y = jnp.maximum(y + b1[None, :, None, None], 0.0)
    z = lax.conv_general_dilated(y, w2_oihw, (1, 1), "VALID",
                                 dimension_numbers=("NCHW", "OIHW", "NCHW"),
                                 precision=lax.Precision.HIGHEST)
    return z + b2[None, :, None, None]


if __name__ == "__main__":
    key = jax.random.PRNGKey(0)
    k_x, k_w1, k_b1, k_w2, k_b2 = jax.random.split(key, 5)

    # Small shapes consistent with the module's forward.
    N, Cin, Cout, H, W = 2, 4, 8, 16, 16

    x = jax.random.normal(k_x, (N, Cin, H, W), dtype=jnp.float32)

    # Deterministic parameter init (uniform, PyTorch-style fan-in bound).
    bound1 = 1.0 / (Cin * 9) ** 0.5
    bound2 = 1.0 / (Cout * 9) ** 0.5
    w1 = jax.random.uniform(k_w1, (3, 3, Cin, Cout), jnp.float32, -bound1, bound1)
    b1 = jax.random.uniform(k_b1, (Cout,), jnp.float32, -bound1, bound1)
    w2 = jax.random.uniform(k_w2, (3, 3, Cout, Cout), jnp.float32, -bound2, bound2)
    b2 = jax.random.uniform(k_b2, (Cout,), jnp.float32, -bound2, bound2)

    ref = _reference_forward(x, w1, b1, w2, b2)

    # Exact-ish f32 path.
    out = block_forward(x, w1, b1, w2, b2)
    jax.block_until_ready(out)
    assert out.shape == (N, Cout, H - 4, W - 4), out.shape
    assert jnp.allclose(out, ref, atol=1e-4, rtol=1e-4), \
        float(jnp.max(jnp.abs(out - ref)))

    # bf16-operand fast path (native MXU throughput on v6e/v7x); f32 accumulation.
    out_bf16 = block_forward(x, w1, b1, w2, b2, compute_dtype=jnp.bfloat16)
    jax.block_until_ready(out_bf16)
    assert out_bf16.shape == (N, Cout, H - 4, W - 4), out_bf16.shape
    assert jnp.allclose(out_bf16, ref, atol=5e-2, rtol=5e-2), \
        float(jnp.max(jnp.abs(out_bf16 - ref)))

    print("KERNEL_OK")
</pallas_src>

<mosaic_0001>
module attributes {stable_mosaic.version = 11 : i64} {
  func.func @kernel(%arg0: i32, %arg1: memref<1x224x128xf32, #tpu.memory_space<vmem>>, %arg2: memref<128x128xf32, #tpu.memory_space<vmem>>, %arg3: memref<1x128xf32, #tpu.memory_space<vmem>>, %arg4: memref<9x128x128xf32, #tpu.memory_space<vmem>>, %arg5: memref<1x128xf32, #tpu.memory_space<vmem>>, %arg6: memref<1x192x128xf32, #tpu.memory_space<vmem>>, %arg7: memref<232x128xf32, #tpu.memory_space<vmem>>) attributes {dimension_semantics = [#tpu.dimension_semantics<parallel>], iteration_bounds = array<i64: 2>, scalar_prefetch = 0 : i64, scratch_operands = 1 : i64, tpu.core_type = #tpu.core_type<tc>, window_params = [{transform_indices = @transform_0, window_bounds = array<i64: 1, 224, 128>}, {pipeline_mode = #tpu.pipeline_mode<synchronous>, transform_indices = @transform_1, window_bounds = array<i64: 128, 128>}, {pipeline_mode = #tpu.pipeline_mode<synchronous>, transform_indices = @transform_2, window_bounds = array<i64: 1, 128>}, {pipeline_mode = #tpu.pipeline_mode<synchronous>, transform_indices = @transform_3, window_bounds = array<i64: 9, 128, 128>}, {pipeline_mode = #tpu.pipeline_mode<synchronous>, transform_indices = @transform_4, window_bounds = array<i64: 1, 128>}, {transform_indices = @transform_5, window_bounds = array<i64: 1, 192, 128>}]} {
    %cst = arith.constant 0.000000e+00 : f32
    %0 = vector.broadcast %cst : f32 to vector<8x128xf32>
    %c224 = arith.constant 224 : index
    %c0 = arith.constant 0 : index
    %1 = vector.load %arg7[%c224, %c0] : memref<232x128xf32, #tpu.memory_space<vmem>>, vector<8x128xf32>
    tpu.vector_store %arg7[%c224, %c0], %0 {strides = array<i32>} : memref<232x128xf32, #tpu.memory_space<vmem>>, vector<8x128xf32>,
    %c0_0 = arith.constant 0 : index
    %c0_1 = arith.constant 0 : index
    %2 = vector.load %arg3[%c0_0, %c0_1] : memref<1x128xf32, #tpu.memory_space<vmem>>, vector<1x128xf32>
    %c0_2 = arith.constant 0 : index
    %c0_3 = arith.constant 0 : index
    %3 = vector.load %arg5[%c0_2, %c0_3] : memref<1x128xf32, #tpu.memory_space<vmem>>, vector<1x128xf32>
    %c0_4 = arith.constant 0 : index
    %c0_5 = arith.constant 0 : index
    %c0_6 = arith.constant 0 : index
    %4 = vector.load %arg1[%c0_4, %c0_5, %c0_6] : memref<1x224x128xf32, #tpu.memory_space<vmem>>, vector<1x128x128xf32>
    %5 = vector.shape_cast %4 : vector<1x128x128xf32> to vector<128x128xf32>
    %c0_7 = arith.constant 0 : index
    %c0_8 = arith.constant 0 : index
    %6 = vector.load %arg2[%c0_7, %c0_8] : memref<128x128xf32, #tpu.memory_space<vmem>>, vector<128x128xf32>
    %cst_9 = arith.constant dense<0.000000e+00> : vector<128x128xf32>
    %7 = tpu.matmul %5, %6, %cst_9 {dimension_numbers = #tpu.dot_dimension_numbers<[1], [0], [0], [1], [0, 0, 1, 1], [], []>} : vector<128x128xf32>, vector<128x128xf32>, vector<128x128xf32> -> vector<128x128xf32>
    %8 = vector.broadcast %2 : vector<1x128xf32> to vector<128x128xf32>
    %9 = arith.addf %7, %8 : vector<128x128xf32>
    %cst_10 = arith.constant 0.000000e+00 : f32
    %10 = vector.broadcast %cst_10 : f32 to vector<128x128xf32>
    %11 = arith.maximumf %9, %10 : vector<128x128xf32>
    %c0_11 = arith.constant 0 : index
    %c0_12 = arith.constant 0 : index
    %12 = vector.load %arg7[%c0_11, %c0_12] : memref<232x128xf32, #tpu.memory_space<vmem>>, vector<128x128xf32>
    tpu.vector_store %arg7[%c0_11, %c0_12], %11 {strides = array<i32>} : memref<232x128xf32, #tpu.memory_space<vmem>>, vector<128x128xf32>,
    %c0_13 = arith.constant 0 : index
    %c128 = arith.constant 128 : index
    %c0_14 = arith.constant 0 : index
    %13 = vector.load %arg1[%c0_13, %c128, %c0_14] : memref<1x224x128xf32, #tpu.memory_space<vmem>>, vector<1x96x128xf32>
    %14 = vector.shape_cast %13 : vector<1x96x128xf32> to vector<96x128xf32>
    %c0_15 = arith.constant 0 : index
    %c0_16 = arith.constant 0 : index
    %15 = vector.load %arg2[%c0_15, %c0_16] : memref<128x128xf32, #tpu.memory_space<vmem>>, vector<128x128xf32>
    %cst_17 = arith.constant dense<0.000000e+00> : vector<96x128xf32>
    %16 = tpu.matmul %14, %15, %cst_17 {dimension_numbers = #tpu.dot_dimension_numbers<[1], [0], [0], [1], [0, 0, 1, 1], [], []>} : vector<96x128xf32>, vector<128x128xf32>, vector<96x128xf32> -> vector<96x128xf32>
    %17 = vector.broadcast %2 : vector<1x128xf32> to vector<96x128xf32>
    %18 = arith.addf %16, %17 : vector<96x128xf32>
    %cst_18 = arith.constant 0.000000e+00 : f32
    %19 = vector.broadcast %cst_18 : f32 to vector<96x128xf32>
    %20 = arith.maximumf %18, %19 : vector<96x128xf32>
    %c128_19 = arith.constant 128 : index
    %c0_20 = arith.constant 0 : index
    %21 = vector.load %arg7[%c128_19, %c0_20] : memref<232x128xf32, #tpu.memory_space<vmem>>, vector<96x128xf32>
    tpu.vector_store %arg7[%c128_19, %c0_20], %20 {strides = array<i32>} : memref<232x128xf32, #tpu.memory_space<vmem>>, vector<96x128xf32>,
    %c0_21 = arith.constant 0 : index
    %c0_22 = arith.constant 0 : index
    %22 = vector.load %arg7[%c0_21, %c0_22] : memref<232x128xf32, #tpu.memory_space<vmem>>, vector<128x128xf32>
    %c0_23 = arith.constant 0 : index
    %c0_24 = arith.constant 0 : index
    %c0_25 = arith.constant 0 : index
    %23 = vector.load %arg4[%c0_23, %c0_24, %c0_25] : memref<9x128x128xf32, #tpu.memory_space<vmem>>, vector<1x128x128xf32>
    %24 = vector.shape_cast %23 : vector<1x128x128xf32> to vector<128x128xf32>
    %cst_26 = arith.constant dense<0.000000e+00> : vector<128x128xf32>
    %25 = tpu.matmul %22, %24, %cst_26 {dimension_numbers = #tpu.dot_dimension_numbers<[1], [0], [0], [1], [0, 0, 1, 1], [], []>} : vector<128x128xf32>, vector<128x128xf32>, vector<128x128xf32> -> vector<128x128xf32>
    %c1 = arith.constant 1 : index
    %c0_27 = arith.constant 0 : index
    %26 = vector.load %arg7[%c1, %c0_27] : memref<232x128xf32, #tpu.memory_space<vmem>>, vector<128x128xf32>
    %c1_28 = arith.constant 1 : index
    %c0_29 = arith.constant 0 : index
    %c0_30 = arith.constant 0 : index
    %27 = vector.load %arg4[%c1_28, %c0_29, %c0_30] : memref<9x128x128xf32, #tpu.memory_space<vmem>>, vector<1x128x128xf32>
    %28 = vector.shape_cast %27 : vector<1x128x128xf32> to vector<128x128xf32>
    %cst_31 = arith.constant dense<0.000000e+00> : vector<128x128xf32>
    %29 = tpu.matmul %26, %28, %cst_31 {dimension_numbers = #tpu.dot_dimension_numbers<[1], [0], [0], [1], [0, 0, 1, 1], [], []>} : vector<128x128xf32>, vector<128x128xf32>, vector<128x128xf32> -> vector<128x128xf32>
    %30 = arith.addf %25, %29 : vector<128x128xf32>
    %c2 = arith.constant 2 : index
    %c0_32 = arith.constant 0 : index
    %31 = vector.load %arg7[%c2, %c0_32] : memref<232x128xf32, #tpu.memory_space<vmem>>, vector<128x128xf32>
    %c2_33 = arith.constant 2 : index
    %c0_34 = arith.constant 0 : index
    %c0_35 = arith.constant 0 : index
    %32 = vector.load %arg4[%c2_33, %c0_34, %c0_35] : memref<9x128x128xf32, #tpu.memory_space<vmem>>, vector<1x128x128xf32>
    %33 = vector.shape_cast %32 : vector<1x128x128xf32> to vector<128x128xf32>
    %cst_36 = arith.constant dense<0.000000e+00> : vector<128x128xf32>
    %34 = tpu.matmul %31, %33, %cst_36 {dimension_numbers = #tpu.dot_dimension_numbers<[1], [0], [0], [1], [0, 0, 1, 1], [], []>} : vector<128x128xf32>, vector<128x128xf32>, vector<128x128xf32> -> vector<128x128xf32>
    %35 = arith.addf %30, %34 : vector<128x128xf32>
    %c16 = arith.constant 16 : index
    %c0_37 = arith.constant 0 : index
    %36 = vector.load %arg7[%c16, %c0_37] : memref<232x128xf32, #tpu.memory_space<vmem>>, vector<128x128xf32>
    %c3 = arith.constant 3 : index
    %c0_38 = arith.constant 0 : index
    %c0_39 = arith.constant 0 : index
    %37 = vector.load %arg4[%c3, %c0_38, %c0_39] : memref<9x128x128xf32, #tpu.memory_space<vmem>>, vector<1x128x128xf32>
    %38 = vector.shape_cast %37 : vector<1x128x128xf32> to vector<128x128xf32>
    %cst_40 = arith.constant dense<0.000000e+00> : vector<128x128xf32>
    %39 = tpu.matmul %36, %38, %cst_40 {dimension_numbers = #tpu.dot_dimension_numbers<[1], [0], [0], [1], [0, 0, 1, 1], [], []>} : vector<128x128xf32>, vector<128x128xf32>, vector<128x128xf32> -> vector<128x128xf32>
    %40 = arith.addf %35, %39 : vector<128x128xf32>
    %c17 = arith.constant 17 : index
    %c0_41 = arith.constant 0 : index
    %41 = vector.load %arg7[%c17, %c0_41] : memref<232x128xf32, #tpu.memory_space<vmem>>, vector<128x128xf32>
    %c4 = arith.constant 4 : index
    %c0_42 = arith.constant 0 : index
    %c0_43 = arith.constant 0 : index
    %42 = vector.load %arg4[%c4, %c0_42, %c0_43] : memref<9x128x128xf32, #tpu.memory_space<vmem>>, vector<1x128x128xf32>
    %43 = vector.shape_cast %42 : vector<1x128x128xf32> to vector<128x128xf32>
    %cst_44 = arith.constant dense<0.000000e+00> : vector<128x128xf32>
    %44 = tpu.matmul %41, %43, %cst_44 {dimension_numbers = #tpu.dot_dimension_numbers<[1], [0], [0], [1], [0, 0, 1, 1], [], []>} : vector<128x128xf32>, vector<128x128xf32>, vector<128x128xf32> -> vector<128x128xf32>
    %45 = arith.addf %40, %44 : vector<128x128xf32>
    %c18 = arith.constant 18 : index
    %c0_45 = arith.constant 0 : index
    %46 = vector.load %arg7[%c18, %c0_45] : memref<232x128xf32, #tpu.memory_space<vmem>>, vector<128x128xf32>
    %c5 = arith.constant 5 : index
    %c0_46 = arith.constant 0 : index
    %c0_47 = arith.constant 0 : index
    %47 = vector.load %arg4[%c5, %c0_46, %c0_47] : memref<9x128x128xf32, #tpu.memory_space<vmem>>, vector<1x128x128xf32>
    %48 = vector.shape_cast %47 : vector<1x128x128xf32> to vector<128x128xf32>
    %cst_48 = arith.constant dense<0.000000e+00> : vector<128x128xf32>
    %49 = tpu.matmul %46, %48, %cst_48 {dimension_numbers = #tpu.dot_dimension_numbers<[1], [0], [0], [1], [0, 0, 1, 1], [], []>} : vector<128x128xf32>, vector<128x128xf32>, vector<128x128xf32> -> vector<128x128xf32>
    %50 = arith.addf %45, %49 : vector<128x128xf32>
    %c32 = arith.constant 32 : index
    %c0_49 = arith.constant 0 : index
    %51 = vector.load %arg7[%c32, %c0_49] : memref<232x128xf32, #tpu.memory_space<vmem>>, vector<128x128xf32>
    %c6 = arith.constant 6 : index
    %c0_50 = arith.constant 0 : index
    %c0_51 = arith.constant 0 : index
    %52 = vector.load %arg4[%c6, %c0_50, %c0_51] : memref<9x128x128xf32, #tpu.memory_space<vmem>>, vector<1x128x128xf32>
    %53 = vector.shape_cast %52 : vector<1x128x128xf32> to vector<128x128xf32>
    %cst_52 = arith.constant dense<0.000000e+00> : vector<128x128xf32>
    %54 = tpu.matmul %51, %53, %cst_52 {dimension_numbers = #tpu.dot_dimension_numbers<[1], [0], [0], [1], [0, 0, 1, 1], [], []>} : vector<128x128xf32>, vector<128x128xf32>, vector<128x128xf32> -> vector<128x128xf32>
    %55 = arith.addf %50, %54 : vector<128x128xf32>
    %c33 = arith.constant 33 : index
    %c0_53 = arith.constant 0 : index
    %56 = vector.load %arg7[%c33, %c0_53] : memref<232x128xf32, #tpu.memory_space<vmem>>, vector<128x128xf32>
    %c7 = arith.constant 7 : index
    %c0_54 = arith.constant 0 : index
    %c0_55 = arith.constant 0 : index
    %57 = vector.load %arg4[%c7, %c0_54, %c0_55] : memref<9x128x128xf32, #tpu.memory_space<vmem>>, vector<1x128x128xf32>
    %58 = vector.shape_cast %57 : vector<1x128x128xf32> to vector<128x128xf32>
    %cst_56 = arith.constant dense<0.000000e+00> : vector<128x128xf32>
    %59 = tpu.matmul %56, %58, %cst_56 {dimension_numbers = #tpu.dot_dimension_numbers<[1], [0], [0], [1], [0, 0, 1, 1], [], []>} : vector<128x128xf32>, vector<128x128xf32>, vector<128x128xf32> -> vector<128x128xf32>
    %60 = arith.addf %55, %59 : vector<128x128xf32>
    %c34 = arith.constant 34 : index
    %c0_57 = arith.constant 0 : index
    %61 = vector.load %arg7[%c34, %c0_57] : memref<232x128xf32, #tpu.memory_space<vmem>>, vector<128x128xf32>
    %c8 = arith.constant 8 : index
    %c0_58 = arith.constant 0 : index
    %c0_59 = arith.constant 0 : index
    %62 = vector.load %arg4[%c8, %c0_58, %c0_59] : memref<9x128x128xf32, #tpu.memory_space<vmem>>, vector<1x128x128xf32>
    %63 = vector.shape_cast %62 : vector<1x128x128xf32> to vector<128x128xf32>
    %cst_60 = arith.constant dense<0.000000e+00> : vector<128x128xf32>
    %64 = tpu.matmul %61, %63, %cst_60 {dimension_numbers = #tpu.dot_dimension_numbers<[1], [0], [0], [1], [0, 0, 1, 1], [], []>} : vector<128x128xf32>, vector<128x128xf32>, vector<128x128xf32> -> vector<128x128xf32>
    %65 = arith.addf %60, %64 : vector<128x128xf32>
    %66 = vector.broadcast %3 : vector<1x128xf32> to vector<128x128xf32>
    %67 = arith.addf %65, %66 : vector<128x128xf32>
    %c0_61 = arith.constant 0 : index
    %c0_62 = arith.constant 0 : index
    %c0_63 = arith.constant 0 : index
    %68 = vector.load %arg6[%c0_61, %c0_62, %c0_63] : memref<1x192x128xf32, #tpu.memory_space<vmem>>, vector<1x128x128xf32>
    %69 = vector.shape_cast %68 : vector<1x128x128xf32> to vector<128x128xf32>
    %70 = vector.shape_cast %67 : vector<128x128xf32> to vector<1x128x128xf32>
    tpu.vector_store %arg6[%c0_61, %c0_62, %c0_63], %70 {strides = array<i32>} : memref<1x192x128xf32, #tpu.memory_space<vmem>>, vector<1x128x128xf32>,
    %c128_64 = arith.constant 128 : index
    %c0_65 = arith.constant 0 : index
    %71 = vector.load %arg7[%c128_64, %c0_65] : memref<232x128xf32, #tpu.memory_space<vmem>>, vector<64x128xf32>
    %c0_66 = arith.constant 0 : index
    %c0_67 = arith.constant 0 : index
    %c0_68 = arith.constant 0 : index
    %72 = vector.load %arg4[%c0_66, %c0_67, %c0_68] : memref<9x128x128xf32, #tpu.memory_space<vmem>>, vector<1x128x128xf32>
    %73 = vector.shape_cast %72 : vector<1x128x128xf32> to vector<128x128xf32>
    %cst_69 = arith.constant dense<0.000000e+00> : vector<64x128xf32>
    %74 = tpu.matmul %71, %73, %cst_69 {dimension_numbers = #tpu.dot_dimension_numbers<[1], [0], [0], [1], [0, 0, 1, 1], [], []>} : vector<64x128xf32>, vector<128x128xf32>, vector<64x128xf32> -> vector<64x128xf32>
    %c129 = arith.constant 129 : index
    %c0_70 = arith.constant 0 : index
    %75 = vector.load %arg7[%c129, %c0_70] : memref<232x128xf32, #tpu.memory_space<vmem>>, vector<64x128xf32>
    %c1_71 = arith.constant 1 : index
    %c0_72 = arith.constant 0 : index
    %c0_73 = arith.constant 0 : index
    %76 = vector.load %arg4[%c1_71, %c0_72, %c0_73] : memref<9x128x128xf32, #tpu.memory_space<vmem>>, vector<1x128x128xf32>
    %77 = vector.shape_cast %76 : vector<1x128x128xf32> to vector<128x128xf32>
    %cst_74 = arith.constant dense<0.000000e+00> : vector<64x128xf32>
    %78 = tpu.matmul %75, %77, %cst_74 {dimension_numbers = #tpu.dot_dimension_numbers<[1], [0], [0], [1], [0, 0, 1, 1], [], []>} : vector<64x128xf32>, vector<128x128xf32>, vector<64x128xf32> -> vector<64x128xf32>
    %79 = arith.addf %74, %78 : vector<64x128xf32>
    %c130 = arith.constant 130 : index
    %c0_75 = arith.constant 0 : index
    %80 = vector.load %arg7[%c130, %c0_75] : memref<232x128xf32, #tpu.memory_space<vmem>>, vector<64x128xf32>
    %c2_76 = arith.constant 2 : index
    %c0_77 = arith.constant 0 : index
    %c0_78 = arith.constant 0 : index
    %81 = vector.load %arg4[%c2_76, %c0_77, %c0_78] : memref<9x128x128xf32, #tpu.memory_space<vmem>>, vector<1x128x128xf32>
    %82 = vector.shape_cast %81 : vector<1x128x128xf32> to vector<128x128xf32>
    %cst_79 = arith.constant dense<0.000000e+00> : vector<64x128xf32>
    %83 = tpu.matmul %80, %82, %cst_79 {dimension_numbers = #tpu.dot_dimension_numbers<[1], [0], [0], [1], [0, 0, 1, 1], [], []>} : vector<64x128xf32>, vector<128x128xf32>, vector<64x128xf32> -> vector<64x128xf32>
    %84 = arith.addf %79, %83 : vector<64x128xf32>
    %c144 = arith.constant 144 : index
    %c0_80 = arith.constant 0 : index
    %85 = vector.load %arg7[%c144, %c0_80] : memref<232x128xf32, #tpu.memory_space<vmem>>, vector<64x128xf32>
    %c3_81 = arith.constant 3 : index
    %c0_82 = arith.constant 0 : index
    %c0_83 = arith.constant 0 : index
    %86 = vector.load %arg4[%c3_81, %c0_82, %c0_83] : memref<9x128x128xf32, #tpu.memory_space<vmem>>, vector<1x128x128xf32>
    %87 = vector.shape_cast %86 : vector<1x128x128xf32> to vector<128x128xf32>
    %cst_84 = arith.constant dense<0.000000e+00> : vector<64x128xf32>
    %88 = tpu.matmul %85, %87, %cst_84 {dimension_numbers = #tpu.dot_dimension_numbers<[1], [0], [0], [1], [0, 0, 1, 1], [], []>} : vector<64x128xf32>, vector<128x128xf32>, vector<64x128xf32> -> vector<64x128xf32>
    %89 = arith.addf %84, %88 : vector<64x128xf32>
    %c145 = arith.constant 145 : index
    %c0_85 = arith.constant 0 : index
    %90 = vector.load %arg7[%c145, %c0_85] : memref<232x128xf32, #tpu.memory_space<vmem>>, vector<64x128xf32>
    %c4_86 = arith.constant 4 : index
    %c0_87 = arith.constant 0 : index
    %c0_88 = arith.constant 0 : index
    %91 = vector.load %arg4[%c4_86, %c0_87, %c0_88] : memref<9x128x128xf32, #tpu.memory_space<vmem>>, vector<1x128x128xf32>
    %92 = vector.shape_cast %91 : vector<1x128x128xf32> to vector<128x128xf32>
    %cst_89 = arith.constant dense<0.000000e+00> : vector<64x128xf32>
    %93 = tpu.matmul %90, %92, %cst_89 {dimension_numbers = #tpu.dot_dimension_numbers<[1], [0], [0], [1], [0, 0, 1, 1], [], []>} : vector<64x128xf32>, vector<128x128xf32>, vector<64x128xf32> -> vector<64x128xf32>
    %94 = arith.addf %89, %93 : vector<64x128xf32>
    %c146 = arith.constant 146 : index
    %c0_90 = arith.constant 0 : index
    %95 = vector.load %arg7[%c146, %c0_90] : memref<232x128xf32, #tpu.memory_space<vmem>>, vector<64x128xf32>
    %c5_91 = arith.constant 5 : index
    %c0_92 = arith.constant 0 : index
    %c0_93 = arith.constant 0 : index
    %96 = vector.load %arg4[%c5_91, %c0_92, %c0_93] : memref<9x128x128xf32, #tpu.memory_space<vmem>>, vector<1x128x128xf32>
    %97 = vector.shape_cast %96 : vector<1x128x128xf32> to vector<128x128xf32>
    %cst_94 = arith.constant dense<0.000000e+00> : vector<64x128xf32>
    %98 = tpu.matmul %95, %97, %cst_94 {dimension_numbers = #tpu.dot_dimension_numbers<[1], [0], [0], [1], [0, 0, 1, 1], [], []>} : vector<64x128xf32>, vector<128x128xf32>, vector<64x128xf32> -> vector<64x128xf32>
    %99 = arith.addf %94, %98 : vector<64x128xf32>
    %c160 = arith.constant 160 : index
    %c0_95 = arith.constant 0 : index
    %100 = vector.load %arg7[%c160, %c0_95] : memref<232x128xf32, #tpu.memory_space<vmem>>, vector<64x128xf32>
    %c6_96 = arith.constant 6 : index
    %c0_97 = arith.constant 0 : index
    %c0_98 = arith.constant 0 : index
    %101 = vector.load %arg4[%c6_96, %c0_97, %c0_98] : memref<9x128x128xf32, #tpu.memory_space<vmem>>, vector<1x128x128xf32>
    %102 = vector.shape_cast %101 : vector<1x128x128xf32> to vector<128x128xf32>
    %cst_99 = arith.constant dense<0.000000e+00> : vector<64x128xf32>
    %103 = tpu.matmul %100, %102, %cst_99 {dimension_numbers = #tpu.dot_dimension_numbers<[1], [0], [0], [1], [0, 0, 1, 1], [], []>} : vector<64x128xf32>, vector<128x128xf32>, vector<64x128xf32> -> vector<64x128xf32>
    %104 = arith.addf %99, %103 : vector<64x128xf32>
    %c161 = arith.constant 161 : index
    %c0_100 = arith.constant 0 : index
    %105 = vector.load %arg7[%c161, %c0_100] : memref<232x128xf32, #tpu.memory_space<vmem>>, vector<64x128xf32>
    %c7_101 = arith.constant 7 : index
    %c0_102 = arith.constant 0 : index
    %c0_103 = arith.constant 0 : index
    %106 = vector.load %arg4[%c7_101, %c0_102, %c0_103] : memref<9x128x128xf32, #tpu.memory_space<vmem>>, vector<1x128x128xf32>
    %107 = vector.shape_cast %106 : vector<1x128x128xf32> to vector<128x128xf32>
    %cst_104 = arith.constant dense<0.000000e+00> : vector<64x128xf32>
    %108 = tpu.matmul %105, %107, %cst_104 {dimension_numbers = #tpu.dot_dimension_numbers<[1], [0], [0], [1], [0, 0, 1, 1], [], []>} : vector<64x128xf32>, vector<128x128xf32>, vector<64x128xf32> -> vector<64x128xf32>
    %109 = arith.addf %104, %108 : vector<64x128xf32>
    %c162 = arith.constant 162 : index
    %c0_105 = arith.constant 0 : index
    %110 = vector.load %arg7[%c162, %c0_105] : memref<232x128xf32, #tpu.memory_space<vmem>>, vector<64x128xf32>
    %c8_106 = arith.constant 8 : index
    %c0_107 = arith.constant 0 : index
    %c0_108 = arith.constant 0 : index
    %111 = vector.load %arg4[%c8_106, %c0_107, %c0_108] : memref<9x128x128xf32, #tpu.memory_space<vmem>>, vector<1x128x128xf32>
    %112 = vector.shape_cast %111 : vector<1x128x128xf32> to vector<128x128xf32>
    %cst_109 = arith.constant dense<0.000000e+00> : vector<64x128xf32>
    %113 = tpu.matmul %110, %112, %cst_109 {dimension_numbers = #tpu.dot_dimension_numbers<[1], [0], [0], [1], [0, 0, 1, 1], [], []>} : vector<64x128xf32>, vector<128x128xf32>, vector<64x128xf32> -> vector<64x128xf32>
    %114 = arith.addf %109, %113 : vector<64x128xf32>
    %115 = vector.broadcast %3 : vector<1x128xf32> to vector<64x128xf32>
    %116 = arith.addf %114, %115 : vector<64x128xf32>
    %c0_110 = arith.constant 0 : index
    %c128_111 = arith.constant 128 : index
    %c0_112 = arith.constant 0 : index
    %117 = vector.load %arg6[%c0_110, %c128_111, %c0_112] : memref<1x192x128xf32, #tpu.memory_space<vmem>>, vector<1x64x128xf32>
    %118 = vector.shape_cast %117 : vector<1x64x128xf32> to vector<64x128xf32>
    %119 = vector.shape_cast %116 : vector<64x128xf32> to vector<1x64x128xf32>
    tpu.vector_store %arg6[%c0_110, %c128_111, %c0_112], %119 {strides = array<i32>} : memref<1x192x128xf32, #tpu.memory_space<vmem>>, vector<1x64x128xf32>,
    return
  }
  func.func @transform_0(%arg0: i32) -> (i32, i32, i32) {
    %c0_i32 = arith.constant 0 : i32
    %c0_i32_0 = arith.constant 0 : i32
    %c0_i32_1 = arith.constant 0 : i32
    return %arg0, %c0_i32, %c0_i32_0 : i32, i32, i32
  }
  func.func @transform_1(%arg0: i32) -> (i32, i32) {
    %c0_i32 = arith.constant 0 : i32
    %c0_i32_0 = arith.constant 0 : i32
    %c0_i32_1 = arith.constant 0 : i32
    return %c0_i32, %c0_i32_0 : i32, i32
  }
  func.func @transform_2(%arg0: i32) -> (i32, i32) {
    %c0_i32 = arith.constant 0 : i32
    %c0_i32_0 = arith.constant 0 : i32
    %c0_i32_1 = arith.constant 0 : i32
    return %c0_i32, %c0_i32_0 : i32, i32
  }
  func.func @transform_3(%arg0: i32) -> (i32, i32, i32) {
    %c0_i32 = arith.constant 0 : i32
    %c0_i32_0 = arith.constant 0 : i32
    %c0_i32_1 = arith.constant 0 : i32
    %c0_i32_2 = arith.constant 0 : i32
    return %c0_i32, %c0_i32_0, %c0_i32_1 : i32, i32, i32
  }
  func.func @transform_4(%arg0: i32) -> (i32, i32) {
    %c0_i32 = arith.constant 0 : i32
    %c0_i32_0 = arith.constant 0 : i32
    %c0_i32_1 = arith.constant 0 : i32
    return %c0_i32, %c0_i32_0 : i32, i32
  }
  func.func @transform_5(%arg0: i32) -> (i32, i32, i32) {
    %c0_i32 = arith.constant 0 : i32
    %c0_i32_0 = arith.constant 0 : i32
    %c0_i32_1 = arith.constant 0 : i32
    return %arg0, %c0_i32, %c0_i32_0 : i32, i32, i32
  }
}

</mosaic_0001>

<llo_original>
// kernel: tpu_custom_call.1
$region0: #{tpu_custom_call.1}
  #allocation0 [shape = 'u32[]', space=smem, size = 0x4, offset = 0x4, fixed_abs, tag = 'smem constant byte address 0x4 - core index']
  #allocation1 [shape = 'u32[144,128]{1,0:T(1,128)}', space=vmem, size = 0x12000, scoped, tag = 'internal scratch']
  #allocation2 [shape = 'f32[232,128]{1,0:T(8,128)}', space=vmem, size = 0x1d000, scoped, tag = 'scratch operand']
  %s0 = inlined_call_operand.hbm [shape: f32[2,224,128], index: 0, kind: input, shape index: {}]
  %s1 = inlined_call_operand.hbm [shape: f32[128,128], index: 1, kind: input, shape index: {}]
  %s2 = inlined_call_operand.vmem [shape: f32[1,128], index: 2, kind: input, shape index: {}]
  %s3 = inlined_call_operand.hbm [shape: f32[9,128,128], index: 3, kind: input, shape index: {}]
  %s4 = inlined_call_operand.vmem [shape: f32[1,128], index: 4, kind: input, shape index: {}]
  %s5 = inlined_call_operand.hbm [shape: f32[2,192,128], index: 5, kind: output, shape index: {}]
  %s6 = sld [smem:[#allocation0]]
  $region65: #{tpu_custom_call.1} parent=0
    _
  %s8 = ssub.s32 1, %s6
  %s9 = scalar_select 0, %s8, %s6
  $region1: #{tpu_custom_call.1} parent=0
    #allocation3 [shape = 'u8[229376]{0}', space=vmem, size = 0x38000, scoped, tag = 'input window, operand 0']
    #allocation4 [shape = 's32[2]{0}', space=sflag, size = 0x8, scoped, tag = 'scoped memory for tpu_custom_call.1']
    #allocation5 [shape = 's32[2]{0}', space=sflag, size = 0x8, scoped, tag = 'scoped memory for tpu_custom_call.1']
    #allocation6 [shape = 'u8[65536]{0}', space=vmem, size = 0x10000, scoped, tag = 'input window, operand 1, single buffered']
    #allocation7 [shape = 's32[1]{0}', space=sflag, size = 0x4, scoped, tag = 'scoped memory for tpu_custom_call.1']
    #allocation8 [shape = 'u8[589824]{0}', space=vmem, size = 0x90000, scoped, tag = 'input window, operand 3, single buffered']
    #allocation9 [shape = 'u8[196608]{0}', space=vmem, size = 0x30000, scoped, tag = 'output window, operand 0']
    %10 = vsyncpa [#allocation4], 0
    %s11 = scalar_lea.sflag [#allocation4], 1
    %12 = vsyncpa %s11, 0
    %13 = vsyncpa [#allocation7], 0
    %14 = vsyncpa [#allocation5], 0
    %s15 = scalar_lea.sflag [#allocation5], 1
    %16 = vsyncpa %s15, 0
    loop: start=0, step=1, limit=4
    $region2: #{tpu_custom_call.1} parent=1 // loop_pre_header
      _
    $region3: #{tpu_custom_call.1} parent=1 // loop_header
      %s18 = sphi 0, %s22
      %p19 = scmp.ge.s32.totalorder %s18, 4
      %s28 = sphi 0, %s30
      %s31 = sphi 0, %s28
      %s32 = sphi 0, %s31
      %s48 = sphi 0, %s32
      %s52 = sphi 0, %s52
      %s54 = sphi 0, %s52
      %s55 = sphi 0, %s54
      %s69 = sphi 0, %s55
      %s73 = sphi 0, %s73
      %s75 = sphi 0, %s73
      %s76 = sphi 0, %s75
      %s90 = sphi 0, %s76
      %s94 = sphi 0, %s94
      %s96 = sphi 0, %s94
      %s97 = sphi 0, %s96
      %s111 = sphi 0, %s97
      %s115 = sphi 0, %s115
      %s117 = sphi 0, %s115
      %s118 = sphi 0, %s117
      %s132 = sphi 0, %s118
      %s138 = sphi 0, %s140
      %s141 = sphi 0, %s138
      %s142 = sphi 0, %s141
      %s158 = sphi 0, %s142
    $region4: #{tpu_custom_call.1} parent=1 // loop_header_branch
      %21 = sbr.rel (%p19) target = $region8
    $region5: #{tpu_custom_call.1} parent=1 // loop_body
      %s23 = ssub.s32 %s18, 1
      %s24 = ssub.s32 %s18, 2
      %s25 = sadd.s32 %s18, 1
      %s26 = ssub.s32 %s18, %s25
      %p27 = scmp.eq.s32.totalorder %s26, 0
      %s29 = sadd.s32 %s28, 1
      %s30 = scalar_select %p27, %s28, %s29
      %p33 = pneg %p27
      %p34 = scmp.eq.s32.totalorder %s18, 1
      %p35 = por %p33, %p34
      %p36 = scmp.ne.s32.totalorder %s28, %s31
      %p37 = scmp.eq.s32.totalorder %s18, 0
      %p38 = por %p36, %p37
      %p39 = scmp.ne.s32.totalorder %s28, %s31
      %p40 = scmp.eq.s32.totalorder %s23, 1
      %p41 = por %p39, %p40
      %p42 = scmp.ne.s32.totalorder %s31, %s32
      %p43 = scmp.eq.s32.totalorder %s23, 0
      %p44 = por %p42, %p43
      %p45 = scmp.ne.s32.totalorder %s31, %s32
      %p46 = scmp.eq.s32.totalorder %s24, 1
      %p47 = por %p45, %p46
      %p49 = scmp.ne.s32.totalorder %s32, %s48
      %p50 = scmp.eq.s32.totalorder %s24, 0
      %p51 = por %p49, %p50
      %s53 = sadd.s32 %s52, 1
      %p56 = scmp.eq.s32.totalorder %s18, 1
      %p57 = scmp.ne.s32.totalorder %s52, %s54
      %p58 = scmp.eq.s32.totalorder %s18, 0
      %p59 = por %p57, %p58
      %p60 = scmp.ne.s32.totalorder %s52, %s54
      %p61 = scmp.eq.s32.totalorder %s23, 1
      %p62 = por %p60, %p61
      %p63 = scmp.ne.s32.totalorder %s54, %s55
      %p64 = scmp.eq.s32.totalorder %s23, 0
      %p65 = por %p63, %p64
      %p66 = scmp.ne.s32.totalorder %s54, %s55
      %p67 = scmp.eq.s32.totalorder %s24, 1
      %p68 = por %p66, %p67
      %p70 = scmp.ne.s32.totalorder %s55, %s69
      %p71 = scmp.eq.s32.totalorder %s24, 0
      %p72 = por %p70, %p71
      %s74 = sadd.s32 %s73, 1
      %p77 = scmp.eq.s32.totalorder %s18, 1
      %p78 = scmp.ne.s32.totalorder %s73, %s75
      %p79 = scmp.eq.s32.totalorder %s18, 0
      %p80 = por %p78, %p79
      %p81 = scmp.ne.s32.totalorder %s73, %s75
      %p82 = scmp.eq.s32.totalorder %s23, 1
      %p83 = por %p81, %p82
      %p84 = scmp.ne.s32.totalorder %s75, %s76
      %p85 = scmp.eq.s32.totalorder %s23, 0
      %p86 = por %p84, %p85
      %p87 = scmp.ne.s32.totalorder %s75, %s76
      %p88 = scmp.eq.s32.totalorder %s24, 1
      %p89 = por %p87, %p88
      %p91 = scmp.ne.s32.totalorder %s76, %s90
      %p92 = scmp.eq.s32.totalorder %s24, 0
      %p93 = por %p91, %p92
      %s95 = sadd.s32 %s94, 1
      %p98 = scmp.eq.s32.totalorder %s18, 1
      %p99 = scmp.ne.s32.totalorder %s94, %s96
      %p100 = scmp.eq.s32.totalorder %s18, 0
      %p101 = por %p99, %p100
      %p102 = scmp.ne.s32.totalorder %s94, %s96
      %p103 = scmp.eq.s32.totalorder %s23, 1
      %p104 = por %p102, %p103
      %p105 = scmp.ne.s32.totalorder %s96, %s97
      %p106 = scmp.eq.s32.totalorder %s23, 0
      %p107 = por %p105, %p106
      %p108 = scmp.ne.s32.totalorder %s96, %s97
      %p109 = scmp.eq.s32.totalorder %s24, 1
      %p110 = por %p108, %p109
      %p112 = scmp.ne.s32.totalorder %s97, %s111
      %p113 = scmp.eq.s32.totalorder %s24, 0
      %p114 = por %p112, %p113
      %s116 = sadd.s32 %s115, 1
      %p119 = scmp.eq.s32.totalorder %s18, 1
      %p120 = scmp.ne.s32.totalorder %s115, %s117
      %p121 = scmp.eq.s32.totalorder %s18, 0
      %p122 = por %p120, %p121
      %p123 = scmp.ne.s32.totalorder %s115, %s117
      %p124 = scmp.eq.s32.totalorder %s23, 1
      %p125 = por %p123, %p124
      %p126 = scmp.ne.s32.totalorder %s117, %s118
      %p127 = scmp.eq.s32.totalorder %s23, 0
      %p128 = por %p126, %p127
      %p129 = scmp.ne.s32.totalorder %s117, %s118
      %p130 = scmp.eq.s32.totalorder %s24, 1
      %p131 = por %p129, %p130
      %p133 = scmp.ne.s32.totalorder %s118, %s132
      %p134 = scmp.eq.s32.totalorder %s24, 0
      %p135 = por %p133, %p134
      %s136 = ssub.s32 %s18, %s25
      %p137 = scmp.eq.s32.totalorder %s136, 0
      %s139 = sadd.s32 %s138, 1
      %s140 = scalar_select %p137, %s138, %s139
      %p143 = pneg %p137
      %p144 = scmp.eq.s32.totalorder %s18, 1
      %p145 = por %p143, %p144
      %p146 = scmp.ne.s32.totalorder %s138, %s141
      %p147 = scmp.eq.s32.totalorder %s18, 0
      %p148 = por %p146, %p147
      %p149 = scmp.ne.s32.totalorder %s138, %s141
      %p150 = scmp.eq.s32.totalorder %s23, 1
      %p151 = por %p149, %p150
      %p152 = scmp.ne.s32.totalorder %s141, %s142
      %p153 = scmp.eq.s32.totalorder %s23, 0
      %p154 = por %p152, %p153
      %p155 = scmp.ne.s32.totalorder %s141, %s142
      %p156 = scmp.eq.s32.totalorder %s24, 1
      %p157 = por %p155, %p156
      %p159 = scmp.ne.s32.totalorder %s142, %s158
      %p160 = scmp.eq.s32.totalorder %s24, 0
      %p161 = por %p159, %p160
      %p162 = scmp.le.s32.totalorder 1, %s18
      %p163 = scmp.lt.s32.totalorder %s18, 3
      %p164 = pnand %p162, %p163
      %p165 = pneg %p164
      // Predicated region
      $region9: #{tpu_custom_call.1} parent=5 // pred_check
        _
      $region10: #{tpu_custom_call.1} parent=5 // pred_check_branch
        %167 = sbr.rel (%p164) target = $region12
      $region11: #{tpu_custom_call.1} parent=5 // pred_region
        %s168 = ssub.s32 %s18, 1
        // Predicated region
        $region13: #{tpu_custom_call.1} parent=11 // pred_check
          %p169 = pneg %p65
        $region14: #{tpu_custom_call.1} parent=11 // pred_check_branch
          %171 = sbr.rel (%p169) target = $region16
        $region15: #{tpu_custom_call.1} parent=11 // pred_region
          %s173 = ssub.s32 2048, 2048
          %174 = vsyncadd [#allocation7], %s173
          %s175 = sshll.u32 [#allocation6], 4
          %s176 = int_to_ptr.vmem [resolvable:$true] %s175
          %181 = dma.hbm_to_vmem [thread:$0]  %s1, 2048, %s176, [#allocation7], 128, 128, 8
        $region16: #{tpu_custom_call.1} parent=11 // pred_fallthru
          _
        // Predicated region
        $region17: #{tpu_custom_call.1} parent=11 // pred_check
          %p182 = pneg %p86
        $region18: #{tpu_custom_call.1} parent=11 // pred_check_branch
          %184 = sbr.rel (%p182) target = $region20
        $region19: #{tpu_custom_call.1} parent=11 // pred_region
          _
        $region20: #{tpu_custom_call.1} parent=11 // pred_fallthru
          _
        // Predicated region
        $region21: #{tpu_custom_call.1} parent=11 // pred_check
          %p185 = pneg %p107
        $region22: #{tpu_custom_call.1} parent=11 // pred_check_branch
          %187 = sbr.rel (%p185) target = $region24
        $region23: #{tpu_custom_call.1} parent=11 // pred_region
          %s189 = ssub.s32 18432, 18432
          %190 = vsyncadd [#allocation7], %s189
          %s191 = sshll.u32 [#allocation8], 4
          %s192 = int_to_ptr.vmem [resolvable:$true] %s191
          %197 = dma.hbm_to_vmem [thread:$0]  %s3, 18432, %s192, [#allocation7], 128, 128, 8
        $region24: #{tpu_custom_call.1} parent=11 // pred_fallthru
          _
        // Predicated region
        $region25: #{tpu_custom_call.1} parent=11 // pred_check
          %p198 = pneg %p128
        $region26: #{tpu_custom_call.1} parent=11 // pred_check_branch
          %200 = sbr.rel (%p198) target = $region28
        $region27: #{tpu_custom_call.1} parent=11 // pred_region
          _
        $region28: #{tpu_custom_call.1} parent=11 // pred_fallthru
          _
      $region12: #{tpu_custom_call.1} parent=5 // pred_fallthru
        _
      %p201 = scmp.lt.s32.totalorder %s18, 2
      // Predicated region
      $region29: #{tpu_custom_call.1} parent=5 // pred_check
        %p202 = pneg %p201
      $region30: #{tpu_custom_call.1} parent=5 // pred_check_branch
        %204 = sbr.rel (%p202) target = $region32
      $region31: #{tpu_custom_call.1} parent=5 // pred_region
        // Predicated region
        $region33: #{tpu_custom_call.1} parent=31 // pred_check
          %p205 = pneg %p38
        $region34: #{tpu_custom_call.1} parent=31 // pred_check_branch
          %207 = sbr.rel (%p205) target = $region36
        $region35: #{tpu_custom_call.1} parent=31 // pred_region
          %s208 = sand.u32 %s28, 1
          %s209 = scalar_lea.sflag [#allocation4], %s208
          %s210 = sand.u32 %s28, 1
          %s211 = smul.addr %s210, 224
          %s212 = scalar_lea.vmem [#allocation3], %s211
          %s214 = ssub.s32 3584, 3584
          %215 = vsyncadd %s209, %s214
          %s216 = smul.addr %s18, 28
          %s217 = smul.addr %s216, 128
          %s218 = scalar_lea.hbm %s0, %s217
          %s219 = sshll.u32 %s212, 4
          %s220 = int_to_ptr.vmem [resolvable:$true] %s219
          %225 = dma.hbm_to_vmem [thread:$0]  %s218, 3584, %s220, %s209, 128, 128, 8
        $region36: #{tpu_custom_call.1} parent=31 // pred_fallthru
          _
      $region32: #{tpu_custom_call.1} parent=5 // pred_fallthru
        _
      %p226 = scmp.le.s32.totalorder 1, %s18
      %p227 = scmp.lt.s32.totalorder %s18, 3
      %p228 = pnand %p226, %p227
      %p229 = pneg %p228
      // Predicated region
      $region37: #{tpu_custom_call.1} parent=5 // pred_check
        _
      $region38: #{tpu_custom_call.1} parent=5 // pred_check_branch
        %231 = sbr.rel (%p228) target = $region40
      $region39: #{tpu_custom_call.1} parent=5 // pred_region
        %s232 = ssub.s32 %s18, 1
        %s233 = sand.u32 %s31, 1
        %s234 = scalar_lea.sflag [#allocation4], %s233
        %s235 = sand.u32 %s31, 1
        %s236 = smul.addr %s235, 224
        %s237 = scalar_lea.vmem [#allocation3], %s236
        // Predicated region
        $region41: #{tpu_custom_call.1} parent=39 // pred_check
          %p238 = pneg %p44
        $region42: #{tpu_custom_call.1} parent=39 // pred_check_branch
          %240 = sbr.rel (%p238) target = $region44
        $region43: #{tpu_custom_call.1} parent=39 // pred_region
          %241 = dma.done %s234, 3584
        $region44: #{tpu_custom_call.1} parent=39 // pred_fallthru
          _
        // Predicated region
        $region45: #{tpu_custom_call.1} parent=39 // pred_check
          %p242 = pneg %p65
        $region46: #{tpu_custom_call.1} parent=39 // pred_check_branch
          %244 = sbr.rel (%p242) target = $region48
        $region47: #{tpu_custom_call.1} parent=39 // pred_region
          %245 = dma.done [#allocation7], 2048
        $region48: #{tpu_custom_call.1} parent=39 // pred_fallthru
          _
        // Predicated region
        $region49: #{tpu_custom_call.1} parent=39 // pred_check
          %p246 = pneg %p107
        $region50: #{tpu_custom_call.1} parent=39 // pred_check_branch
          %248 = sbr.rel (%p246) target = $region52
        $region51: #{tpu_custom_call.1} parent=39 // pred_region
          %249 = dma.done [#allocation7], 18432
        $region52: #{tpu_custom_call.1} parent=39 // pred_fallthru
          _
        %s250 = sand.u32 %s31, 1
        %s251 = scalar_lea.sflag [#allocation4], %s250
        %s252 = sand.u32 %s31, 1
        %s253 = smul.addr %s252, 224
        %s254 = scalar_lea.vmem [#allocation3], %s253
        %p255 = pneg %p44
        %p256 = pneg %p41
        %p257 = pneg %p65
        %p258 = pneg %p62
        %p259 = pneg %p86
        %p260 = pneg %p83
        %p261 = pneg %p107
        %p262 = pneg %p104
        %p263 = pneg %p128
        %p264 = pneg %p125
        %p265 = pneg %p154
        %p266 = pneg %p151
        %s267 = sand.u32 %s141, 1
        %s268 = scalar_lea.sflag [#allocation5], %s267
        %s269 = sand.u32 %s141, 1
        %s270 = smul.addr %s269, 192
        %s271 = scalar_lea.vmem [#allocation9], %s270
        %272 = vst [vmem:[#allocation2 + $0xe0] sm:$0xff] 0.0
        %v273 = vld [vmem:[%s2] sm:$0x1]
        %v274 = vld [vmem:[%s4] sm:$0x1]
        %v275 = vld [vmem:[%s237] sm:$0xff]
        %v276 = vld [vmem:[%s237 + $0x8] sm:$0xff]
        %v277 = vld [vmem:[%s237 + $0x10] sm:$0xff]
        %v278 = vld [vmem:[%s237 + $0x18] sm:$0xff]
        %v279 = vld [vmem:[%s237 + $0x20] sm:$0xff]
        %v280 = vld [vmem:[%s237 + $0x28] sm:$0xff]
        %v281 = vld [vmem:[%s237 + $0x30] sm:$0xff]
        %v282 = vld [vmem:[%s237 + $0x38] sm:$0xff]
        %v283 = vld [vmem:[%s237 + $0x40] sm:$0xff]
        %v284 = vld [vmem:[%s237 + $0x48] sm:$0xff]
        %v285 = vld [vmem:[%s237 + $0x50] sm:$0xff]
        %v286 = vld [vmem:[%s237 + $0x58] sm:$0xff]
        %v287 = vld [vmem:[%s237 + $0x60] sm:$0xff]
        %v288 = vld [vmem:[%s237 + $0x68] sm:$0xff]
        %v289 = vld [vmem:[%s237 + $0x70] sm:$0xff]
        %v290 = vld [vmem:[%s237 + $0x78] sm:$0xff]
        %v291 = vld [vmem:[#allocation6] sm:$0xff]
        %v292 = vld [vmem:[#allocation6 + $0x8] sm:$0xff]
        %v293 = vld [vmem:[#allocation6 + $0x10] sm:$0xff]
        %v294 = vld [vmem:[#allocation6 + $0x18] sm:$0xff]
        %v295 = vld [vmem:[#allocation6 + $0x20] sm:$0xff]
        %v296 = vld [vmem:[#allocation6 + $0x28] sm:$0xff]
        %v297 = vld [vmem:[#allocation6 + $0x30] sm:$0xff]
        %v298 = vld [vmem:[#allocation6 + $0x38] sm:$0xff]
        %v299 = vld [vmem:[#allocation6 + $0x40] sm:$0xff]
        %v300 = vld [vmem:[#allocation6 + $0x48] sm:$0xff]
        %v301 = vld [vmem:[#allocation6 + $0x50] sm:$0xff]
        %v302 = vld [vmem:[#allocation6 + $0x58] sm:$0xff]
        %v303 = vld [vmem:[#allocation6 + $0x60] sm:$0xff]
        %v304 = vld [vmem:[#allocation6 + $0x68] sm:$0xff]
        %v305 = vld [vmem:[#allocation6 + $0x70] sm:$0xff]
        %v306 = vld [vmem:[#allocation6 + $0x78] sm:$0xff]
        %v308 = vlaneseq
        %v309 = vshrl.u32 %v308, 7
        %v310 = vsub.s32 0, %v309
        %v311 = vrot.slane %v273, %v310
        %313 = vmatprep.subr.mxu0 0.0
        %314 = vmatpush1.msra.mxu0 %v291
        %315 = vmatprep.subr.mxu0 0.0
        %316 = vmatpush1.msra.mxu0 %v292
        %317 = vmatprep.subr.mxu0 0.0
        %318 = vmatpush1.msra.mxu0 %v293
        %319 = vmatprep.subr.mxu0 0.0
        %320 = vmatpush1.msra.mxu0 %v294
        %321 = vmatprep.subr.mxu0 0.0
        %322 = vmatpush1.msra.mxu0 %v295
        %323 = vmatprep.subr.mxu0 0.0
        %324 = vmatpush1.msra.mxu0 %v296
        %325 = vmatprep.subr.mxu0 0.0
        %326 = vmatpush1.msra.mxu0 %v297
        %327 = vmatprep.subr.mxu0 0.0
        %328 = vmatpush1.msra.mxu0 %v298
        %329 = vmatprep.subr.mxu0 0.0
        %330 = vmatpush1.msra.mxu0 %v299
        %331 = vmatprep.subr.mxu0 0.0
        %332 = vmatpush1.msra.mxu0 %v300
        %333 = vmatprep.subr.mxu0 0.0
        %334 = vmatpush1.msra.mxu0 %v301
        %335 = vmatprep.subr.mxu0 0.0
        %336 = vmatpush1.msra.mxu0 %v302
        %337 = vmatprep.subr.mxu0 0.0
        %338 = vmatpush1.msra.mxu0 %v303
        %339 = vmatprep.subr.mxu0 0.0
        %340 = vmatpush1.msra.mxu0 %v304
        %341 = vmatprep.subr.mxu0 0.0
        %342 = vmatpush1.msra.mxu0 %v305
        %343 = vmatprep.subr.mxu0 0.0
        %344 = vmatpush1.msra.mxu0 %v306
        %345 = vmatprep.subr.mxu0 0.0
        %346 = vmatpush1.msra.mxu0 0.0
        %347 = vmatprep.subr.mxu0 0.0
        %348 = vmatpush1.msra.mxu0 0.0
        %349 = vmatprep.subr.mxu0 0.0
        %350 = vmatpush1.msra.mxu0 0.0
        %351 = vmatprep.subr.mxu0 0.0
        %352 = vmatpush1.msra.mxu0 0.0
        %353 = vmatprep.subr.mxu0 0.0
        %354 = vmatpush1.msra.mxu0 0.0
        %355 = vmatprep.subr.mxu0 0.0
        %356 = vmatpush1.msra.mxu0 0.0
        %357 = vmatprep.subr.mxu0 0.0
        %358 = vmatpush1.msra.mxu0 0.0
        %359 = vmatprep.subr.mxu0 0.0
        %360 = vmatpush1.msra.mxu0 0.0
        %361 = vmatprep.subr.mxu0 0.0
        %362 = vmatpush1.msra.mxu0 0.0
        %363 = vmatprep.subr.mxu0 0.0
        %364 = vmatpush1.msra.mxu0 0.0
        %365 = vmatprep.subr.mxu0 0.0
        %366 = vmatpush1.msra.mxu0 0.0
        %367 = vmatprep.subr.mxu0 0.0
        %368 = vmatpush1.msra.mxu0 0.0
        %369 = vmatprep.subr.mxu0 0.0
        %370 = vmatpush1.msra.mxu0 0.0
        %371 = vmatprep.subr.mxu0 0.0
        %372 = vmatpush1.msra.mxu0 0.0
        %373 = vmatprep.subr.mxu0 0.0
        %374 = vmatpush1.msra.mxu0 0.0
        %375 = vmatprep.subr.mxu0 0.0
        %376 = vmatpush1.msra.mxu0 0.0
        %377 = vmatprep.mubr.f32.mxu0 0.0
        %378 = vmatmul.mubr.f32.gmra.mrb[0].mxu0 %v275
        %v379 = vpop.f32.mrb[0].mxu0
        %v380 = vadd.f32 %v311, %v379
        %v381 = vpop.f32.mrb[0].mxu0
        %382 = vmatprep.mubr.f32.mxu0 0.0
        %383 = vmatmul.mubr.f32.gmra.mrb[0].mxu0 %v276
        %v384 = vpop.f32.mrb[0].mxu0
        %v385 = vadd.f32 %v311, %v384
        %v386 = vpop.f32.mrb[0].mxu0
        %387 = vmatprep.mubr.f32.mxu0 0.0
        %388 = vmatmul.mubr.f32.gmra.mrb[0].mxu0 %v277
        %v389 = vpop.f32.mrb[0].mxu0
        %v390 = vadd.f32 %v311, %v389
        %v391 = vpop.f32.mrb[0].mxu0
        %392 = vmatprep.mubr.f32.mxu0 0.0
        %393 = vmatmul.mubr.f32.gmra.mrb[0].mxu0 %v278
        %v394 = vpop.f32.mrb[0].mxu0
        %v395 = vadd.f32 %v311, %v394
        %v396 = vpop.f32.mrb[0].mxu0
        %397 = vmatprep.mubr.f32.mxu0 0.0
        %398 = vmatmul.mubr.f32.gmra.mrb[0].mxu0 %v279
        %v399 = vpop.f32.mrb[0].mxu0
        %v400 = vadd.f32 %v311, %v399
        %v401 = vpop.f32.mrb[0].mxu0
        %402 = vmatprep.mubr.f32.mxu0 0.0
        %403 = vmatmul.mubr.f32.gmra.mrb[0].mxu0 %v280
        %v404 = vpop.f32.mrb[0].mxu0
        %v405 = vadd.f32 %v311, %v404
        %v406 = vpop.f32.mrb[0].mxu0
        %407 = vmatprep.mubr.f32.mxu0 0.0
        %408 = vmatmul.mubr.f32.gmra.mrb[0].mxu0 %v281
        %v409 = vpop.f32.mrb[0].mxu0
        %v410 = vadd.f32 %v311, %v409
        %v411 = vpop.f32.mrb[0].mxu0
        %412 = vmatprep.mubr.f32.mxu0 0.0
        %413 = vmatmul.mubr.f32.gmra.mrb[0].mxu0 %v282
        %v414 = vpop.f32.mrb[0].mxu0
        %v415 = vadd.f32 %v311, %v414
        %v416 = vpop.f32.mrb[0].mxu0
        %417 = vmatprep.mubr.f32.mxu0 0.0
        %418 = vmatmul.mubr.f32.gmra.mrb[0].mxu0 %v283
        %v419 = vpop.f32.mrb[0].mxu0
        %v420 = vadd.f32 %v311, %v419
        %v421 = vpop.f32.mrb[0].mxu0
        %422 = vmatprep.mubr.f32.mxu0 0.0
        %423 = vmatmul.mubr.f32.gmra.mrb[0].mxu0 %v284
        %v424 = vpop.f32.mrb[0].mxu0
        %v425 = vadd.f32 %v311, %v424
        %v426 = vpop.f32.mrb[0].mxu0
        %427 = vmatprep.mubr.f32.mxu0 0.0
        %428 = vmatmul.mubr.f32.gmra.mrb[0].mxu0 %v285
        %v429 = vpop.f32.mrb[0].mxu0
        %v430 = vadd.f32 %v311, %v429
        %v431 = vpop.f32.mrb[0].mxu0
        %432 = vmatprep.mubr.f32.mxu0 0.0
        %433 = vmatmul.mubr.f32.gmra.mrb[0].mxu0 %v286
        %v434 = vpop.f32.mrb[0].mxu0
        %v435 = vadd.f32 %v311, %v434
        %v436 = vpop.f32.mrb[0].mxu0
        %437 = vmatprep.mubr.f32.mxu0 0.0
        %438 = vmatmul.mubr.f32.gmra.mrb[0].mxu0 %v287
        %v439 = vpop.f32.mrb[0].mxu0
        %v440 = vadd.f32 %v311, %v439
        %v441 = vpop.f32.mrb[0].mxu0
        %442 = vmatprep.mubr.f32.mxu0 0.0
        %443 = vmatmul.mubr.f32.gmra.mrb[0].mxu0 %v288
        %v444 = vpop.f32.mrb[0].mxu0
        %v445 = vadd.f32 %v311, %v444
        %v446 = vpop.f32.mrb[0].mxu0
        %447 = vmatprep.mubr.f32.mxu0 0.0
        %448 = vmatmul.mubr.f32.gmra.mrb[0].mxu0 %v289
        %v449 = vpop.f32.mrb[0].mxu0
        %v450 = vadd.f32 %v311, %v449
        %v451 = vpop.f32.mrb[0].mxu0
        %452 = vmatprep.mubr.f32.mxu0 0.0
        %453 = vmatmul.mubr.f32.gmra.mrb[0].mxu0 %v290
        %v454 = vpop.f32.mrb[0].mxu0
        %v455 = vadd.f32 %v311, %v454
        %v456 = vpop.f32.mrb[0].mxu0
        %457 = vdwg.mxu0
        %v458 = vmax.f32 %v380, 0.0
        %v459 = vmax.f32 %v385, 0.0
        %v460 = vmax.f32 %v390, 0.0
        %v461 = vmax.f32 %v395, 0.0
        %v462 = vmax.f32 %v400, 0.0
        %v463 = vmax.f32 %v405, 0.0
        %v464 = vmax.f32 %v410, 0.0
        %v465 = vmax.f32 %v415, 0.0
        %v466 = vmax.f32 %v420, 0.0
        %v467 = vmax.f32 %v425, 0.0
        %v468 = vmax.f32 %v430, 0.0
        %v469 = vmax.f32 %v435, 0.0
        %v470 = vmax.f32 %v440, 0.0
        %v471 = vmax.f32 %v445, 0.0
        %v472 = vmax.f32 %v450, 0.0
        %v473 = vmax.f32 %v455, 0.0
        %474 = vst [vmem:[#allocation2] sm:$0xff] %v458
        %475 = vst [vmem:[#allocation2 + $0x8] sm:$0xff] %v459
        %476 = vst [vmem:[#allocation2 + $0x10] sm:$0xff] %v460
        %477 = vst [vmem:[#allocation2 + $0x18] sm:$0xff] %v461
        %478 = vst [vmem:[#allocation2 + $0x20] sm:$0xff] %v462
        %479 = vst [vmem:[#allocation2 + $0x28] sm:$0xff] %v463
        %480 = vst [vmem:[#allocation2 + $0x30] sm:$0xff] %v464
        %481 = vst [vmem:[#allocation2 + $0x38] sm:$0xff] %v465
        %482 = vst [vmem:[#allocation2 + $0x40] sm:$0xff] %v466
        %483 = vst [vmem:[#allocation2 + $0x48] sm:$0xff] %v467
        %484 = vst [vmem:[#allocation2 + $0x50] sm:$0xff] %v468
        %485 = vst [vmem:[#allocation2 + $0x58] sm:$0xff] %v469
        %486 = vst [vmem:[#allocation2 + $0x60] sm:$0xff] %v470
        %487 = vst [vmem:[#allocation2 + $0x68] sm:$0xff] %v471
        %488 = vst [vmem:[#allocation2 + $0x70] sm:$0xff] %v472
        %489 = vst [vmem:[#allocation2 + $0x78] sm:$0xff] %v473
        %v490 = vld [vmem:[%s237 + $0x80] sm:$0xff]
        %v491 = vld [vmem:[%s237 + $0x88] sm:$0xff]
        %v492 = vld [vmem:[%s237 + $0x90] sm:$0xff]
        %v493 = vld [vmem:[%s237 + $0x98] sm:$0xff]
        %v494 = vld [vmem:[%s237 + $0xa0] sm:$0xff]
        %v495 = vld [vmem:[%s237 + $0xa8] sm:$0xff]
        %v496 = vld [vmem:[%s237 + $0xb0] sm:$0xff]
        %v497 = vld [vmem:[%s237 + $0xb8] sm:$0xff]
        %v498 = vld [vmem:[%s237 + $0xc0] sm:$0xff]
        %v499 = vld [vmem:[%s237 + $0xc8] sm:$0xff]
        %v500 = vld [vmem:[%s237 + $0xd0] sm:$0xff]
        %v501 = vld [vmem:[%s237 + $0xd8] sm:$0xff]
        %v502 = vld [vmem:[#allocation6] sm:$0xff]
        %v503 = vld [vmem:[#allocation6 + $0x8] sm:$0xff]
        %v504 = vld [vmem:[#allocation6 + $0x10] sm:$0xff]
        %v505 = vld [vmem:[#allocation6 + $0x18] sm:$0xff]
        %v506 = vld [vmem:[#allocation6 + $0x20] sm:$0xff]
        %v507 = vld [vmem:[#allocation6 + $0x28] sm:$0xff]
        %v508 = vld [vmem:[#allocation6 + $0x30] sm:$0xff]
        %v509 = vld [vmem:[#allocation6 + $0x38] sm:$0xff]
        %v510 = vld [vmem:[#allocation6 + $0x40] sm:$0xff]
        %v511 = vld [vmem:[#allocation6 + $0x48] sm:$0xff]
        %v512 = vld [vmem:[#allocation6 + $0x50] sm:$0xff]
        %v513 = vld [vmem:[#allocation6 + $0x58] sm:$0xff]
        %v514 = vld [vmem:[#allocation6 + $0x60] sm:$0xff]
        %v515 = vld [vmem:[#allocation6 + $0x68] sm:$0xff]
        %v516 = vld [vmem:[#allocation6 + $0x70] sm:$0xff]
        %v517 = vld [vmem:[#allocation6 + $0x78] sm:$0xff]
        %518 = vmatprep.subr.mxu0 0.0
        %519 = vmatpush1.msra.mxu0 %v502
        %520 = vmatprep.subr.mxu0 0.0
        %521 = vmatpush1.msra.mxu0 %v503
        %522 = vmatprep.subr.mxu0 0.0
        %523 = vmatpush1.msra.mxu0 %v504
        %524 = vmatprep.subr.mxu0 0.0
        %525 = vmatpush1.msra.mxu0 %v505
        %526 = vmatprep.subr.mxu0 0.0
        %527 = vmatpush1.msra.mxu0 %v506
        %528 = vmatprep.subr.mxu0 0.0
        %529 = vmatpush1.msra.mxu0 %v507
        %530 = vmatprep.subr.mxu0 0.0
        %531 = vmatpush1.msra.mxu0 %v508
        %532 = vmatprep.subr.mxu0 0.0
        %533 = vmatpush1.msra.mxu0 %v509
        %534 = vmatprep.subr.mxu0 0.0
        %535 = vmatpush1.msra.mxu0 %v510
        %536 = vmatprep.subr.mxu0 0.0
        %537 = vmatpush1.msra.mxu0 %v511
        %538 = vmatprep.subr.mxu0 0.0
        %539 = vmatpush1.msra.mxu0 %v512
        %540 = vmatprep.subr.mxu0 0.0
        %541 = vmatpush1.msra.mxu0 %v513
        %542 = vmatprep.subr.mxu0 0.0
        %543 = vmatpush1.msra.mxu0 %v514
        %544 = vmatprep.subr.mxu0 0.0
        %545 = vmatpush1.msra.mxu0 %v515
        %546 = vmatprep.subr.mxu0 0.0
        %547 = vmatpush1.msra.mxu0 %v516
        %548 = vmatprep.subr.mxu0 0.0
        %549 = vmatpush1.msra.mxu0 %v517
        %550 = vmatprep.subr.mxu0 0.0
        %551 = vmatpush1.msra.mxu0 0.0
        %552 = vmatprep.subr.mxu0 0.0
        %553 = vmatpush1.msra.mxu0 0.0
        %554 = vmatprep.subr.mxu0 0.0
        %555 = vmatpush1.msra.mxu0 0.0
        %556 = vmatprep.subr.mxu0 0.0
        %557 = vmatpush1.msra.mxu0 0.0
        %558 = vmatprep.subr.mxu0 0.0
        %559 = vmatpush1.msra.mxu0 0.0
        %560 = vmatprep.subr.mxu0 0.0
        %561 = vmatpush1.msra.mxu0 0.0
        %562 = vmatprep.subr.mxu0 0.0
        %563 = vmatpush1.msra.mxu0 0.0
        %564 = vmatprep.subr.mxu0 0.0
        %565 = vmatpush1.msra.mxu0 0.0
        %566 = vmatprep.subr.mxu0 0.0
        %567 = vmatpush1.msra.mxu0 0.0
        %568 = vmatprep.subr.mxu0 0.0
        %569 = vmatpush1.msra.mxu0 0.0
        %570 = vmatprep.subr.mxu0 0.0
        %571 = vmatpush1.msra.mxu0 0.0
        %572 = vmatprep.subr.mxu0 0.0
        %573 = vmatpush1.msra.mxu0 0.0
        %574 = vmatprep.subr.mxu0 0.0
        %575 = vmatpush1.msra.mxu0 0.0
        %576 = vmatprep.subr.mxu0 0.0
        %577 = vmatpush1.msra.mxu0 0.0
        %578 = vmatprep.subr.mxu0 0.0
        %579 = vmatpush1.msra.mxu0 0.0
        %580 = vmatprep.subr.mxu0 0.0
        %581 = vmatpush1.msra.mxu0 0.0
        %582 = vmatprep.mubr.f32.mxu0 0.0
        %583 = vmatmul.mubr.f32.gmra.mrb[0].mxu0 %v490
        %v584 = vpop.f32.mrb[0].mxu0
        %v585 = vadd.f32 %v311, %v584
        %v586 = vpop.f32.mrb[0].mxu0
        %587 = vmatprep.mubr.f32.mxu0 0.0
        %588 = vmatmul.mubr.f32.gmra.mrb[0].mxu0 %v491
        %v589 = vpop.f32.mrb[0].mxu0
        %v590 = vadd.f32 %v311, %v589
        %v591 = vpop.f32.mrb[0].mxu0
        %592 = vmatprep.mubr.f32.mxu0 0.0
        %593 = vmatmul.mubr.f32.gmra.mrb[0].mxu0 %v492
        %v594 = vpop.f32.mrb[0].mxu0
        %v595 = vadd.f32 %v311, %v594
        %v596 = vpop.f32.mrb[0].mxu0
        %597 = vmatprep.mubr.f32.mxu0 0.0
        %598 = vmatmul.mubr.f32.gmra.mrb[0].mxu0 %v493
        %v599 = vpop.f32.mrb[0].mxu0
        %v600 = vadd.f32 %v311, %v599
        %v601 = vpop.f32.mrb[0].mxu0
        %602 = vmatprep.mubr.f32.mxu0 0.0
        %603 = vmatmul.mubr.f32.gmra.mrb[0].mxu0 %v494
        %v604 = vpop.f32.mrb[0].mxu0
        %v605 = vadd.f32 %v311, %v604
        %v606 = vpop.f32.mrb[0].mxu0
        %607 = vmatprep.mubr.f32.mxu0 0.0
        %608 = vmatmul.mubr.f32.gmra.mrb[0].mxu0 %v495
        %v609 = vpop.f32.mrb[0].mxu0
        %v610 = vadd.f32 %v311, %v609
        %v611 = vpop.f32.mrb[0].mxu0
        %612 = vmatprep.mubr.f32.mxu0 0.0
        %613 = vmatmul.mubr.f32.gmra.mrb[0].mxu0 %v496
        %v614 = vpop.f32.mrb[0].mxu0
        %v615 = vadd.f32 %v311, %v614
        %v616 = vpop.f32.mrb[0].mxu0
        %617 = vmatprep.mubr.f32.mxu0 0.0
        %618 = vmatmul.mubr.f32.gmra.mrb[0].mxu0 %v497
        %v619 = vpop.f32.mrb[0].mxu0
        %v620 = vadd.f32 %v311, %v619
        %v621 = vpop.f32.mrb[0].mxu0
        %622 = vmatprep.mubr.f32.mxu0 0.0
        %623 = vmatmul.mubr.f32.gmra.mrb[0].mxu0 %v498
        %v624 = vpop.f32.mrb[0].mxu0
        %v625 = vadd.f32 %v311, %v624
        %v626 = vpop.f32.mrb[0].mxu0
        %627 = vmatprep.mubr.f32.mxu0 0.0
        %628 = vmatmul.mubr.f32.gmra.mrb[0].mxu0 %v499
        %v629 = vpop.f32.mrb[0].mxu0
        %v630 = vadd.f32 %v311, %v629
        %v631 = vpop.f32.mrb[0].mxu0
        %632 = vmatprep.mubr.f32.mxu0 0.0
        %633 = vmatmul.mubr.f32.gmra.mrb[0].mxu0 %v500
        %v634 = vpop.f32.mrb[0].mxu0
        %v635 = vadd.f32 %v311, %v634
        %v636 = vpop.f32.mrb[0].mxu0
        %637 = vmatprep.mubr.f32.mxu0 0.0
        %638 = vmatmul.mubr.f32.gmra.mrb[0].mxu0 %v501
        %v639 = vpop.f32.mrb[0].mxu0
        %v640 = vadd.f32 %v311, %v639
        %v641 = vpop.f32.mrb[0].mxu0
        %642 = vdwg.mxu0
        %v643 = vmax.f32 %v585, 0.0
        %v644 = vmax.f32 %v590, 0.0
        %v645 = vmax.f32 %v595, 0.0
        %v646 = vmax.f32 %v600, 0.0
        %v647 = vmax.f32 %v605, 0.0
        %v648 = vmax.f32 %v610, 0.0
        %v649 = vmax.f32 %v615, 0.0
        %v650 = vmax.f32 %v620, 0.0
        %v651 = vmax.f32 %v625, 0.0
        %v652 = vmax.f32 %v630, 0.0
        %v653 = vmax.f32 %v635, 0.0
        %v654 = vmax.f32 %v640, 0.0
        %655 = vst [vmem:[#allocation2 + $0x80] sm:$0xff] %v643
        %656 = vst [vmem:[#allocation2 + $0x88] sm:$0xff] %v644
        %657 = vst [vmem:[#allocation2 + $0x90] sm:$0xff] %v645
        %658 = vst [vmem:[#allocation2 + $0x98] sm:$0xff] %v646
        %659 = vst [vmem:[#allocation2 + $0xa0] sm:$0xff] %v647
        %660 = vst [vmem:[#allocation2 + $0xa8] sm:$0xff] %v648
        %661 = vst [vmem:[#allocation2 + $0xb0] sm:$0xff] %v649
        %662 = vst [vmem:[#allocation2 + $0xb8] sm:$0xff] %v650
        %663 = vst [vmem:[#allocation2 + $0xc0] sm:$0xff] %v651
        %664 = vst [vmem:[#allocation2 + $0xc8] sm:$0xff] %v652
        %665 = vst [vmem:[#allocation2 + $0xd0] sm:$0xff] %v653
        %666 = vst [vmem:[#allocation2 + $0xd8] sm:$0xff] %v654
        %v667 = vld [vmem:[#allocation2] sm:$0xff]
        %v668 = vld [vmem:[#allocation2 + $0x8] sm:$0xff]
        %v669 = vld [vmem:[#allocation2 + $0x10] sm:$0xff]
        %v670 = vld [vmem:[#allocation2 + $0x18] sm:$0xff]
        %v671 = vld [vmem:[#allocation2 + $0x20] sm:$0xff]
        %v672 = vld [vmem:[#allocation2 + $0x28] sm:$0xff]
        %v673 = vld [vmem:[#allocation2 + $0x30] sm:$0xff]
        %v674 = vld [vmem:[#allocation2 + $0x38] sm:$0xff]
        %v675 = vld [vmem:[#allocation2 + $0x40] sm:$0xff]
        %v676 = vld [vmem:[#allocation2 + $0x48] sm:$0xff]
        %v677 = vld [vmem:[#allocation2 + $0x50] sm:$0xff]
        %v678 = vld [vmem:[#allocation2 + $0x58] sm:$0xff]
        %v679 = vld [vmem:[#allocation2 + $0x60] sm:$0xff]
        %v680 = vld [vmem:[#allocation2 + $0x68] sm:$0xff]
        %v681 = vld [vmem:[#allocation2 + $0x70] sm:$0xff]
        %v682 = vld [vmem:[#allocation2 + $0x78] sm:$0xff]
        %v683 = vld [vmem:[#allocation8] sm:$0xff]
        %v684 = vld [vmem:[#allocation8 + $0x8] sm:$0xff]
        %v685 = vld [vmem:[#allocation8 + $0x10] sm:$0xff]
        %v686 = vld [vmem:[#allocation8 + $0x18] sm:$0xff]
        %v687 = vld [vmem:[#allocation8 + $0x20] sm:$0xff]
        %v688 = vld [vmem:[#allocation8 + $0x28] sm:$0xff]
        %v689 = vld [vmem:[#allocation8 + $0x30] sm:$0xff]
        %v690 = vld [vmem:[#allocation8 + $0x38] sm:$0xff]
        %v691 = vld [vmem:[#allocation8 + $0x40] sm:$0xff]
        %v692 = vld [vmem:[#allocation8 + $0x48] sm:$0xff]
        %v693 = vld [vmem:[#allocation8 + $0x50] sm:$0xff]
        %v694 = vld [vmem:[#allocation8 + $0x58] sm:$0xff]
        %v695 = vld [vmem:[#allocation8 + $0x60] sm:$0xff]
        %v696 = vld [vmem:[#allocation8 + $0x68] sm:$0xff]
        %v697 = vld [vmem:[#allocation8 + $0x70] sm:$0xff]
        %v698 = vld [vmem:[#allocation8 + $0x78] sm:$0xff]
        %v699 = vld [vmem:[#allocation2 + $0x1] sm:$0xff]
        %v700 = vld [vmem:[#allocation2 + $0x9] sm:$0xff]
        %v701 = vld [vmem:[#allocation2 + $0x11] sm:$0xff]
        %v702 = vld [vmem:[#allocation2 + $0x19] sm:$0xff]
        %v703 = vld [vmem:[#allocation2 + $0x21] sm:$0xff]
        %v704 = vld [vmem:[#allocation2 + $0x29] sm:$0xff]
        %v705 = vld [vmem:[#allocation2 + $0x31] sm:$0xff]
        %v706 = vld [vmem:[#allocation2 + $0x39] sm:$0xff]
        %v707 = vld [vmem:[#allocation2 + $0x41] sm:$0xff]
        %v708 = vld [vmem:[#allocation2 + $0x49] sm:$0xff]
        %v709 = vld [vmem:[#allocation2 + $0x51] sm:$0xff]
        %v710 = vld [vmem:[#allocation2 + $0x59] sm:$0xff]
        %v711 = vld [vmem:[#allocation2 + $0x61] sm:$0xff]
        %v712 = vld [vmem:[#allocation2 + $0x69] sm:$0xff]
        %v713 = vld [vmem:[#allocation2 + $0x71] sm:$0xff]
        %v714 = vld [vmem:[#allocation2 + $0x79] sm:$0xff]
        %s715 = scalar_lea.vmem [#allocation8], 128
        %v716 = vld [vmem:[%s715] sm:$0xff]
        %v717 = vld [vmem:[%s715 + $0x8] sm:$0xff]
        %v718 = vld [vmem:[%s715 + $0x10] sm:$0xff]
        %v719 = vld [vmem:[%s715 + $0x18] sm:$0xff]
        %v720 = vld [vmem:[%s715 + $0x20] sm:$0xff]
        %v721 = vld [vmem:[%s715 + $0x28] sm:$0xff]
        %v722 = vld [vmem:[%s715 + $0x30] sm:$0xff]
        %v723 = vld [vmem:[%s715 + $0x38] sm:$0xff]
        %v724 = vld [vmem:[%s715 + $0x40] sm:$0xff]
        %v725 = vld [vmem:[%s715 + $0x48] sm:$0xff]
        %v726 = vld [vmem:[%s715 + $0x50] sm:$0xff]
        %v727 = vld [vmem:[%s715 + $0x58] sm:$0xff]
        %v728 = vld [vmem:[%s715 + $0x60] sm:$0xff]
        %v729 = vld [vmem:[%s715 + $0x68] sm:$0xff]
        %v730 = vld [vmem:[%s715 + $0x70] sm:$0xff]
        %v731 = vld [vmem:[%s715 + $0x78] sm:$0xff]
        %732 = vmatprep.subr.mxu0 0.0
        %733 = vmatpush1.msra.mxu0 %v716
        %734 = vmatprep.subr.mxu0 0.0
        %735 = vmatpush1.msra.mxu0 %v717
        %736 = vmatprep.subr.mxu0 0.0
        %737 = vmatpush1.msra.mxu0 %v718
        %738 = vmatprep.subr.mxu0 0.0
        %739 = vmatpush1.msra.mxu0 %v719
        %740 = vmatprep.subr.mxu0 0.0
        %741 = vmatpush1.msra.mxu0 %v720
        %742 = vmatprep.subr.mxu0 0.0
        %743 = vmatpush1.msra.mxu0 %v721
        %744 = vmatprep.subr.mxu0 0.0
        %745 = vmatpush1.msra.mxu0 %v722
        %746 = vmatprep.subr.mxu0 0.0
        %747 = vmatpush1.msra.mxu0 %v723
        %748 = vmatprep.subr.mxu0 0.0
        %749 = vmatpush1.msra.mxu0 %v724
        %750 = vmatprep.subr.mxu0 0.0
        %751 = vmatpush1.msra.mxu0 %v725
        %752 = vmatprep.subr.mxu0 0.0
        %753 = vmatpush1.msra.mxu0 %v726
        %754 = vmatprep.subr.mxu0 0.0
        %755 = vmatpush1.msra.mxu0 %v727
        %756 = vmatprep.subr.mxu0 0.0
        %757 = vmatpush1.msra.mxu0 %v728
        %758 = vmatprep.subr.mxu0 0.0
        %759 = vmatpush1.msra.mxu0 %v729
        %760 = vmatprep.subr.mxu0 0.0
        %761 = vmatpush1.msra.mxu0 %v730
        %762 = vmatprep.subr.mxu0 0.0
        %763 = vmatpush1.msra.mxu0 %v731
        %764 = vmatprep.subr.mxu0 0.0
        %765 = vmatpush1.msra.mxu0 0.0
        %766 = vmatprep.subr.mxu0 0.0
        %767 = vmatpush1.msra.mxu0 0.0
        %768 = vmatprep.subr.mxu0 0.0
        %769 = vmatpush1.msra.mxu0 0.0
        %770 = vmatprep.subr.mxu0 0.0
        %771 = vmatpush1.msra.mxu0 0.0
        %772 = vmatprep.subr.mxu0 0.0
        %773 = vmatpush1.msra.mxu0 0.0
        %774 = vmatprep.subr.mxu0 0.0
        %775 = vmatpush1.msra.mxu0 0.0
        %776 = vmatprep.subr.mxu0 0.0
        %777 = vmatpush1.msra.mxu0 0.0
        %778 = vmatprep.subr.mxu0 0.0
        %779 = vmatpush1.msra.mxu0 0.0
        %780 = vmatprep.subr.mxu0 0.0
        %781 = vmatpush1.msra.mxu0 0.0
        %782 = vmatprep.subr.mxu0 0.0
        %783 = vmatpush1.msra.mxu0 0.0
        %784 = vmatprep.subr.mxu0 0.0
        %785 = vmatpush1.msra.mxu0 0.0
        %786 = vmatprep.subr.mxu0 0.0
        %787 = vmatpush1.msra.mxu0 0.0
        %788 = vmatprep.subr.mxu0 0.0
        %789 = vmatpush1.msra.mxu0 0.0
        %790 = vmatprep.subr.mxu0 0.0
        %791 = vmatpush1.msra.mxu0 0.0
        %792 = vmatprep.subr.mxu0 0.0
        %793 = vmatpush1.msra.mxu0 0.0
        %794 = vmatprep.subr.mxu0 0.0
        %795 = vmatpush1.msra.mxu0 0.0
        %796 = vmatprep.mubr.f32.mxu0 0.0
        %797 = vmatmul.mubr.f32.gmra.mrb[0].mxu0 %v699
        %v798 = vpop.f32.mrb[0].mxu0
        %v799 = vadd.f32 0.0, %v798
        %v800 = vpop.f32.mrb[0].mxu0
        %801 = vmatprep.mubr.f32.mxu0 0.0
        %802 = vmatmul.mubr.f32.gmra.mrb[0].mxu0 %v700
        %v803 = vpop.f32.mrb[0].mxu0
        %v804 = vadd.f32 0.0, %v803
        %v805 = vpop.f32.mrb[0].mxu0
        %806 = vmatprep.mubr.f32.mxu0 0.0
        %807 = vmatmul.mubr.f32.gmra.mrb[0].mxu0 %v701
        %v808 = vpop.f32.mrb[0].mxu0
        %v809 = vadd.f32 0.0, %v808
        %v810 = vpop.f32.mrb[0].mxu0
        %811 = vmatprep.mubr.f32.mxu0 0.0
        %812 = vmatmul.mubr.f32.gmra.mrb[0].mxu0 %v702
        %v813 = vpop.f32.mrb[0].mxu0
        %v814 = vadd.f32 0.0, %v813
        %v815 = vpop.f32.mrb[0].mxu0
        %816 = vmatprep.mubr.f32.mxu0 0.0
        %817 = vmatmul.mubr.f32.gmra.mrb[0].mxu0 %v703
        %v818 = vpop.f32.mrb[0].mxu0
        %v819 = vadd.f32 0.0, %v818
        %v820 = vpop.f32.mrb[0].mxu0
        %821 = vmatprep.mubr.f32.mxu0 0.0
        %822 = vmatmul.mubr.f32.gmra.mrb[0].mxu0 %v704
        %v823 = vpop.f32.mrb[0].mxu0
        %v824 = vadd.f32 0.0, %v823
        %v825 = vpop.f32.mrb[0].mxu0
        %826 = vmatprep.mubr.f32.mxu0 0.0
        %827 = vmatmul.mubr.f32.gmra.mrb[0].mxu0 %v705
        %v828 = vpop.f32.mrb[0].mxu0
        %v829 = vadd.f32 0.0, %v828
        %v830 = vpop.f32.mrb[0].mxu0
        %831 = vmatprep.mubr.f32.mxu0 0.0
        %832 = vmatmul.mubr.f32.gmra.mrb[0].mxu0 %v706
        %v833 = vpop.f32.mrb[0].mxu0
        %v834 = vadd.f32 0.0, %v833
        %v835 = vpop.f32.mrb[0].mxu0
        %836 = vmatprep.mubr.f32.mxu0 0.0
        %837 = vmatmul.mubr.f32.gmra.mrb[0].mxu0 %v707
        %v838 = vpop.f32.mrb[0].mxu0
        %v839 = vadd.f32 0.0, %v838
        %v840 = vpop.f32.mrb[0].mxu0
        %841 = vmatprep.mubr.f32.mxu0 0.0
        %842 = vmatmul.mubr.f32.gmra.mrb[0].mxu0 %v708
        %v843 = vpop.f32.mrb[0].mxu0
        %v844 = vadd.f32 0.0, %v843
        %v845 = vpop.f32.mrb[0].mxu0
        %846 = vmatprep.mubr.f32.mxu0 0.0
        %847 = vmatmul.mubr.f32.gmra.mrb[0].mxu0 %v709
        %v848 = vpop.f32.mrb[0].mxu0
        %v849 = vadd.f32 0.0, %v848
        %v850 = vpop.f32.mrb[0].mxu0
        %851 = vmatprep.mubr.f32.mxu0 0.0
        %852 = vmatmul.mubr.f32.gmra.mrb[0].mxu0 %v710
        %v853 = vpop.f32.mrb[0].mxu0
        %v854 = vadd.f32 0.0, %v853
        %v855 = vpop.f32.mrb[0].mxu0
        %856 = vmatprep.mubr.f32.mxu0 0.0
        %857 = vmatmul.mubr.f32.gmra.mrb[0].mxu0 %v711
        %v858 = vpop.f32.mrb[0].mxu0
        %v859 = vadd.f32 0.0, %v858
        %v860 = vpop.f32.mrb[0].mxu0
        %861 = vmatprep.mubr.f32.mxu0 0.0
        %862 = vmatmul.mubr.f32.gmra.mrb[0].mxu0 %v712
        %v863 = vpop.f32.mrb[0].mxu0
        %v864 = vadd.f32 0.0, %v863
        %v865 = vpop.f32.mrb[0].mxu0
        %866 = vmatprep.mubr.f32.mxu0 0.0
        %867 = vmatmul.mubr.f32.gmra.mrb[0].mxu0 %v713
        %v868 = vpop.f32.mrb[0].mxu0
        %v869 = vadd.f32 0.0, %v868
        %v870 = vpop.f32.mrb[0].mxu0
        %871 = vmatprep.mubr.f32.mxu0 0.0
        %872 = vmatmul.mubr.f32.gmra.mrb[0].mxu0 %v714
        %v873 = vpop.f32.mrb[0].mxu0
        %v874 = vadd.f32 0.0, %v873
        %v875 = vpop.f32.mrb[0].mxu0
        %876 = vdwg.mxu0
        %877 = vmatprep.subr.mxu0 0.0
        %878 = vmatpush1.msra.mxu0 %v683
        %879 = vmatprep.subr.mxu0 0.0
        %880 = vmatpush1.msra.mxu0 %v684
        %881 = vmatprep.subr.mxu0 0.0
        %882 = vmatpush1.msra.mxu0 %v685
        %883 = vmatprep.subr.mxu0 0.0
        %884 = vmatpush1.msra.mxu0 %v686
        %885 = vmatprep.subr.mxu0 0.0
        %886 = vmatpush1.msra.mxu0 %v687
        %887 = vmatprep.subr.mxu0 0.0
        %888 = vmatpush1.msra.mxu0 %v688
        %889 = vmatprep.subr.mxu0 0.0
        %890 = vmatpush1.msra.mxu0 %v689
        %891 = vmatprep.subr.mxu0 0.0
        %892 = vmatpush1.msra.mxu0 %v690
        %893 = vmatprep.subr.mxu0 0.0
        %894 = vmatpush1.msra.mxu0 %v691
        %895 = vmatprep.subr.mxu0 0.0
        %896 = vmatpush1.msra.mxu0 %v692
        %897 = vmatprep.subr.mxu0 0.0
        %898 = vmatpush1.msra.mxu0 %v693
        %899 = vmatprep.subr.mxu0 0.0
        %900 = vmatpush1.msra.mxu0 %v694
        %901 = vmatprep.subr.mxu0 0.0
        %902 = vmatpush1.msra.mxu0 %v695
        %903 = vmatprep.subr.mxu0 0.0
        %904 = vmatpush1.msra.mxu0 %v696
        %905 = vmatprep.subr.mxu0 0.0
        %906 = vmatpush1.msra.mxu0 %v697
        %907 = vmatprep.subr.mxu0 0.0
        %908 = vmatpush1.msra.mxu0 %v698
        %909 = vmatprep.subr.mxu0 0.0
        %910 = vmatpush1.msra.mxu0 0.0
        %911 = vmatprep.subr.mxu0 0.0
        %912 = vmatpush1.msra.mxu0 0.0
        %913 = vmatprep.subr.mxu0 0.0
        %914 = vmatpush1.msra.mxu0 0.0
        %915 = vmatprep.subr.mxu0 0.0
        %916 = vmatpush1.msra.mxu0 0.0
        %917 = vmatprep.subr.mxu0 0.0
        %918 = vmatpush1.msra.mxu0 0.0
        %919 = vmatprep.subr.mxu0 0.0
        %920 = vmatpush1.msra.mxu0 0.0
        %921 = vmatprep.subr.mxu0 0.0
        %922 = vmatpush1.msra.mxu0 0.0
        %923 = vmatprep.subr.mxu0 0.0
        %924 = vmatpush1.msra.mxu0 0.0
        %925 = vmatprep.subr.mxu0 0.0
        %926 = vmatpush1.msra.mxu0 0.0
        %927 = vmatprep.subr.mxu0 0.0
        %928 = vmatpush1.msra.mxu0 0.0
        %929 = vmatprep.subr.mxu0 0.0
        %930 = vmatpush1.msra.mxu0 0.0
        %931 = vmatprep.subr.mxu0 0.0
        %932 = vmatpush1.msra.mxu0 0.0
        %933 = vmatprep.subr.mxu0 0.0
        %934 = vmatpush1.msra.mxu0 0.0
        %935 = vmatprep.subr.mxu0 0.0
        %936 = vmatpush1.msra.mxu0 0.0
        %937 = vmatprep.subr.mxu0 0.0
        %938 = vmatpush1.msra.mxu0 0.0
        %939 = vmatprep.subr.mxu0 0.0
        %940 = vmatpush1.msra.mxu0 0.0
        %941 = vmatprep.mubr.f32.mxu0 0.0
        %942 = vmatmul.mubr.f32.gmra.mrb[0].mxu0 %v667
        %v943 = vpop.f32.mrb[0].mxu0
        %v944 = vadd.f32 %v799, %v943
        %v945 = vpop.f32.mrb[0].mxu0
        %946 = vmatprep.mubr.f32.mxu0 0.0
        %947 = vmatmul.mubr.f32.gmra.mrb[0].mxu0 %v668
        %v948 = vpop.f32.mrb[0].mxu0
        %v949 = vadd.f32 %v804, %v948
        %v950 = vpop.f32.mrb[0].mxu0
        %951 = vmatprep.mubr.f32.mxu0 0.0
        %952 = vmatmul.mubr.f32.gmra.mrb[0].mxu0 %v669
        %v953 = vpop.f32.mrb[0].mxu0
        %v954 = vadd.f32 %v809, %v953
        %v955 = vpop.f32.mrb[0].mxu0
        %956 = vmatprep.mubr.f32.mxu0 0.0
        %957 = vmatmul.mubr.f32.gmra.mrb[0].mxu0 %v670
        %v958 = vpop.f32.mrb[0].mxu0
        %v959 = vadd.f32 %v814, %v958
        %v960 = vpop.f32.mrb[0].mxu0
        %961 = vmatprep.mubr.f32.mxu0 0.0
        %962 = vmatmul.mubr.f32.gmra.mrb[0].mxu0 %v671
        %v963 = vpop.f32.mrb[0].mxu0
        %v964 = vadd.f32 %v819, %v963
        %v965 = vpop.f32.mrb[0].mxu0
        %966 = vmatprep.mubr.f32.mxu0 0.0
        %967 = vmatmul.mubr.f32.gmra.mrb[0].mxu0 %v672
        %v968 = vpop.f32.mrb[0].mxu0
        %v969 = vadd.f32 %v824, %v968
        %v970 = vpop.f32.mrb[0].mxu0
        %971 = vmatprep.mubr.f32.mxu0 0.0
        %972 = vmatmul.mubr.f32.gmra.mrb[0].mxu0 %v673
        %v973 = vpop.f32.mrb[0].mxu0
        %v974 = vadd.f32 %v829, %v973
        %v975 = vpop.f32.mrb[0].mxu0
        %976 = vmatprep.mubr.f32.mxu0 0.0
        %977 = vmatmul.mubr.f32.gmra.mrb[0].mxu0 %v674
        %v978 = vpop.f32.mrb[0].mxu0
        %v979 = vadd.f32 %v834, %v978
        %v980 = vpop.f32.mrb[0].mxu0
        %981 = vmatprep.mubr.f32.mxu0 0.0
        %982 = vmatmul.mubr.f32.gmra.mrb[0].mxu0 %v675
        %v983 = vpop.f32.mrb[0].mxu0
        %v984 = vadd.f32 %v839, %v983
        %v985 = vpop.f32.mrb[0].mxu0
        %986 = vmatprep.mubr.f32.mxu0 0.0
        %987 = vmatmul.mubr.f32.gmra.mrb[0].mxu0 %v676
        %v988 = vpop.f32.mrb[0].mxu0
        %v989 = vadd.f32 %v844, %v988
        %v990 = vpop.f32.mrb[0].mxu0
        %991 = vmatprep.mubr.f32.mxu0 0.0
        %992 = vmatmul.mubr.f32.gmra.mrb[0].mxu0 %v677
        %v993 = vpop.f32.mrb[0].mxu0
        %v994 = vadd.f32 %v849, %v993
        %v995 = vpop.f32.mrb[0].mxu0
        %996 = vmatprep.mubr.f32.mxu0 0.0
        %997 = vmatmul.mubr.f32.gmra.mrb[0].mxu0 %v678
        %v998 = vpop.f32.mrb[0].mxu0
        %v999 = vadd.f32 %v854, %v998
        %v1000 = vpop.f32.mrb[0].mxu0
        %1001 = vmatprep.mubr.f32.mxu0 0.0
        %1002 = vmatmul.mubr.f32.gmra.mrb[0].mxu0 %v679
        %v1003 = vpop.f32.mrb[0].mxu0
        %v1004 = vadd.f32 %v859, %v1003
        %v1005 = vpop.f32.mrb[0].mxu0
        %1006 = vmatprep.mubr.f32.mxu0 0.0
        %1007 = vmatmul.mubr.f32.gmra.mrb[0].mxu0 %v680
        %v1008 = vpop.f32.mrb[0].mxu0
        %v1009 = vadd.f32 %v864, %v1008
        %v1010 = vpop.f32.mrb[0].mxu0
        %1011 = vmatprep.mubr.f32.mxu0 0.0
        %1012 = vmatmul.mubr.f32.gmra.mrb[0].mxu0 %v681
        %v1013 = vpop.f32.mrb[0].mxu0
        %v1014 = vadd.f32 %v869, %v1013
        %v1015 = vpop.f32.mrb[0].mxu0
        %1016 = vmatprep.mubr.f32.mxu0 0.0
        %1017 = vmatmul.mubr.f32.gmra.mrb[0].mxu0 %v682
        %v1018 = vpop.f32.mrb[0].mxu0
        %v1019 = vadd.f32 %v874, %v1018
        %v1020 = vpop.f32.mrb[0].mxu0
        %1021 = vdwg.mxu0
        %v1022 = vld [vmem:[#allocation2 + $0x2] sm:$0xff]
        %v1023 = vld [vmem:[#allocation2 + $0xa] sm:$0xff]
        %v1024 = vld [vmem:[#allocation2 + $0x12] sm:$0xff]
        %v1025 = vld [vmem:[#allocation2 + $0x1a] sm:$0xff]
        %v1026 = vld [vmem:[#allocation2 + $0x22] sm:$0xff]
        %v1027 = vld [vmem:[#allocation2 + $0x2a] sm:$0xff]
        %v1028 = vld [vmem:[#allocation2 + $0x32] sm:$0xff]
        %v1029 = vld [vmem:[#allocation2 + $0x3a] sm:$0xff]
        %v1030 = vld [vmem:[#allocation2 + $0x42] sm:$0xff]
        %v1031 = vld [vmem:[#allocation2 + $0x4a] sm:$0xff]
        %v1032 = vld [vmem:[#allocation2 + $0x52] sm:$0xff]
        %v1033 = vld [vmem:[#allocation2 + $0x5a] sm:$0xff]
        %v1034 = vld [vmem:[#allocation2 + $0x62] sm:$0xff]
        %v1035 = vld [vmem:[#allocation2 + $0x6a] sm:$0xff]
        %v1036 = vld [vmem:[#allocation2 + $0x72] sm:$0xff]
        %v1037 = vld [vmem:[#allocation2 + $0x7a] sm:$0xff]
        %s1038 = scalar_lea.vmem [#allocation8], 256
        %v1039 = vld [vmem:[%s1038] sm:$0xff]
        %v1040 = vld [vmem:[%s1038 + $0x8] sm:$0xff]
        %v1041 = vld [vmem:[%s1038 + $0x10] sm:$0xff]
        %v1042 = vld [vmem:[%s1038 + $0x18] sm:$0xff]
        %v1043 = vld [vmem:[%s1038 + $0x20] sm:$0xff]
        %v1044 = vld [vmem:[%s1038 + $0x28] sm:$0xff]
        %v1045 = vld [vmem:[%s1038 + $0x30] sm:$0xff]
        %v1046 = vld [vmem:[%s1038 + $0x38] sm:$0xff]
        %v1047 = vld [vmem:[%s1038 + $0x40] sm:$0xff]
        %v1048 = vld [vmem:[%s1038 + $0x48] sm:$0xff]
        %v1049 = vld [vmem:[%s1038 + $0x50] sm:$0xff]
        %v1050 = vld [vmem:[%s1038 + $0x58] sm:$0xff]
        %v1051 = vld [vmem:[%s1038 + $0x60] sm:$0xff]
        %v1052 = vld [vmem:[%s1038 + $0x68] sm:$0xff]
        %v1053 = vld [vmem:[%s1038 + $0x70] sm:$0xff]
        %v1054 = vld [vmem:[%s1038 + $0x78] sm:$0xff]
        %1055 = vmatprep.subr.mxu0 0.0
        %1056 = vmatpush1.msra.mxu0 %v1039
        %1057 = vmatprep.subr.mxu0 0.0
        %1058 = vmatpush1.msra.mxu0 %v1040
        %1059 = vmatprep.subr.mxu0 0.0
        %1060 = vmatpush1.msra.mxu0 %v1041
        %1061 = vmatprep.subr.mxu0 0.0
        %1062 = vmatpush1.msra.mxu0 %v1042
        %1063 = vmatprep.subr.mxu0 0.0
        %1064 = vmatpush1.msra.mxu0 %v1043
        %1065 = vmatprep.subr.mxu0 0.0
        %1066 = vmatpush1.msra.mxu0 %v1044
        %1067 = vmatprep.subr.mxu0 0.0
        %1068 = vmatpush1.msra.mxu0 %v1045
        %1069 = vmatprep.subr.mxu0 0.0
        %1070 = vmatpush1.msra.mxu0 %v1046
        %1071 = vmatprep.subr.mxu0 0.0
        %1072 = vmatpush1.msra.mxu0 %v1047
        %1073 = vmatprep.subr.mxu0 0.0
        %1074 = vmatpush1.msra.mxu0 %v1048
        %1075 = vmatprep.subr.mxu0 0.0
        %1076 = vmatpush1.msra.mxu0 %v1049
        %1077 = vmatprep.subr.mxu0 0.0
        %1078 = vmatpush1.msra.mxu0 %v1050
        %1079 = vmatprep.subr.mxu0 0.0
        %1080 = vmatpush1.msra.mxu0 %v1051
        %1081 = vmatprep.subr.mxu0 0.0
        %1082 = vmatpush1.msra.mxu0 %v1052
        %1083 = vmatprep.subr.mxu0 0.0
        %1084 = vmatpush1.msra.mxu0 %v1053
        %1085 = vmatprep.subr.mxu0 0.0
        %1086 = vmatpush1.msra.mxu0 %v1054
        %1087 = vmatprep.subr.mxu0 0.0
        %1088 = vmatpush1.msra.mxu0 0.0
        %1089 = vmatprep.subr.mxu0 0.0
        %1090 = vmatpush1.msra.mxu0 0.0
        %1091 = vmatprep.subr.mxu0 0.0
        %1092 = vmatpush1.msra.mxu0 0.0
        %1093 = vmatprep.subr.mxu0 0.0
        %1094 = vmatpush1.msra.mxu0 0.0
        %1095 = vmatprep.subr.mxu0 0.0
        %1096 = vmatpush1.msra.mxu0 0.0
        %1097 = vmatprep.subr.mxu0 0.0
        %1098 = vmatpush1.msra.mxu0 0.0
        %1099 = vmatprep.subr.mxu0 0.0
        %1100 = vmatpush1.msra.mxu0 0.0
        %1101 = vmatprep.subr.mxu0 0.0
        %1102 = vmatpush1.msra.mxu0 0.0
        %1103 = vmatprep.subr.mxu0 0.0
        %1104 = vmatpush1.msra.mxu0 0.0
        %1105 = vmatprep.subr.mxu0 0.0
        %1106 = vmatpush1.msra.mxu0 0.0
        %1107 = vmatprep.subr.mxu0 0.0
        %1108 = vmatpush1.msra.mxu0 0.0
        %1109 = vmatprep.subr.mxu0 0.0
        %1110 = vmatpush1.msra.mxu0 0.0
        %1111 = vmatprep.subr.mxu0 0.0
        %1112 = vmatpush1.msra.mxu0 0.0
        %1113 = vmatprep.subr.mxu0 0.0
        %1114 = vmatpush1.msra.mxu0 0.0
        %1115 = vmatprep.subr.mxu0 0.0
        %1116 = vmatpush1.msra.mxu0 0.0
        %1117 = vmatprep.subr.mxu0 0.0
        %1118 = vmatpush1.msra.mxu0 0.0
        %1119 = vmatprep.mubr.f32.mxu0 0.0
        %1120 = vmatmul.mubr.f32.gmra.mrb[0].mxu0 %v1022
        %v1121 = vpop.f32.mrb[0].mxu0
        %v1122 = vadd.f32 0.0, %v1121
        %v1123 = vpop.f32.mrb[0].mxu0
        %1124 = vmatprep.mubr.f32.mxu0 0.0
        %1125 = vmatmul.mubr.f32.gmra.mrb[0].mxu0 %v1023
        %v1126 = vpop.f32.mrb[0].mxu0
        %v1127 = vadd.f32 0.0, %v1126
        %v1128 = vpop.f32.mrb[0].mxu0
        %1129 = vmatprep.mubr.f32.mxu0 0.0
        %1130 = vmatmul.mubr.f32.gmra.mrb[0].mxu0 %v1024
        %v1131 = vpop.f32.mrb[0].mxu0
        %v1132 = vadd.f32 0.0, %v1131
        %v1133 = vpop.f32.mrb[0].mxu0
        %1134 = vmatprep.mubr.f32.mxu0 0.0
        %1135 = vmatmul.mubr.f32.gmra.mrb[0].mxu0 %v1025
        %v1136 = vpop.f32.mrb[0].mxu0
        %v1137 = vadd.f32 0.0, %v1136
        %v1138 = vpop.f32.mrb[0].mxu0
        %1139 = vmatprep.mubr.f32.mxu0 0.0
        %1140 = vmatmul.mubr.f32.gmra.mrb[0].mxu0 %v1026
        %v1141 = vpop.f32.mrb[0].mxu0
        %v1142 = vadd.f32 0.0, %v1141
        %v1143 = vpop.f32.mrb[0].mxu0
        %1144 = vmatprep.mubr.f32.mxu0 0.0
        %1145 = vmatmul.mubr.f32.gmra.mrb[0].mxu0 %v1027
        %v1146 = vpop.f32.mrb[0].mxu0
        %v1147 = vadd.f32 0.0, %v1146
        %v1148 = vpop.f32.mrb[0].mxu0
        %1149 = vmatprep.mubr.f32.mxu0 0.0
        %1150 = vmatmul.mubr.f32.gmra.mrb[0].mxu0 %v1028
        %v1151 = vpop.f32.mrb[0].mxu0
        %v1152 = vadd.f32 0.0, %v1151
        %v1153 = vpop.f32.mrb[0].mxu0
        %1154 = vmatprep.mubr.f32.mxu0 0.0
        %1155 = vmatmul.mubr.f32.gmra.mrb[0].mxu0 %v1029
        %v1156 = vpop.f32.mrb[0].mxu0
        %v1157 = vadd.f32 0.0, %v1156
        %v1158 = vpop.f32.mrb[0].mxu0
        %1159 = vmatprep.mubr.f32.mxu0 0.0
        %1160 = vmatmul.mubr.f32.gmra.mrb[0].mxu0 %v1030
        %v1161 = vpop.f32.mrb[0].mxu0
        %v1162 = vadd.f32 0.0, %v1161
        %v1163 = vpop.f32.mrb[0].mxu0
        %1164 = vmatprep.mubr.f32.mxu0 0.0
        %1165 = vmatmul.mubr.f32.gmra.mrb[0].mxu0 %v1031
        %v1166 = vpop.f32.mrb[0].mxu0
        %v1167 = vadd.f32 0.0, %v1166
        %v1168 = vpop.f32.mrb[0].mxu0
        %1169 = vmatprep.mubr.f32.mxu0 0.0
        %1170 = vmatmul.mubr.f32.gmra.mrb[0].mxu0 %v1032
        %v1171 = vpop.f32.mrb[0].mxu0
        %v1172 = vadd.f32 0.0, %v1171
        %v1173 = vpop.f32.mrb[0].mxu0
        %1174 = vmatprep.mubr.f32.mxu0 0.0
        %1175 = vmatmul.mubr.f32.gmra.mrb[0].mxu0 %v1033
        %v1176 = vpop.f32.mrb[0].mxu0
        %v1177 = vadd.f32 0.0, %v1176
        %v1178 = vpop.f32.mrb[0].mxu0
        %1179 = vmatprep.mubr.f32.mxu0 0.0
        %1180 = vmatmul.mubr.f32.gmra.mrb[0].mxu0 %v1034
        %v1181 = vpop.f32.mrb[0].mxu0
        %v1182 = vadd.f32 0.0, %v1181
        %v1183 = vpop.f32.mrb[0].mxu0
        %1184 = vmatprep.mubr.f32.mxu0 0.0
        %1185 = vmatmul.mubr.f32.gmra.mrb[0].mxu0 %v1035
        %v1186 = vpop.f32.mrb[0].mxu0
        %v1187 = vadd.f32 0.0, %v1186
        %v1188 = vpop.f32.mrb[0].mxu0
        %1189 = vmatprep.mubr.f32.mxu0 0.0
        %1190 = vmatmul.mubr.f32.gmra.mrb[0].mxu0 %v1036
        %v1191 = vpop.f32.mrb[0].mxu0
        %v1192 = vadd.f32 0.0, %v1191
        %v1193 = vpop.f32.mrb[0].mxu0
        %1194 = vmatprep.mubr.f32.mxu0 0.0
        %1195 = vmatmul.mubr.f32.gmra.mrb[0].mxu0 %v1037
        %v1196 = vpop.f32.mrb[0].mxu0
        %v1197 = vadd.f32 0.0, %v1196
        %v1198 = vpop.f32.mrb[0].mxu0
        %1199 = vdwg.mxu0
        %v1200 = vadd.f32 %v944, %v1122
        %v1201 = vadd.f32 %v949, %v1127
        %v1202 = vadd.f32 %v954, %v1132
        %v1203 = vadd.f32 %v959, %v1137
        %v1204 = vadd.f32 %v964, %v1142
        %v1205 = vadd.f32 %v969, %v1147
        %v1206 = vadd.f32 %v974, %v1152
        %v1207 = vadd.f32 %v979, %v1157
        %v1208 = vadd.f32 %v984, %v1162
        %v1209 = vadd.f32 %v989, %v1167
        %v1210 = vadd.f32 %v994, %v1172
        %v1211 = vadd.f32 %v999, %v1177
        %v1212 = vadd.f32 %v1004, %v1182
        %v1213 = vadd.f32 %v1009, %v1187
        %v1214 = vadd.f32 %v1014, %v1192
        %v1215 = vadd.f32 %v1019, %v1197
        %v1216 = vld [vmem:[#allocation2 + $0x10] sm:$0xff]
        %v1217 = vld [vmem:[#allocation2 + $0x18] sm:$0xff]
        %v1218 = vld [vmem:[#allocation2 + $0x20] sm:$0xff]
        %v1219 = vld [vmem:[#allocation2 + $0x28] sm:$0xff]
        %v1220 = vld [vmem:[#allocation2 + $0x30] sm:$0xff]
        %v1221 = vld [vmem:[#allocation2 + $0x38] sm:$0xff]
        %v1222 = vld [vmem:[#allocation2 + $0x40] sm:$0xff]
        %v1223 = vld [vmem:[#allocation2 + $0x48] sm:$0xff]
        %v1224 = vld [vmem:[#allocation2 + $0x50] sm:$0xff]
        %v1225 = vld [vmem:[#allocation2 + $0x58] sm:$0xff]
        %v1226 = vld [vmem:[#allocation2 + $0x60] sm:$0xff]
        %v1227 = vld [vmem:[#allocation2 + $0x68] sm:$0xff]
        %v1228 = vld [vmem:[#allocation2 + $0x70] sm:$0xff]
        %v1229 = vld [vmem:[#allocation2 + $0x78] sm:$0xff]
        %v1230 = vld [vmem:[#allocation2 + $0x80] sm:$0xff]
        %v1231 = vld [vmem:[#allocation2 + $0x88] sm:$0xff]
        %s1232 = scalar_lea.vmem [#allocation8], 384
        %v1233 = vld [vmem:[%s1232] sm:$0xff]
        %v1234 = vld [vmem:[%s1232 + $0x8] sm:$0xff]
        %v1235 = vld [vmem:[%s1232 + $0x10] sm:$0xff]
        %v1236 = vld [vmem:[%s1232 + $0x18] sm:$0xff]
        %v1237 = vld [vmem:[%s1232 + $0x20] sm:$0xff]
        %v1238 = vld [vmem:[%s1232 + $0x28] sm:$0xff]
        %v1239 = vld [vmem:[%s1232 + $0x30] sm:$0xff]
        %v1240 = vld [vmem:[%s1232 + $0x38] sm:$0xff]
        %v1241 = vld [vmem:[%s1232 + $0x40] sm:$0xff]
        %v1242 = vld [vmem:[%s1232 + $0x48] sm:$0xff]
        %v1243 = vld [vmem:[%s1232 + $0x50] sm:$0xff]
        %v1244 = vld [vmem:[%s1232 + $0x58] sm:$0xff]
        %v1245 = vld [vmem:[%s1232 + $0x60] sm:$0xff]
        %v1246 = vld [vmem:[%s1232 + $0x68] sm:$0xff]
        %v1247 = vld [vmem:[%s1232 + $0x70] sm:$0xff]
        %v1248 = vld [vmem:[%s1232 + $0x78] sm:$0xff]
        %1249 = vmatprep.subr.mxu0 0.0
        %1250 = vmatpush1.msra.mxu0 %v1233
        %1251 = vmatprep.subr.mxu0 0.0
        %1252 = vmatpush1.msra.mxu0 %v1234
        %1253 = vmatprep.subr.mxu0 0.0
        %1254 = vmatpush1.msra.mxu0 %v1235
        %1255 = vmatprep.subr.mxu0 0.0
        %1256 = vmatpush1.msra.mxu0 %v1236
        %1257 = vmatprep.subr.mxu0 0.0
        %1258 = vmatpush1.msra.mxu0 %v1237
        %1259 = vmatprep.subr.mxu0 0.0
        %1260 = vmatpush1.msra.mxu0 %v1238
        %1261 = vmatprep.subr.mxu0 0.0
        %1262 = vmatpush1.msra.mxu0 %v1239
        %1263 = vmatprep.subr.mxu0 0.0
        %1264 = vmatpush1.msra.mxu0 %v1240
        %1265 = vmatprep.subr.mxu0 0.0
        %1266 = vmatpush1.msra.mxu0 %v1241
        %1267 = vmatprep.subr.mxu0 0.0
        %1268 = vmatpush1.msra.mxu0 %v1242
        %1269 = vmatprep.subr.mxu0 0.0
        %1270 = vmatpush1.msra.mxu0 %v1243
        %1271 = vmatprep.subr.mxu0 0.0
        %1272 = vmatpush1.msra.mxu0 %v1244
        %1273 = vmatprep.subr.mxu0 0.0
        %1274 = vmatpush1.msra.mxu0 %v1245
        %1275 = vmatprep.subr.mxu0 0.0
        %1276 = vmatpush1.msra.mxu0 %v1246
        %1277 = vmatprep.subr.mxu0 0.0
        %1278 = vmatpush1.msra.mxu0 %v1247
        %1279 = vmatprep.subr.mxu0 0.0
        %1280 = vmatpush1.msra.mxu0 %v1248
        %1281 = vmatprep.subr.mxu0 0.0
        %1282 = vmatpush1.msra.mxu0 0.0
        %1283 = vmatprep.subr.mxu0 0.0
        %1284 = vmatpush1.msra.mxu0 0.0
        %1285 = vmatprep.subr.mxu0 0.0
        %1286 = vmatpush1.msra.mxu0 0.0
        %1287 = vmatprep.subr.mxu0 0.0
        %1288 = vmatpush1.msra.mxu0 0.0
        %1289 = vmatprep.subr.mxu0 0.0
        %1290 = vmatpush1.msra.mxu0 0.0
        %1291 = vmatprep.subr.mxu0 0.0
        %1292 = vmatpush1.msra.mxu0 0.0
        %1293 = vmatprep.subr.mxu0 0.0
        %1294 = vmatpush1.msra.mxu0 0.0
        %1295 = vmatprep.subr.mxu0 0.0
        %1296 = vmatpush1.msra.mxu0 0.0
        %1297 = vmatprep.subr.mxu0 0.0
        %1298 = vmatpush1.msra.mxu0 0.0
        %1299 = vmatprep.subr.mxu0 0.0
        %1300 = vmatpush1.msra.mxu0 0.0
        %1301 = vmatprep.subr.mxu0 0.0
        %1302 = vmatpush1.msra.mxu0 0.0
        %1303 = vmatprep.subr.mxu0 0.0
        %1304 = vmatpush1.msra.mxu0 0.0
        %1305 = vmatprep.subr.mxu0 0.0
        %1306 = vmatpush1.msra.mxu0 0.0
        %1307 = vmatprep.subr.mxu0 0.0
        %1308 = vmatpush1.msra.mxu0 0.0
        %1309 = vmatprep.subr.mxu0 0.0
        %1310 = vmatpush1.msra.mxu0 0.0
        %1311 = vmatprep.subr.mxu0 0.0
        %1312 = vmatpush1.msra.mxu0 0.0
        %1313 = vmatprep.mubr.f32.mxu0 0.0
        %1314 = vmatmul.mubr.f32.gmra.mrb[0].mxu0 %v1216
        %v1315 = vpop.f32.mrb[0].mxu0
        %v1316 = vadd.f32 0.0, %v1315
        %v1317 = vpop.f32.mrb[0].mxu0
        %1318 = vmatprep.mubr.f32.mxu0 0.0
        %1319 = vmatmul.mubr.f32.gmra.mrb[0].mxu0 %v1217
        %v1320 = vpop.f32.mrb[0].mxu0
        %v1321 = vadd.f32 0.0, %v1320
        %v1322 = vpop.f32.mrb[0].mxu0
        %1323 = vmatprep.mubr.f32.mxu0 0.0
        %1324 = vmatmul.mubr.f32.gmra.mrb[0].mxu0 %v1218
        %v1325 = vpop.f32.mrb[0].mxu0
        %v1326 = vadd.f32 0.0, %v1325
        %v1327 = vpop.f32.mrb[0].mxu0
        %1328 = vmatprep.mubr.f32.mxu0 0.0
        %1329 = vmatmul.mubr.f32.gmra.mrb[0].mxu0 %v1219
        %v1330 = vpop.f32.mrb[0].mxu0
        %v1331 = vadd.f32 0.0, %v1330
        %v1332 = vpop.f32.mrb[0].mxu0
        %1333 = vmatprep.mubr.f32.mxu0 0.0
        %1334 = vmatmul.mubr.f32.gmra.mrb[0].mxu0 %v1220
        %v1335 = vpop.f32.mrb[0].mxu0
        %v1336 = vadd.f32 0.0, %v1335
        %v1337 = vpop.f32.mrb[0].mxu0
        %1338 = vmatprep.mubr.f32.mxu0 0.0
        %1339 = vmatmul.mubr.f32.gmra.mrb[0].mxu0 %v1221
        %v1340 = vpop.f32.mrb[0].mxu0
        %v1341 = vadd.f32 0.0, %v1340
        %v1342 = vpop.f32.mrb[0].mxu0
        %1343 = vmatprep.mubr.f32.mxu0 0.0
        %1344 = vmatmul.mubr.f32.gmra.mrb[0].mxu0 %v1222
        %v1345 = vpop.f32.mrb[0].mxu0
        %v1346 = vadd.f32 0.0, %v1345
        %v1347 = vpop.f32.mrb[0].mxu0
        %1348 = vmatprep.mubr.f32.mxu0 0.0
        %1349 = vmatmul.mubr.f32.gmra.mrb[0].mxu0 %v1223
        %v1350 = vpop.f32.mrb[0].mxu0
        %v1351 = vadd.f32 0.0, %v1350
        %v1352 = vpop.f32.mrb[0].mxu0
        %1353 = vmatprep.mubr.f32.mxu0 0.0
        %1354 = vmatmul.mubr.f32.gmra.mrb[0].mxu0 %v1224
        %v1355 = vpop.f32.mrb[0].mxu0
        %v1356 = vadd.f32 0.0, %v1355
        %v1357 = vpop.f32.mrb[0].mxu0
        %1358 = vmatprep.mubr.f32.mxu0 0.0
        %1359 = vmatmul.mubr.f32.gmra.mrb[0].mxu0 %v1225
        %v1360 = vpop.f32.mrb[0].mxu0
        %v1361 = vadd.f32 0.0, %v1360
        %v1362 = vpop.f32.mrb[0].mxu0
        %1363 = vmatprep.mubr.f32.mxu0 0.0
        %1364 = vmatmul.mubr.f32.gmra.mrb[0].mxu0 %v1226
        %v1365 = vpop.f32.mrb[0].mxu0
        %v1366 = vadd.f32 0.0, %v1365
        %v1367 = vpop.f32.mrb[0].mxu0
        %1368 = vmatprep.mubr.f32.mxu0 0.0
        %1369 = vmatmul.mubr.f32.gmra.mrb[0].mxu0 %v1227
        %v1370 = vpop.f32.mrb[0].mxu0
        %v1371 = vadd.f32 0.0, %v1370
        %v1372 = vpop.f32.mrb[0].mxu0
        %1373 = vmatprep.mubr.f32.mxu0 0.0
        %1374 = vmatmul.mubr.f32.gmra.mrb[0].mxu0 %v1228
        %v1375 = vpop.f32.mrb[0].mxu0
        %v1376 = vadd.f32 0.0, %v1375
        %v1377 = vpop.f32.mrb[0].mxu0
        %1378 = vmatprep.mubr.f32.mxu0 0.0
        %1379 = vmatmul.mubr.f32.gmra.mrb[0].mxu0 %v1229
        %v1380 = vpop.f32.mrb[0].mxu0
        %v1381 = vadd.f32 0.0, %v1380
        %v1382 = vpop.f32.mrb[0].mxu0
        %1383 = vmatprep.mubr.f32.mxu0 0.0
        %1384 = vmatmul.mubr.f32.gmra.mrb[0].mxu0 %v1230
        %v1385 = vpop.f32.mrb[0].mxu0
        %v1386 = vadd.f32 0.0, %v1385
        %v1387 = vpop.f32.mrb[0].mxu0
        %1388 = vmatprep.mubr.f32.mxu0 0.0
        %1389 = vmatmul.mubr.f32.gmra.mrb[0].mxu0 %v1231
        %v1390 = vpop.f32.mrb[0].mxu0
        %v1391 = vadd.f32 0.0, %v1390
        %v1392 = vpop.f32.mrb[0].mxu0
        %1393 = vdwg.mxu0
        %v1394 = vadd.f32 %v1200, %v1316
        %v1395 = vadd.f32 %v1201, %v1321
        %v1396 = vadd.f32 %v1202, %v1326
        %v1397 = vadd.f32 %v1203, %v1331
        %v1398 = vadd.f32 %v1204, %v1336
        %v1399 = vadd.f32 %v1205, %v1341
        %v1400 = vadd.f32 %v1206, %v1346
        %v1401 = vadd.f32 %v1207, %v1351
        %v1402 = vadd.f32 %v1208, %v1356
        %v1403 = vadd.f32 %v1209, %v1361
        %v1404 = vadd.f32 %v1210, %v1366
        %v1405 = vadd.f32 %v1211, %v1371
        %v1406 = vadd.f32 %v1212, %v1376
        %v1407 = vadd.f32 %v1213, %v1381
        %v1408 = vadd.f32 %v1214, %v1386
        %v1409 = vadd.f32 %v1215, %v1391
        %v1410 = vld [vmem:[#allocation2 + $0x11] sm:$0xff]
        %v1411 = vld [vmem:[#allocation2 + $0x19] sm:$0xff]
        %v1412 = vld [vmem:[#allocation2 + $0x21] sm:$0xff]
        %v1413 = vld [vmem:[#allocation2 + $0x29] sm:$0xff]
        %v1414 = vld [vmem:[#allocation2 + $0x31] sm:$0xff]
        %v1415 = vld [vmem:[#allocation2 + $0x39] sm:$0xff]
        %v1416 = vld [vmem:[#allocation2 + $0x41] sm:$0xff]
        %v1417 = vld [vmem:[#allocation2 + $0x49] sm:$0xff]
        %v1418 = vld [vmem:[#allocation2 + $0x51] sm:$0xff]
        %v1419 = vld [vmem:[#allocation2 + $0x59] sm:$0xff]
        %v1420 = vld [vmem:[#allocation2 + $0x61] sm:$0xff]
        %v1421 = vld [vmem:[#allocation2 + $0x69] sm:$0xff]
        %v1422 = vld [vmem:[#allocation2 + $0x71] sm:$0xff]
        %v1423 = vld [vmem:[#allocation2 + $0x79] sm:$0xff]
        %v1424 = vld [vmem:[#allocation2 + $0x81] sm:$0xff]
        %v1425 = vld [vmem:[#allocation2 + $0x89] sm:$0xff]
        %s1426 = scalar_lea.vmem [#allocation8], 512
        %v1427 = vld [vmem:[%s1426] sm:$0xff]
        %v1428 = vld [vmem:[%s1426 + $0x8] sm:$0xff]
        %v1429 = vld [vmem:[%s1426 + $0x10] sm:$0xff]
        %v1430 = vld [vmem:[%s1426 + $0x18] sm:$0xff]
        %v1431 = vld [vmem:[%s1426 + $0x20] sm:$0xff]
        %v1432 = vld [vmem:[%s1426 + $0x28] sm:$0xff]
        %v1433 = vld [vmem:[%s1426 + $0x30] sm:$0xff]
        %v1434 = vld [vmem:[%s1426 + $0x38] sm:$0xff]
        %v1435 = vld [vmem:[%s1426 + $0x40] sm:$0xff]
        %v1436 = vld [vmem:[%s1426 + $0x48] sm:$0xff]
        %v1437 = vld [vmem:[%s1426 + $0x50] sm:$0xff]
        %v1438 = vld [vmem:[%s1426 + $0x58] sm:$0xff]
        %v1439 = vld [vmem:[%s1426 + $0x60] sm:$0xff]
        %v1440 = vld [vmem:[%s1426 + $0x68] sm:$0xff]
        %v1441 = vld [vmem:[%s1426 + $0x70] sm:$0xff]
        %v1442 = vld [vmem:[%s1426 + $0x78] sm:$0xff]
        %1443 = vmatprep.subr.mxu0 0.0
        %1444 = vmatpush1.msra.mxu0 %v1427
        %1445 = vmatprep.subr.mxu0 0.0
        %1446 = vmatpush1.msra.mxu0 %v1428
        %1447 = vmatprep.subr.mxu0 0.0
        %1448 = vmatpush1.msra.mxu0 %v1429
        %1449 = vmatprep.subr.mxu0 0.0
        %1450 = vmatpush1.msra.mxu0 %v1430
        %1451 = vmatprep.subr.mxu0 0.0
        %1452 = vmatpush1.msra.mxu0 %v1431
        %1453 = vmatprep.subr.mxu0 0.0
        %1454 = vmatpush1.msra.mxu0 %v1432
        %1455 = vmatprep.subr.mxu0 0.0
        %1456 = vmatpush1.msra.mxu0 %v1433
        %1457 = vmatprep.subr.mxu0 0.0
        %1458 = vmatpush1.msra.mxu0 %v1434
        %1459 = vmatprep.subr.mxu0 0.0
        %1460 = vmatpush1.msra.mxu0 %v1435
        %1461 = vmatprep.subr.mxu0 0.0
        %1462 = vmatpush1.msra.mxu0 %v1436
        %1463 = vmatprep.subr.mxu0 0.0
        %1464 = vmatpush1.msra.mxu0 %v1437
        %1465 = vmatprep.subr.mxu0 0.0
        %1466 = vmatpush1.msra.mxu0 %v1438
        %1467 = vmatprep.subr.mxu0 0.0
        %1468 = vmatpush1.msra.mxu0 %v1439
        %1469 = vmatprep.subr.mxu0 0.0
        %1470 = vmatpush1.msra.mxu0 %v1440
        %1471 = vmatprep.subr.mxu0 0.0
        %1472 = vmatpush1.msra.mxu0 %v1441
        %1473 = vmatprep.subr.mxu0 0.0
        %1474 = vmatpush1.msra.mxu0 %v1442
        %1475 = vmatprep.subr.mxu0 0.0
        %1476 = vmatpush1.msra.mxu0 0.0
        %1477 = vmatprep.subr.mxu0 0.0
        %1478 = vmatpush1.msra.mxu0 0.0
        %1479 = vmatprep.subr.mxu0 0.0
        %1480 = vmatpush1.msra.mxu0 0.0
        %1481 = vmatprep.subr.mxu0 0.0
        %1482 = vmatpush1.msra.mxu0 0.0
        %1483 = vmatprep.subr.mxu0 0.0
        %1484 = vmatpush1.msra.mxu0 0.0
        %1485 = vmatprep.subr.mxu0 0.0
        %1486 = vmatpush1.msra.mxu0 0.0
        %1487 = vmatprep.subr.mxu0 0.0
        %1488 = vmatpush1.msra.mxu0 0.0
        %1489 = vmatprep.subr.mxu0 0.0
        %1490 = vmatpush1.msra.mxu0 0.0
        %1491 = vmatprep.subr.mxu0 0.0
        %1492 = vmatpush1.msra.mxu0 0.0
        %1493 = vmatprep.subr.mxu0 0.0
        %1494 = vmatpush1.msra.mxu0 0.0
        %1495 = vmatprep.subr.mxu0 0.0
        %1496 = vmatpush1.msra.mxu0 0.0
        %1497 = vmatprep.subr.mxu0 0.0
        %1498 = vmatpush1.msra.mxu0 0.0
        %1499 = vmatprep.subr.mxu0 0.0
        %1500 = vmatpush1.msra.mxu0 0.0
        %1501 = vmatprep.subr.mxu0 0.0
        %1502 = vmatpush1.msra.mxu0 0.0
        %1503 = vmatprep.subr.mxu0 0.0
        %1504 = vmatpush1.msra.mxu0 0.0
        %1505 = vmatprep.subr.mxu0 0.0
        %1506 = vmatpush1.msra.mxu0 0.0
        %1507 = vmatprep.mubr.f32.mxu0 0.0
        %1508 = vmatmul.mubr.f32.gmra.mrb[0].mxu0 %v1410
        %v1509 = vpop.f32.mrb[0].mxu0
        %v1510 = vadd.f32 0.0, %v1509
        %v1511 = vpop.f32.mrb[0].mxu0
        %1512 = vmatprep.mubr.f32.mxu0 0.0
        %1513 = vmatmul.mubr.f32.gmra.mrb[0].mxu0 %v1411
        %v1514 = vpop.f32.mrb[0].mxu0
        %v1515 = vadd.f32 0.0, %v1514
        %v1516 = vpop.f32.mrb[0].mxu0
        %1517 = vmatprep.mubr.f32.mxu0 0.0
        %1518 = vmatmul.mubr.f32.gmra.mrb[0].mxu0 %v1412
        %v1519 = vpop.f32.mrb[0].mxu0
        %v1520 = vadd.f32 0.0, %v1519
        %v1521 = vpop.f32.mrb[0].mxu0
        %1522 = vmatprep.mubr.f32.mxu0 0.0
        %1523 = vmatmul.mubr.f32.gmra.mrb[0].mxu0 %v1413
        %v1524 = vpop.f32.mrb[0].mxu0
        %v1525 = vadd.f32 0.0, %v1524
        %v1526 = vpop.f32.mrb[0].mxu0
        %1527 = vmatprep.mubr.f32.mxu0 0.0
        %1528 = vmatmul.mubr.f32.gmra.mrb[0].mxu0 %v1414
        %v1529 = vpop.f32.mrb[0].mxu0
        %v1530 = vadd.f32 0.0, %v1529
        %v1531 = vpop.f32.mrb[0].mxu0
        %1532 = vmatprep.mubr.f32.mxu0 0.0
        %1533 = vmatmul.mubr.f32.gmra.mrb[0].mxu0 %v1415
        %v1534 = vpop.f32.mrb[0].mxu0
        %v1535 = vadd.f32 0.0, %v1534
        %v1536 = vpop.f32.mrb[0].mxu0
        %1537 = vmatprep.mubr.f32.mxu0 0.0
        %1538 = vmatmul.mubr.f32.gmra.mrb[0].mxu0 %v1416
        %v1539 = vpop.f32.mrb[0].mxu0
        %v1540 = vadd.f32 0.0, %v1539
        %v1541 = vpop.f32.mrb[0].mxu0
        %1542 = vmatprep.mubr.f32.mxu0 0.0
        %1543 = vmatmul.mubr.f32.gmra.mrb[0].mxu0 %v1417
        %v1544 = vpop.f32.mrb[0].mxu0
        %v1545 = vadd.f32 0.0, %v1544
        %v1546 = vpop.f32.mrb[0].mxu0
        %1547 = vmatprep.mubr.f32.mxu0 0.0
        %1548 = vmatmul.mubr.f32.gmra.mrb[0].mxu0 %v1418
        %v1549 = vpop.f32.mrb[0].mxu0
        %v1550 = vadd.f32 0.0, %v1549
        %v1551 = vpop.f32.mrb[0].mxu0
        %1552 = vmatprep.mubr.f32.mxu0 0.0
        %1553 = vmatmul.mubr.f32.gmra.mrb[0].mxu0 %v1419
        %v1554 = vpop.f32.mrb[0].mxu0
        %v1555 = vadd.f32 0.0, %v1554
        %v1556 = vpop.f32.mrb[0].mxu0
        %1557 = vmatprep.mubr.f32.mxu0 0.0
        %1558 = vmatmul.mubr.f32.gmra.mrb[0].mxu0 %v1420
        %v1559 = vpop.f32.mrb[0].mxu0
        %v1560 = vadd.f32 0.0, %v1559
        %v1561 = vpop.f32.mrb[0].mxu0
        %1562 = vmatprep.mubr.f32.mxu0 0.0
        %1563 = vmatmul.mubr.f32.gmra.mrb[0].mxu0 %v1421
        %v1564 = vpop.f32.mrb[0].mxu0
        %v1565 = vadd.f32 0.0, %v1564
        %v1566 = vpop.f32.mrb[0].mxu0
        %1567 = vmatprep.mubr.f32.mxu0 0.0
        %1568 = vmatmul.mubr.f32.gmra.mrb[0].mxu0 %v1422
        %v1569 = vpop.f32.mrb[0].mxu0
        %v1570 = vadd.f32 0.0, %v1569
        %v1571 = vpop.f32.mrb[0].mxu0
        %1572 = vmatprep.mubr.f32.mxu0 0.0
        %1573 = vmatmul.mubr.f32.gmra.mrb[0].mxu0 %v1423
        %v1574 = vpop.f32.mrb[0].mxu0
        %v1575 = vadd.f32 0.0, %v1574
        %v1576 = vpop.f32.mrb[0].mxu0
        %1577 = vmatprep.mubr.f32.mxu0 0.0
        %1578 = vmatmul.mubr.f32.gmra.mrb[0].mxu0 %v1424
        %v1579 = vpop.f32.mrb[0].mxu0
        %v1580 = vadd.f32 0.0, %v1579
        %v1581 = vpop.f32.mrb[0].mxu0
        %1582 = vmatprep.mubr.f32.mxu0 0.0
        %1583 = vmatmul.mubr.f32.gmra.mrb[0].mxu0 %v1425
        %v1584 = vpop.f32.mrb[0].mxu0
        %v1585 = vadd.f32 0.0, %v1584
        %v1586 = vpop.f32.mrb[0].mxu0
        %1587 = vdwg.mxu0
        %v1588 = vadd.f32 %v1394, %v1510
        %v1589 = vadd.f32 %v1395, %v1515
        %v1590 = vadd.f32 %v1396, %v1520
        %v1591 = vadd.f32 %v1397, %v1525
        %v1592 = vadd.f32 %v1398, %v1530
        %v1593 = vadd.f32 %v1399, %v1535
        %v1594 = vadd.f32 %v1400, %v1540
        %v1595 = vadd.f32 %v1401, %v1545
        %v1596 = vadd.f32 %v1402, %v1550
        %v1597 = vadd.f32 %v1403, %v1555
        %v1598 = vadd.f32 %v1404, %v1560
        %v1599 = vadd.f32 %v1405, %v1565
        %v1600 = vadd.f32 %v1406, %v1570
        %v1601 = vadd.f32 %v1407, %v1575
        %v1602 = vadd.f32 %v1408, %v1580
        %v1603 = vadd.f32 %v1409, %v1585
        %v1604 = vld [vmem:[#allocation2 + $0x12] sm:$0xff]
        %v1605 = vld [vmem:[#allocation2 + $0x1a] sm:$0xff]
        %v1606 = vld [vmem:[#allocation2 + $0x22] sm:$0xff]
        %v1607 = vld [vmem:[#allocation2 + $0x2a] sm:$0xff]
        %v1608 = vld [vmem:[#allocation2 + $0x32] sm:$0xff]
        %v1609 = vld [vmem:[#allocation2 + $0x3a] sm:$0xff]
        %v1610 = vld [vmem:[#allocation2 + $0x42] sm:$0xff]
        %v1611 = vld [vmem:[#allocation2 + $0x4a] sm:$0xff]
        %v1612 = vld [vmem:[#allocation2 + $0x52] sm:$0xff]
        %v1613 = vld [vmem:[#allocation2 + $0x5a] sm:$0xff]
        %v1614 = vld [vmem:[#allocation2 + $0x62] sm:$0xff]
        %v1615 = vld [vmem:[#allocation2 + $0x6a] sm:$0xff]
        %v1616 = vld [vmem:[#allocation2 + $0x72] sm:$0xff]
        %v1617 = vld [vmem:[#allocation2 + $0x7a] sm:$0xff]
        %v1618 = vld [vmem:[#allocation2 + $0x82] sm:$0xff]
        %v1619 = vld [vmem:[#allocation2 + $0x8a] sm:$0xff]
        %s1620 = scalar_lea.vmem [#allocation8], 640
        %v1621 = vld [vmem:[%s1620] sm:$0xff]
        %v1622 = vld [vmem:[%s1620 + $0x8] sm:$0xff]
        %v1623 = vld [vmem:[%s1620 + $0x10] sm:$0xff]
        %v1624 = vld [vmem:[%s1620 + $0x18] sm:$0xff]
        %v1625 = vld [vmem:[%s1620 + $0x20] sm:$0xff]
        %v1626 = vld [vmem:[%s1620 + $0x28] sm:$0xff]
        %v1627 = vld [vmem:[%s1620 + $0x30] sm:$0xff]
        %v1628 = vld [vmem:[%s1620 + $0x38] sm:$0xff]
        %v1629 = vld [vmem:[%s1620 + $0x40] sm:$0xff]
        %v1630 = vld [vmem:[%s1620 + $0x48] sm:$0xff]
        %v1631 = vld [vmem:[%s1620 + $0x50] sm:$0xff]
        %v1632 = vld [vmem:[%s1620 + $0x58] sm:$0xff]
        %v1633 = vld [vmem:[%s1620 + $0x60] sm:$0xff]
        %v1634 = vld [vmem:[%s1620 + $0x68] sm:$0xff]
        %v1635 = vld [vmem:[%s1620 + $0x70] sm:$0xff]
        %v1636 = vld [vmem:[%s1620 + $0x78] sm:$0xff]
        %1637 = vmatprep.subr.mxu0 0.0
        %1638 = vmatpush1.msra.mxu0 %v1621
        %1639 = vmatprep.subr.mxu0 0.0
        %1640 = vmatpush1.msra.mxu0 %v1622
        %1641 = vmatprep.subr.mxu0 0.0
        %1642 = vmatpush1.msra.mxu0 %v1623
        %1643 = vmatprep.subr.mxu0 0.0
        %1644 = vmatpush1.msra.mxu0 %v1624
        %1645 = vmatprep.subr.mxu0 0.0
        %1646 = vmatpush1.msra.mxu0 %v1625
        %1647 = vmatprep.subr.mxu0 0.0
        %1648 = vmatpush1.msra.mxu0 %v1626
        %1649 = vmatprep.subr.mxu0 0.0
        %1650 = vmatpush1.msra.mxu0 %v1627
        %1651 = vmatprep.subr.mxu0 0.0
        %1652 = vmatpush1.msra.mxu0 %v1628
        %1653 = vmatprep.subr.mxu0 0.0
        %1654 = vmatpush1.msra.mxu0 %v1629
        %1655 = vmatprep.subr.mxu0 0.0
        %1656 = vmatpush1.msra.mxu0 %v1630
        %1657 = vmatprep.subr.mxu0 0.0
        %1658 = vmatpush1.msra.mxu0 %v1631
        %1659 = vmatprep.subr.mxu0 0.0
        %1660 = vmatpush1.msra.mxu0 %v1632
        %1661 = vmatprep.subr.mxu0 0.0
        %1662 = vmatpush1.msra.mxu0 %v1633
        %1663 = vmatprep.subr.mxu0 0.0
        %1664 = vmatpush1.msra.mxu0 %v1634
        %1665 = vmatprep.subr.mxu0 0.0
        %1666 = vmatpush1.msra.mxu0 %v1635
        %1667 = vmatprep.subr.mxu0 0.0
        %1668 = vmatpush1.msra.mxu0 %v1636
        %1669 = vmatprep.subr.mxu0 0.0
        %1670 = vmatpush1.msra.mxu0 0.0
        %1671 = vmatprep.subr.mxu0 0.0
        %1672 = vmatpush1.msra.mxu0 0.0
        %1673 = vmatprep.subr.mxu0 0.0
        %1674 = vmatpush1.msra.mxu0 0.0
        %1675 = vmatprep.subr.mxu0 0.0
        %1676 = vmatpush1.msra.mxu0 0.0
        %1677 = vmatprep.subr.mxu0 0.0
        %1678 = vmatpush1.msra.mxu0 0.0
        %1679 = vmatprep.subr.mxu0 0.0
        %1680 = vmatpush1.msra.mxu0 0.0
        %1681 = vmatprep.subr.mxu0 0.0
        %1682 = vmatpush1.msra.mxu0 0.0
        %1683 = vmatprep.subr.mxu0 0.0
        %1684 = vmatpush1.msra.mxu0 0.0
        %1685 = vmatprep.subr.mxu0 0.0
        %1686 = vmatpush1.msra.mxu0 0.0
        %1687 = vmatprep.subr.mxu0 0.0
        %1688 = vmatpush1.msra.mxu0 0.0
        %1689 = vmatprep.subr.mxu0 0.0
        %1690 = vmatpush1.msra.mxu0 0.0
        %1691 = vmatprep.subr.mxu0 0.0
        %1692 = vmatpush1.msra.mxu0 0.0
        %1693 = vmatprep.subr.mxu0 0.0
        %1694 = vmatpush1.msra.mxu0 0.0
        %1695 = vmatprep.subr.mxu0 0.0
        %1696 = vmatpush1.msra.mxu0 0.0
        %1697 = vmatprep.subr.mxu0 0.0
        %1698 = vmatpush1.msra.mxu0 0.0
        %1699 = vmatprep.subr.mxu0 0.0
        %1700 = vmatpush1.msra.mxu0 0.0
        %1701 = vmatprep.mubr.f32.mxu0 0.0
        %1702 = vmatmul.mubr.f32.gmra.mrb[0].mxu0 %v1604
        %v1703 = vpop.f32.mrb[0].mxu0
        %v1704 = vadd.f32 0.0, %v1703
        %v1705 = vpop.f32.mrb[0].mxu0
        %1706 = vmatprep.mubr.f32.mxu0 0.0
        %1707 = vmatmul.mubr.f32.gmra.mrb[0].mxu0 %v1605
        %v1708 = vpop.f32.mrb[0].mxu0
        %v1709 = vadd.f32 0.0, %v1708
        %v1710 = vpop.f32.mrb[0].mxu0
        %1711 = vmatprep.mubr.f32.mxu0 0.0
        %1712 = vmatmul.mubr.f32.gmra.mrb[0].mxu0 %v1606
        %v1713 = vpop.f32.mrb[0].mxu0
        %v1714 = vadd.f32 0.0, %v1713
        %v1715 = vpop.f32.mrb[0].mxu0
        %1716 = vmatprep.mubr.f32.mxu0 0.0
        %1717 = vmatmul.mubr.f32.gmra.mrb[0].mxu0 %v1607
        %v1718 = vpop.f32.mrb[0].mxu0
        %v1719 = vadd.f32 0.0, %v1718
        %v1720 = vpop.f32.mrb[0].mxu0
        %1721 = vmatprep.mubr.f32.mxu0 0.0
        %1722 = vmatmul.mubr.f32.gmra.mrb[0].mxu0 %v1608
        %v1723 = vpop.f32.mrb[0].mxu0
        %v1724 = vadd.f32 0.0, %v1723
        %v1725 = vpop.f32.mrb[0].mxu0
        %1726 = vmatprep.mubr.f32.mxu0 0.0
        %1727 = vmatmul.mubr.f32.gmra.mrb[0].mxu0 %v1609
        %v1728 = vpop.f32.mrb[0].mxu0
        %v1729 = vadd.f32 0.0, %v1728
        %v1730 = vpop.f32.mrb[0].mxu0
        %1731 = vmatprep.mubr.f32.mxu0 0.0
        %1732 = vmatmul.mubr.f32.gmra.mrb[0].mxu0 %v1610
        %v1733 = vpop.f32.mrb[0].mxu0
        %v1734 = vadd.f32 0.0, %v1733
        %v1735 = vpop.f32.mrb[0].mxu0
        %1736 = vmatprep.mubr.f32.mxu0 0.0
        %1737 = vmatmul.mubr.f32.gmra.mrb[0].mxu0 %v1611
        %v1738 = vpop.f32.mrb[0].mxu0
        %v1739 = vadd.f32 0.0, %v1738
        %v1740 = vpop.f32.mrb[0].mxu0
        %1741 = vmatprep.mubr.f32.mxu0 0.0
        %1742 = vmatmul.mubr.f32.gmra.mrb[0].mxu0 %v1612
        %v1743 = vpop.f32.mrb[0].mxu0
        %v1744 = vadd.f32 0.0, %v1743
        %v1745 = vpop.f32.mrb[0].mxu0
        %1746 = vmatprep.mubr.f32.mxu0 0.0
        %1747 = vmatmul.mubr.f32.gmra.mrb[0].mxu0 %v1613
        %v1748 = vpop.f32.mrb[0].mxu0
        %v1749 = vadd.f32 0.0, %v1748
        %v1750 = vpop.f32.mrb[0].mxu0
        %1751 = vmatprep.mubr.f32.mxu0 0.0
        %1752 = vmatmul.mubr.f32.gmra.mrb[0].mxu0 %v1614
        %v1753 = vpop.f32.mrb[0].mxu0
        %v1754 = vadd.f32 0.0, %v1753
        %v1755 = vpop.f32.mrb[0].mxu0
        %1756 = vmatprep.mubr.f32.mxu0 0.0
        %1757 = vmatmul.mubr.f32.gmra.mrb[0].mxu0 %v1615
        %v1758 = vpop.f32.mrb[0].mxu0
        %v1759 = vadd.f32 0.0, %v1758
        %v1760 = vpop.f32.mrb[0].mxu0
        %1761 = vmatprep.mubr.f32.mxu0 0.0
        %1762 = vmatmul.mubr.f32.gmra.mrb[0].mxu0 %v1616
        %v1763 = vpop.f32.mrb[0].mxu0
        %v1764 = vadd.f32 0.0, %v1763
        %v1765 = vpop.f32.mrb[0].mxu0
        %1766 = vmatprep.mubr.f32.mxu0 0.0
        %1767 = vmatmul.mubr.f32.gmra.mrb[0].mxu0 %v1617
        %v1768 = vpop.f32.mrb[0].mxu0
        %v1769 = vadd.f32 0.0, %v1768
        %v1770 = vpop.f32.mrb[0].mxu0
        %1771 = vmatprep.mubr.f32.mxu0 0.0
        %1772 = vmatmul.mubr.f32.gmra.mrb[0].mxu0 %v1618
        %v1773 = vpop.f32.mrb[0].mxu0
        %v1774 = vadd.f32 0.0, %v1773
        %v1775 = vpop.f32.mrb[0].mxu0
        %1776 = vmatprep.mubr.f32.mxu0 0.0
        %1777 = vmatmul.mubr.f32.gmra.mrb[0].mxu0 %v1619
        %v1778 = vpop.f32.mrb[0].mxu0
        %v1779 = vadd.f32 0.0, %v1778
        %v1780 = vpop.f32.mrb[0].mxu0
        %1781 = vdwg.mxu0
        %v1782 = vadd.f32 %v1588, %v1704
        %v1783 = vadd.f32 %v1589, %v1709
        %v1784 = vadd.f32 %v1590, %v1714
        %v1785 = vadd.f32 %v1591, %v1719
        %v1786 = vadd.f32 %v1592, %v1724
        %v1787 = vadd.f32 %v1593, %v1729
        %v1788 = vadd.f32 %v1594, %v1734
        %v1789 = vadd.f32 %v1595, %v1739
        %v1790 = vadd.f32 %v1596, %v1744
        %v1791 = vadd.f32 %v1597, %v1749
        %v1792 = vadd.f32 %v1598, %v1754
        %v1793 = vadd.f32 %v1599, %v1759
        %v1794 = vadd.f32 %v1600, %v1764
        %v1795 = vadd.f32 %v1601, %v1769
        %v1796 = vadd.f32 %v1602, %v1774
        %v1797 = vadd.f32 %v1603, %v1779
        %v1798 = vld [vmem:[#allocation2 + $0x20] sm:$0xff]
        %v1799 = vld [vmem:[#allocation2 + $0x28] sm:$0xff]
        %v1800 = vld [vmem:[#allocation2 + $0x30] sm:$0xff]
        %v1801 = vld [vmem:[#allocation2 + $0x38] sm:$0xff]
        %v1802 = vld [vmem:[#allocation2 + $0x40] sm:$0xff]
        %v1803 = vld [vmem:[#allocation2 + $0x48] sm:$0xff]
        %v1804 = vld [vmem:[#allocation2 + $0x50] sm:$0xff]
        %v1805 = vld [vmem:[#allocation2 + $0x58] sm:$0xff]
        %v1806 = vld [vmem:[#allocation2 + $0x60] sm:$0xff]
        %v1807 = vld [vmem:[#allocation2 + $0x68] sm:$0xff]
        %v1808 = vld [vmem:[#allocation2 + $0x70] sm:$0xff]
        %v1809 = vld [vmem:[#allocation2 + $0x78] sm:$0xff]
        %v1810 = vld [vmem:[#allocation2 + $0x80] sm:$0xff]
        %v1811 = vld [vmem:[#allocation2 + $0x88] sm:$0xff]
        %v1812 = vld [vmem:[#allocation2 + $0x90] sm:$0xff]
        %v1813 = vld [vmem:[#allocation2 + $0x98] sm:$0xff]
        %s1814 = scalar_lea.vmem [#allocation8], 768
        %v1815 = vld [vmem:[%s1814] sm:$0xff]
        %v1816 = vld [vmem:[%s1814 + $0x8] sm:$0xff]
        %v1817 = vld [vmem:[%s1814 + $0x10] sm:$0xff]
        %v1818 = vld [vmem:[%s1814 + $0x18] sm:$0xff]
        %v1819 = vld [vmem:[%s1814 + $0x20] sm:$0xff]
        %v1820 = vld [vmem:[%s1814 + $0x28] sm:$0xff]
        %v1821 = vld [vmem:[%s1814 + $0x30] sm:$0xff]
        %v1822 = vld [vmem:[%s1814 + $0x38] sm:$0xff]
        %v1823 = vld [vmem:[%s1814 + $0x40] sm:$0xff]
        %v1824 = vld [vmem:[%s1814 + $0x48] sm:$0xff]
        %v1825 = vld [vmem:[%s1814 + $0x50] sm:$0xff]
        %v1826 = vld [vmem:[%s1814 + $0x58] sm:$0xff]
        %v1827 = vld [vmem:[%s1814 + $0x60] sm:$0xff]
        %v1828 = vld [vmem:[%s1814 + $0x68] sm:$0xff]
        %v1829 = vld [vmem:[%s1814 + $0x70] sm:$0xff]
        %v1830 = vld [vmem:[%s1814 + $0x78] sm:$0xff]
        %1831 = vmatprep.subr.mxu0 0.0
        %1832 = vmatpush1.msra.mxu0 %v1815
        %1833 = vmatprep.subr.mxu0 0.0
        %1834 = vmatpush1.msra.mxu0 %v1816
        %1835 = vmatprep.subr.mxu0 0.0
        %1836 = vmatpush1.msra.mxu0 %v1817
        %1837 = vmatprep.subr.mxu0 0.0
        %1838 = vmatpush1.msra.mxu0 %v1818
        %1839 = vmatprep.subr.mxu0 0.0
        %1840 = vmatpush1.msra.mxu0 %v1819
        %1841 = vmatprep.subr.mxu0 0.0
        %1842 = vmatpush1.msra.mxu0 %v1820
        %1843 = vmatprep.subr.mxu0 0.0
        %1844 = vmatpush1.msra.mxu0 %v1821
        %1845 = vmatprep.subr.mxu0 0.0
        %1846 = vmatpush1.msra.mxu0 %v1822
        %1847 = vmatprep.subr.mxu0 0.0
        %1848 = vmatpush1.msra.mxu0 %v1823
        %1849 = vmatprep.subr.mxu0 0.0
        %1850 = vmatpush1.msra.mxu0 %v1824
        %1851 = vmatprep.subr.mxu0 0.0
        %1852 = vmatpush1.msra.mxu0 %v1825
        %1853 = vmatprep.subr.mxu0 0.0
        %1854 = vmatpush1.msra.mxu0 %v1826
        %1855 = vmatprep.subr.mxu0 0.0
        %1856 = vmatpush1.msra.mxu0 %v1827
        %1857 = vmatprep.subr.mxu0 0.0
        %1858 = vmatpush1.msra.mxu0 %v1828
        %1859 = vmatprep.subr.mxu0 0.0
        %1860 = vmatpush1.msra.mxu0 %v1829
        %1861 = vmatprep.subr.mxu0 0.0
        %1862 = vmatpush1.msra.mxu0 %v1830
        %1863 = vmatprep.subr.mxu0 0.0
        %1864 = vmatpush1.msra.mxu0 0.0
        %1865 = vmatprep.subr.mxu0 0.0
        %1866 = vmatpush1.msra.mxu0 0.0
        %1867 = vmatprep.subr.mxu0 0.0
        %1868 = vmatpush1.msra.mxu0 0.0
        %1869 = vmatprep.subr.mxu0 0.0
        %1870 = vmatpush1.msra.mxu0 0.0
        %1871 = vmatprep.subr.mxu0 0.0
        %1872 = vmatpush1.msra.mxu0 0.0
        %1873 = vmatprep.subr.mxu0 0.0
        %1874 = vmatpush1.msra.mxu0 0.0
        %1875 = vmatprep.subr.mxu0 0.0
        %1876 = vmatpush1.msra.mxu0 0.0
        %1877 = vmatprep.subr.mxu0 0.0
        %1878 = vmatpush1.msra.mxu0 0.0
        %1879 = vmatprep.subr.mxu0 0.0
        %1880 = vmatpush1.msra.mxu0 0.0
        %1881 = vmatprep.subr.mxu0 0.0
        %1882 = vmatpush1.msra.mxu0 0.0
        %1883 = vmatprep.subr.mxu0 0.0
        %1884 = vmatpush1.msra.mxu0 0.0
        %1885 = vmatprep.subr.mxu0 0.0
        %1886 = vmatpush1.msra.mxu0 0.0
        %1887 = vmatprep.subr.mxu0 0.0
        %1888 = vmatpush1.msra.mxu0 0.0
        %1889 = vmatprep.subr.mxu0 0.0
        %1890 = vmatpush1.msra.mxu0 0.0
        %1891 = vmatprep.subr.mxu0 0.0
        %1892 = vmatpush1.msra.mxu0 0.0
        %1893 = vmatprep.subr.mxu0 0.0
        %1894 = vmatpush1.msra.mxu0 0.0
        %1895 = vmatprep.mubr.f32.mxu0 0.0
        %1896 = vmatmul.mubr.f32.gmra.mrb[0].mxu0 %v1798
        %v1897 = vpop.f32.mrb[0].mxu0
        %v1898 = vadd.f32 0.0, %v1897
        %v1899 = vpop.f32.mrb[0].mxu0
        %1900 = vmatprep.mubr.f32.mxu0 0.0
        %1901 = vmatmul.mubr.f32.gmra.mrb[0].mxu0 %v1799
        %v1902 = vpop.f32.mrb[0].mxu0
        %v1903 = vadd.f32 0.0, %v1902
        %v1904 = vpop.f32.mrb[0].mxu0
        %1905 = vmatprep.mubr.f32.mxu0 0.0
        %1906 = vmatmul.mubr.f32.gmra.mrb[0].mxu0 %v1800
        %v1907 = vpop.f32.mrb[0].mxu0
        %v1908 = vadd.f32 0.0, %v1907
        %v1909 = vpop.f32.mrb[0].mxu0
        %1910 = vmatprep.mubr.f32.mxu0 0.0
        %1911 = vmatmul.mubr.f32.gmra.mrb[0].mxu0 %v1801
        %v1912 = vpop.f32.mrb[0].mxu0
        %v1913 = vadd.f32 0.0, %v1912
        %v1914 = vpop.f32.mrb[0].mxu0
        %1915 = vmatprep.mubr.f32.mxu0 0.0
        %1916 = vmatmul.mubr.f32.gmra.mrb[0].mxu0 %v1802
        %v1917 = vpop.f32.mrb[0].mxu0
        %v1918 = vadd.f32 0.0, %v1917
        %v1919 = vpop.f32.mrb[0].mxu0
        %1920 = vmatprep.mubr.f32.mxu0 0.0
        %1921 = vmatmul.mubr.f32.gmra.mrb[0].mxu0 %v1803
        %v1922 = vpop.f32.mrb[0].mxu0
        %v1923 = vadd.f32 0.0, %v1922
        %v1924 = vpop.f32.mrb[0].mxu0
        %1925 = vmatprep.mubr.f32.mxu0 0.0
        %1926 = vmatmul.mubr.f32.gmra.mrb[0].mxu0 %v1804
        %v1927 = vpop.f32.mrb[0].mxu0
        %v1928 = vadd.f32 0.0, %v1927
        %v1929 = vpop.f32.mrb[0].mxu0
        %1930 = vmatprep.mubr.f32.mxu0 0.0
        %1931 = vmatmul.mubr.f32.gmra.mrb[0].mxu0 %v1805
        %v1932 = vpop.f32.mrb[0].mxu0
        %v1933 = vadd.f32 0.0, %v1932
        %v1934 = vpop.f32.mrb[0].mxu0
        %1935 = vmatprep.mubr.f32.mxu0 0.0
        %1936 = vmatmul.mubr.f32.gmra.mrb[0].mxu0 %v1806
        %v1937 = vpop.f32.mrb[0].mxu0
        %v1938 = vadd.f32 0.0, %v1937
        %v1939 = vpop.f32.mrb[0].mxu0
        %1940 = vmatprep.mubr.f32.mxu0 0.0
        %1941 = vmatmul.mubr.f32.gmra.mrb[0].mxu0 %v1807
        %v1942 = vpop.f32.mrb[0].mxu0
        %v1943 = vadd.f32 0.0, %v1942
        %v1944 = vpop.f32.mrb[0].mxu0
        %1945 = vmatprep.mubr.f32.mxu0 0.0
        %1946 = vmatmul.mubr.f32.gmra.mrb[0].mxu0 %v1808
        %v1947 = vpop.f32.mrb[0].mxu0
        %v1948 = vadd.f32 0.0, %v1947
        %v1949 = vpop.f32.mrb[0].mxu0
        %1950 = vmatprep.mubr.f32.mxu0 0.0
        %1951 = vmatmul.mubr.f32.gmra.mrb[0].mxu0 %v1809
        %v1952 = vpop.f32.mrb[0].mxu0
        %v1953 = vadd.f32 0.0, %v1952
        %v1954 = vpop.f32.mrb[0].mxu0
        %1955 = vmatprep.mubr.f32.mxu0 0.0
        %1956 = vmatmul.mubr.f32.gmra.mrb[0].mxu0 %v1810
        %v1957 = vpop.f32.mrb[0].mxu0
        %v1958 = vadd.f32 0.0, %v1957
        %v1959 = vpop.f32.mrb[0].mxu0
        %1960 = vmatprep.mubr.f32.mxu0 0.0
        %1961 = vmatmul.mubr.f32.gmra.mrb[0].mxu0 %v1811
        %v1962 = vpop.f32.mrb[0].mxu0
        %v1963 = vadd.f32 0.0, %v1962
        %v1964 = vpop.f32.mrb[0].mxu0
        %1965 = vmatprep.mubr.f32.mxu0 0.0
        %1966 = vmatmul.mubr.f32.gmra.mrb[0].mxu0 %v1812
        %v1967 = vpop.f32.mrb[0].mxu0
        %v1968 = vadd.f32 0.0, %v1967
        %v1969 = vpop.f32.mrb[0].mxu0
        %1970 = vmatprep.mubr.f32.mxu0 0.0
        %1971 = vmatmul.mubr.f32.gmra.mrb[0].mxu0 %v1813
        %v1972 = vpop.f32.mrb[0].mxu0
        %v1973 = vadd.f32 0.0, %v1972
        %v1974 = vpop.f32.mrb[0].mxu0
        %1975 = vdwg.mxu0
        %v1976 = vadd.f32 %v1782, %v1898
        %v1977 = vadd.f32 %v1783, %v1903
        %v1978 = vadd.f32 %v1784, %v1908
        %v1979 = vadd.f32 %v1785, %v1913
        %v1980 = vadd.f32 %v1786, %v1918
        %v1981 = vadd.f32 %v1787, %v1923
        %v1982 = vadd.f32 %v1788, %v1928
        %v1983 = vadd.f32 %v1789, %v1933
        %v1984 = vadd.f32 %v1790, %v1938
        %v1985 = vadd.f32 %v1791, %v1943
        %v1986 = vadd.f32 %v1792, %v1948
        %v1987 = vadd.f32 %v1793, %v1953
        %v1988 = vadd.f32 %v1794, %v1958
        %v1989 = vadd.f32 %v1795, %v1963
        %v1990 = vadd.f32 %v1796, %v1968
        %v1991 = vadd.f32 %v1797, %v1973
        %v1992 = vld [vmem:[#allocation2 + $0x21] sm:$0xff]
        %v1993 = vld [vmem:[#allocation2 + $0x29] sm:$0xff]
        %v1994 = vld [vmem:[#allocation2 + $0x31] sm:$0xff]
        %v1995 = vld [vmem:[#allocation2 + $0x39] sm:$0xff]
        %v1996 = vld [vmem:[#allocation2 + $0x41] sm:$0xff]
        %v1997 = vld [vmem:[#allocation2 + $0x49] sm:$0xff]
        %v1998 = vld [vmem:[#allocation2 + $0x51] sm:$0xff]
        %v1999 = vld [vmem:[#allocation2 + $0x59] sm:$0xff]
        %v2000 = vld [vmem:[#allocation2 + $0x61] sm:$0xff]
        %v2001 = vld [vmem:[#allocation2 + $0x69] sm:$0xff]
        %v2002 = vld [vmem:[#allocation2 + $0x71] sm:$0xff]
        %v2003 = vld [vmem:[#allocation2 + $0x79] sm:$0xff]
        %v2004 = vld [vmem:[#allocation2 + $0x81] sm:$0xff]
        %v2005 = vld [vmem:[#allocation2 + $0x89] sm:$0xff]
        %v2006 = vld [vmem:[#allocation2 + $0x91] sm:$0xff]
        %v2007 = vld [vmem:[#allocation2 + $0x99] sm:$0xff]
        %s2008 = scalar_lea.vmem [#allocation8], 896
        %v2009 = vld [vmem:[%s2008] sm:$0xff]
        %v2010 = vld [vmem:[%s2008 + $0x8] sm:$0xff]
        %v2011 = vld [vmem:[%s2008 + $0x10] sm:$0xff]
        %v2012 = vld [vmem:[%s2008 + $0x18] sm:$0xff]
        %v2013 = vld [vmem:[%s2008 + $0x20] sm:$0xff]
        %v2014 = vld [vmem:[%s2008 + $0x28] sm:$0xff]
        %v2015 = vld [vmem:[%s2008 + $0x30] sm:$0xff]
        %v2016 = vld [vmem:[%s2008 + $0x38] sm:$0xff]
        %v2017 = vld [vmem:[%s2008 + $0x40] sm:$0xff]
        %v2018 = vld [vmem:[%s2008 + $0x48] sm:$0xff]
        %v2019 = vld [vmem:[%s2008 + $0x50] sm:$0xff]
        %v2020 = vld [vmem:[%s2008 + $0x58] sm:$0xff]
        %v2021 = vld [vmem:[%s2008 + $0x60] sm:$0xff]
        %v2022 = vld [vmem:[%s2008 + $0x68] sm:$0xff]
        %v2023 = vld [vmem:[%s2008 + $0x70] sm:$0xff]
        %v2024 = vld [vmem:[%s2008 + $0x78] sm:$0xff]
        %2025 = vmatprep.subr.mxu0 0.0
        %2026 = vmatpush1.msra.mxu0 %v2009
        %2027 = vmatprep.subr.mxu0 0.0
        %2028 = vmatpush1.msra.mxu0 %v2010
        %2029 = vmatprep.subr.mxu0 0.0
        %2030 = vmatpush1.msra.mxu0 %v2011
        %2031 = vmatprep.subr.mxu0 0.0
        %2032 = vmatpush1.msra.mxu0 %v2012
        %2033 = vmatprep.subr.mxu0 0.0
        %2034 = vmatpush1.msra.mxu0 %v2013
        %2035 = vmatprep.subr.mxu0 0.0
        %2036 = vmatpush1.msra.mxu0 %v2014
        %2037 = vmatprep.subr.mxu0 0.0
        %2038 = vmatpush1.msra.mxu0 %v2015
        %2039 = vmatprep.subr.mxu0 0.0
        %2040 = vmatpush1.msra.mxu0 %v2016
        %2041 = vmatprep.subr.mxu0 0.0
        %2042 = vmatpush1.msra.mxu0 %v2017
        %2043 = vmatprep.subr.mxu0 0.0
        %2044 = vmatpush1.msra.mxu0 %v2018
        %2045 = vmatprep.subr.mxu0 0.0
        %2046 = vmatpush1.msra.mxu0 %v2019
        %2047 = vmatprep.subr.mxu0 0.0
        %2048 = vmatpush1.msra.mxu0 %v2020
        %2049 = vmatprep.subr.mxu0 0.0
        %2050 = vmatpush1.msra.mxu0 %v2021
        %2051 = vmatprep.subr.mxu0 0.0
        %2052 = vmatpush1.msra.mxu0 %v2022
        %2053 = vmatprep.subr.mxu0 0.0
        %2054 = vmatpush1.msra.mxu0 %v2023
        %2055 = vmatprep.subr.mxu0 0.0
        %2056 = vmatpush1.msra.mxu0 %v2024
        %2057 = vmatprep.subr.mxu0 0.0
        %2058 = vmatpush1.msra.mxu0 0.0
        %2059 = vmatprep.subr.mxu0 0.0
        %2060 = vmatpush1.msra.mxu0 0.0
        %2061 = vmatprep.subr.mxu0 0.0
        %2062 = vmatpush1.msra.mxu0 0.0
        %2063 = vmatprep.subr.mxu0 0.0
        %2064 = vmatpush1.msra.mxu0 0.0
        %2065 = vmatprep.subr.mxu0 0.0
        %2066 = vmatpush1.msra.mxu0 0.0
        %2067 = vmatprep.subr.mxu0 0.0
        %2068 = vmatpush1.msra.mxu0 0.0
        %2069 = vmatprep.subr.mxu0 0.0
        %2070 = vmatpush1.msra.mxu0 0.0
        %2071 = vmatprep.subr.mxu0 0.0
        %2072 = vmatpush1.msra.mxu0 0.0
        %2073 = vmatprep.subr.mxu0 0.0
        %2074 = vmatpush1.msra.mxu0 0.0
        %2075 = vmatprep.subr.mxu0 0.0
        %2076 = vmatpush1.msra.mxu0 0.0
        %2077 = vmatprep.subr.mxu0 0.0
        %2078 = vmatpush1.msra.mxu0 0.0
        %2079 = vmatprep.subr.mxu0 0.0
        %2080 = vmatpush1.msra.mxu0 0.0
        %2081 = vmatprep.subr.mxu0 0.0
        %2082 = vmatpush1.msra.mxu0 0.0
        %2083 = vmatprep.subr.mxu0 0.0
        %2084 = vmatpush1.msra.mxu0 0.0
        %2085 = vmatprep.subr.mxu0 0.0
        %2086 = vmatpush1.msra.mxu0 0.0
        %2087 = vmatprep.subr.mxu0 0.0
        %2088 = vmatpush1.msra.mxu0 0.0
        %2089 = vmatprep.mubr.f32.mxu0 0.0
        %2090 = vmatmul.mubr.f32.gmra.mrb[0].mxu0 %v1992
        %v2091 = vpop.f32.mrb[0].mxu0
        %v2092 = vadd.f32 0.0, %v2091
        %v2093 = vpop.f32.mrb[0].mxu0
        %2094 = vmatprep.mubr.f32.mxu0 0.0
        %2095 = vmatmul.mubr.f32.gmra.mrb[0].mxu0 %v1993
        %v2096 = vpop.f32.mrb[0].mxu0
        %v2097 = vadd.f32 0.0, %v2096
        %v2098 = vpop.f32.mrb[0].mxu0
        %2099 = vmatprep.mubr.f32.mxu0 0.0
        %2100 = vmatmul.mubr.f32.gmra.mrb[0].mxu0 %v1994
        %v2101 = vpop.f32.mrb[0].mxu0
        %v2102 = vadd.f32 0.0, %v2101
        %v2103 = vpop.f32.mrb[0].mxu0
        %2104 = vmatprep.mubr.f32.mxu0 0.0
        %2105 = vmatmul.mubr.f32.gmra.mrb[0].mxu0 %v1995
        %v2106 = vpop.f32.mrb[0].mxu0
        %v2107 = vadd.f32 0.0, %v2106
        %v2108 = vpop.f32.mrb[0].mxu0
        %2109 = vmatprep.mubr.f32.mxu0 0.0
        %2110 = vmatmul.mubr.f32.gmra.mrb[0].mxu0 %v1996
        %v2111 = vpop.f32.mrb[0].mxu0
        %v2112 = vadd.f32 0.0, %v2111
        %v2113 = vpop.f32.mrb[0].mxu0
        %2114 = vmatprep.mubr.f32.mxu0 0.0
        %2115 = vmatmul.mubr.f32.gmra.mrb[0].mxu0 %v1997
        %v2116 = vpop.f32.mrb[0].mxu0
        %v2117 = vadd.f32 0.0, %v2116
        %v2118 = vpop.f32.mrb[0].mxu0
        %2119 = vmatprep.mubr.f32.mxu0 0.0
        %2120 = vmatmul.mubr.f32.gmra.mrb[0].mxu0 %v1998
        %v2121 = vpop.f32.mrb[0].mxu0
        %v2122 = vadd.f32 0.0, %v2121
        %v2123 = vpop.f32.mrb[0].mxu0
        %2124 = vmatprep.mubr.f32.mxu0 0.0
        %2125 = vmatmul.mubr.f32.gmra.mrb[0].mxu0 %v1999
        %v2126 = vpop.f32.mrb[0].mxu0
        %v2127 = vadd.f32 0.0, %v2126
        %v2128 = vpop.f32.mrb[0].mxu0
        %2129 = vmatprep.mubr.f32.mxu0 0.0
        %2130 = vmatmul.mubr.f32.gmra.mrb[0].mxu0 %v2000
        %v2131 = vpop.f32.mrb[0].mxu0
        %v2132 = vadd.f32 0.0, %v2131
        %v2133 = vpop.f32.mrb[0].mxu0
        %2134 = vmatprep.mubr.f32.mxu0 0.0
        %2135 = vmatmul.mubr.f32.gmra.mrb[0].mxu0 %v2001
        %v2136 = vpop.f32.mrb[0].mxu0
        %v2137 = vadd.f32 0.0, %v2136
        %v2138 = vpop.f32.mrb[0].mxu0
        %2139 = vmatprep.mubr.f32.mxu0 0.0
        %2140 = vmatmul.mubr.f32.gmra.mrb[0].mxu0 %v2002
        %v2141 = vpop.f32.mrb[0].mxu0
        %v2142 = vadd.f32 0.0, %v2141
        %v2143 = vpop.f32.mrb[0].mxu0
        %2144 = vmatprep.mubr.f32.mxu0 0.0
        %2145 = vmatmul.mubr.f32.gmra.mrb[0].mxu0 %v2003
        %v2146 = vpop.f32.mrb[0].mxu0
        %v2147 = vadd.f32 0.0, %v2146
        %v2148 = vpop.f32.mrb[0].mxu0
        %2149 = vmatprep.mubr.f32.mxu0 0.0
        %2150 = vmatmul.mubr.f32.gmra.mrb[0].mxu0 %v2004
        %v2151 = vpop.f32.mrb[0].mxu0
        %v2152 = vadd.f32 0.0, %v2151
        %v2153 = vpop.f32.mrb[0].mxu0
        %2154 = vmatprep.mubr.f32.mxu0 0.0
        %2155 = vmatmul.mubr.f32.gmra.mrb[0].mxu0 %v2005
        %v2156 = vpop.f32.mrb[0].mxu0
        %v2157 = vadd.f32 0.0, %v2156
        %v2158 = vpop.f32.mrb[0].mxu0
        %2159 = vmatprep.mubr.f32.mxu0 0.0
        %2160 = vmatmul.mubr.f32.gmra.mrb[0].mxu0 %v2006
        %v2161 = vpop.f32.mrb[0].mxu0
        %v2162 = vadd.f32 0.0, %v2161
        %v2163 = vpop.f32.mrb[0].mxu0
        %2164 = vmatprep.mubr.f32.mxu0 0.0
        %2165 = vmatmul.mubr.f32.gmra.mrb[0].mxu0 %v2007
        %v2166 = vpop.f32.mrb[0].mxu0
        %v2167 = vadd.f32 0.0, %v2166
        %v2168 = vpop.f32.mrb[0].mxu0
        %2169 = vdwg.mxu0
        %v2170 = vadd.f32 %v1976, %v2092
        %v2171 = vadd.f32 %v1977, %v2097
        %v2172 = vadd.f32 %v1978, %v2102
        %v2173 = vadd.f32 %v1979, %v2107
        %v2174 = vadd.f32 %v1980, %v2112
        %v2175 = vadd.f32 %v1981, %v2117
        %v2176 = vadd.f32 %v1982, %v2122
        %v2177 = vadd.f32 %v1983, %v2127
        %v2178 = vadd.f32 %v1984, %v2132
        %v2179 = vadd.f32 %v1985, %v2137
        %v2180 = vadd.f32 %v1986, %v2142
        %v2181 = vadd.f32 %v1987, %v2147
        %v2182 = vadd.f32 %v1988, %v2152
        %v2183 = vadd.f32 %v1989, %v2157
        %v2184 = vadd.f32 %v1990, %v2162
        %v2185 = vadd.f32 %v1991, %v2167
        %v2186 = vld [vmem:[#allocation2 + $0x22] sm:$0xff]
        %v2187 = vld [vmem:[#allocation2 + $0x2a] sm:$0xff]
        %v2188 = vld [vmem:[#allocation2 + $0x32] sm:$0xff]
        %v2189 = vld [vmem:[#allocation2 + $0x3a] sm:$0xff]
        %v2190 = vld [vmem:[#allocation2 + $0x42] sm:$0xff]
        %v2191 = vld [vmem:[#allocation2 + $0x4a] sm:$0xff]
        %v2192 = vld [vmem:[#allocation2 + $0x52] sm:$0xff]
        %v2193 = vld [vmem:[#allocation2 + $0x5a] sm:$0xff]
        %v2194 = vld [vmem:[#allocation2 + $0x62] sm:$0xff]
        %v2195 = vld [vmem:[#allocation2 + $0x6a] sm:$0xff]
        %v2196 = vld [vmem:[#allocation2 + $0x72] sm:$0xff]
        %v2197 = vld [vmem:[#allocation2 + $0x7a] sm:$0xff]
        %v2198 = vld [vmem:[#allocation2 + $0x82] sm:$0xff]
        %v2199 = vld [vmem:[#allocation2 + $0x8a] sm:$0xff]
        %v2200 = vld [vmem:[#allocation2 + $0x92] sm:$0xff]
        %v2201 = vld [vmem:[#allocation2 + $0x9a] sm:$0xff]
        %s2202 = scalar_lea.vmem [#allocation8], 1024
        %v2203 = vld [vmem:[%s2202] sm:$0xff]
        %v2204 = vld [vmem:[%s2202 + $0x8] sm:$0xff]
        %v2205 = vld [vmem:[%s2202 + $0x10] sm:$0xff]
        %v2206 = vld [vmem:[%s2202 + $0x18] sm:$0xff]
        %v2207 = vld [vmem:[%s2202 + $0x20] sm:$0xff]
        %v2208 = vld [vmem:[%s2202 + $0x28] sm:$0xff]
        %v2209 = vld [vmem:[%s2202 + $0x30] sm:$0xff]
        %v2210 = vld [vmem:[%s2202 + $0x38] sm:$0xff]
        %v2211 = vld [vmem:[%s2202 + $0x40] sm:$0xff]
        %v2212 = vld [vmem:[%s2202 + $0x48] sm:$0xff]
        %v2213 = vld [vmem:[%s2202 + $0x50] sm:$0xff]
        %v2214 = vld [vmem:[%s2202 + $0x58] sm:$0xff]
        %v2215 = vld [vmem:[%s2202 + $0x60] sm:$0xff]
        %v2216 = vld [vmem:[%s2202 + $0x68] sm:$0xff]
        %v2217 = vld [vmem:[%s2202 + $0x70] sm:$0xff]
        %v2218 = vld [vmem:[%s2202 + $0x78] sm:$0xff]
        %2219 = vmatprep.subr.mxu0 0.0
        %2220 = vmatpush1.msra.mxu0 %v2203
        %2221 = vmatprep.subr.mxu0 0.0
        %2222 = vmatpush1.msra.mxu0 %v2204
        %2223 = vmatprep.subr.mxu0 0.0
        %2224 = vmatpush1.msra.mxu0 %v2205
        %2225 = vmatprep.subr.mxu0 0.0
        %2226 = vmatpush1.msra.mxu0 %v2206
        %2227 = vmatprep.subr.mxu0 0.0
        %2228 = vmatpush1.msra.mxu0 %v2207
        %2229 = vmatprep.subr.mxu0 0.0
        %2230 = vmatpush1.msra.mxu0 %v2208
        %2231 = vmatprep.subr.mxu0 0.0
        %2232 = vmatpush1.msra.mxu0 %v2209
        %2233 = vmatprep.subr.mxu0 0.0
        %2234 = vmatpush1.msra.mxu0 %v2210
        %2235 = vmatprep.subr.mxu0 0.0
        %2236 = vmatpush1.msra.mxu0 %v2211
        %2237 = vmatprep.subr.mxu0 0.0
        %2238 = vmatpush1.msra.mxu0 %v2212
        %2239 = vmatprep.subr.mxu0 0.0
        %2240 = vmatpush1.msra.mxu0 %v2213
        %2241 = vmatprep.subr.mxu0 0.0
        %2242 = vmatpush1.msra.mxu0 %v2214
        %2243 = vmatprep.subr.mxu0 0.0
        %2244 = vmatpush1.msra.mxu0 %v2215
        %2245 = vmatprep.subr.mxu0 0.0
        %2246 = vmatpush1.msra.mxu0 %v2216
        %2247 = vmatprep.subr.mxu0 0.0
        %2248 = vmatpush1.msra.mxu0 %v2217
        %2249 = vmatprep.subr.mxu0 0.0
        %2250 = vmatpush1.msra.mxu0 %v2218
        %2251 = vmatprep.subr.mxu0 0.0
        %2252 = vmatpush1.msra.mxu0 0.0
        %2253 = vmatprep.subr.mxu0 0.0
        %2254 = vmatpush1.msra.mxu0 0.0
        %2255 = vmatprep.subr.mxu0 0.0
        %2256 = vmatpush1.msra.mxu0 0.0
        %2257 = vmatprep.subr.mxu0 0.0
        %2258 = vmatpush1.msra.mxu0 0.0
        %2259 = vmatprep.subr.mxu0 0.0
        %2260 = vmatpush1.msra.mxu0 0.0
        %2261 = vmatprep.subr.mxu0 0.0
        %2262 = vmatpush1.msra.mxu0 0.0
        %2263 = vmatprep.subr.mxu0 0.0
        %2264 = vmatpush1.msra.mxu0 0.0
        %2265 = vmatprep.subr.mxu0 0.0
        %2266 = vmatpush1.msra.mxu0 0.0
        %2267 = vmatprep.subr.mxu0 0.0
        %2268 = vmatpush1.msra.mxu0 0.0
        %2269 = vmatprep.subr.mxu0 0.0
        %2270 = vmatpush1.msra.mxu0 0.0
        %2271 = vmatprep.subr.mxu0 0.0
        %2272 = vmatpush1.msra.mxu0 0.0
        %2273 = vmatprep.subr.mxu0 0.0
        %2274 = vmatpush1.msra.mxu0 0.0
        %2275 = vmatprep.subr.mxu0 0.0
        %2276 = vmatpush1.msra.mxu0 0.0
        %2277 = vmatprep.subr.mxu0 0.0
        %2278 = vmatpush1.msra.mxu0 0.0
        %2279 = vmatprep.subr.mxu0 0.0
        %2280 = vmatpush1.msra.mxu0 0.0
        %2281 = vmatprep.subr.mxu0 0.0
        %2282 = vmatpush1.msra.mxu0 0.0
        %2283 = vmatprep.mubr.f32.mxu0 0.0
        %2284 = vmatmul.mubr.f32.gmra.mrb[0].mxu0 %v2186
        %v2285 = vpop.f32.mrb[0].mxu0
        %v2286 = vadd.f32 0.0, %v2285
        %v2287 = vpop.f32.mrb[0].mxu0
        %2288 = vmatprep.mubr.f32.mxu0 0.0
        %2289 = vmatmul.mubr.f32.gmra.mrb[0].mxu0 %v2187
        %v2290 = vpop.f32.mrb[0].mxu0
        %v2291 = vadd.f32 0.0, %v2290
        %v2292 = vpop.f32.mrb[0].mxu0
        %2293 = vmatprep.mubr.f32.mxu0 0.0
        %2294 = vmatmul.mubr.f32.gmra.mrb[0].mxu0 %v2188
        %v2295 = vpop.f32.mrb[0].mxu0
        %v2296 = vadd.f32 0.0, %v2295
        %v2297 = vpop.f32.mrb[0].mxu0
        %2298 = vmatprep.mubr.f32.mxu0 0.0
        %2299 = vmatmul.mubr.f32.gmra.mrb[0].mxu0 %v2189
        %v2300 = vpop.f32.mrb[0].mxu0
        %v2301 = vadd.f32 0.0, %v2300
        %v2302 = vpop.f32.mrb[0].mxu0
        %2303 = vmatprep.mubr.f32.mxu0 0.0
        %2304 = vmatmul.mubr.f32.gmra.mrb[0].mxu0 %v2190
        %v2305 = vpop.f32.mrb[0].mxu0
        %v2306 = vadd.f32 0.0, %v2305
        %v2307 = vpop.f32.mrb[0].mxu0
        %2308 = vmatprep.mubr.f32.mxu0 0.0
        %2309 = vmatmul.mubr.f32.gmra.mrb[0].mxu0 %v2191
        %v2310 = vpop.f32.mrb[0].mxu0
        %v2311 = vadd.f32 0.0, %v2310
        %v2312 = vpop.f32.mrb[0].mxu0
        %2313 = vmatprep.mubr.f32.mxu0 0.0
        %2314 = vmatmul.mubr.f32.gmra.mrb[0].mxu0 %v2192
        %v2315 = vpop.f32.mrb[0].mxu0
        %v2316 = vadd.f32 0.0, %v2315
        %v2317 = vpop.f32.mrb[0].mxu0
        %2318 = vmatprep.mubr.f32.mxu0 0.0
        %2319 = vmatmul.mubr.f32.gmra.mrb[0].mxu0 %v2193
        %v2320 = vpop.f32.mrb[0].mxu0
        %v2321 = vadd.f32 0.0, %v2320
        %v2322 = vpop.f32.mrb[0].mxu0
        %2323 = vmatprep.mubr.f32.mxu0 0.0
        %2324 = vmatmul.mubr.f32.gmra.mrb[0].mxu0 %v2194
        %v2325 = vpop.f32.mrb[0].mxu0
        %v2326 = vadd.f32 0.0, %v2325
        %v2327 = vpop.f32.mrb[0].mxu0
        %2328 = vmatprep.mubr.f32.mxu0 0.0
        %2329 = vmatmul.mubr.f32.gmra.mrb[0].mxu0 %v2195
        %v2330 = vpop.f32.mrb[0].mxu0
        %v2331 = vadd.f32 0.0, %v2330
        %v2332 = vpop.f32.mrb[0].mxu0
        %2333 = vmatprep.mubr.f32.mxu0 0.0
        %2334 = vmatmul.mubr.f32.gmra.mrb[0].mxu0 %v2196
        %v2335 = vpop.f32.mrb[0].mxu0
        %v2336 = vadd.f32 0.0, %v2335
        %v2337 = vpop.f32.mrb[0].mxu0
        %2338 = vmatprep.mubr.f32.mxu0 0.0
        %2339 = vmatmul.mubr.f32.gmra.mrb[0].mxu0 %v2197
        %v2340 = vpop.f32.mrb[0].mxu0
        %v2341 = vadd.f32 0.0, %v2340
        %v2342 = vpop.f32.mrb[0].mxu0
        %2343 = vmatprep.mubr.f32.mxu0 0.0
        %2344 = vmatmul.mubr.f32.gmra.mrb[0].mxu0 %v2198
        %v2345 = vpop.f32.mrb[0].mxu0
        %v2346 = vadd.f32 0.0, %v2345
        %v2347 = vpop.f32.mrb[0].mxu0
        %2348 = vmatprep.mubr.f32.mxu0 0.0
        %2349 = vmatmul.mubr.f32.gmra.mrb[0].mxu0 %v2199
        %v2350 = vpop.f32.mrb[0].mxu0
        %v2351 = vadd.f32 0.0, %v2350
        %v2352 = vpop.f32.mrb[0].mxu0
        %2353 = vmatprep.mubr.f32.mxu0 0.0
        %2354 = vmatmul.mubr.f32.gmra.mrb[0].mxu0 %v2200
        %v2355 = vpop.f32.mrb[0].mxu0
        %v2356 = vadd.f32 0.0, %v2355
        %v2357 = vpop.f32.mrb[0].mxu0
        %2358 = vmatprep.mubr.f32.mxu0 0.0
        %2359 = vmatmul.mubr.f32.gmra.mrb[0].mxu0 %v2201
        %v2360 = vpop.f32.mrb[0].mxu0
        %v2361 = vadd.f32 0.0, %v2360
        %v2362 = vpop.f32.mrb[0].mxu0
        %2363 = vdwg.mxu0
        %v2364 = vadd.f32 %v2170, %v2286
        %v2365 = vadd.f32 %v2171, %v2291
        %v2366 = vadd.f32 %v2172, %v2296
        %v2367 = vadd.f32 %v2173, %v2301
        %v2368 = vadd.f32 %v2174, %v2306
        %v2369 = vadd.f32 %v2175, %v2311
        %v2370 = vadd.f32 %v2176, %v2316
        %v2371 = vadd.f32 %v2177, %v2321
        %v2372 = vadd.f32 %v2178, %v2326
        %v2373 = vadd.f32 %v2179, %v2331
        %v2374 = vadd.f32 %v2180, %v2336
        %v2375 = vadd.f32 %v2181, %v2341
        %v2376 = vadd.f32 %v2182, %v2346
        %v2377 = vadd.f32 %v2183, %v2351
        %v2378 = vadd.f32 %v2184, %v2356
        %v2379 = vadd.f32 %v2185, %v2361
        %v2381 = vlaneseq
        %v2382 = vshrl.u32 %v2381, 7
        %v2383 = vsub.s32 0, %v2382
        %v2384 = vrot.slane %v274, %v2383
        %v2386 = vadd.f32 %v2364, %v2384
        %v2387 = vadd.f32 %v2365, %v2384
        %v2388 = vadd.f32 %v2366, %v2384
        %v2389 = vadd.f32 %v2367, %v2384
        %v2390 = vadd.f32 %v2368, %v2384
        %v2391 = vadd.f32 %v2369, %v2384
        %v2392 = vadd.f32 %v2370, %v2384
        %v2393 = vadd.f32 %v2371, %v2384
        %v2394 = vadd.f32 %v2372, %v2384
        %v2395 = vadd.f32 %v2373, %v2384
        %v2396 = vadd.f32 %v2374, %v2384
        %v2397 = vadd.f32 %v2375, %v2384
        %v2398 = vadd.f32 %v2376, %v2384
        %v2399 = vadd.f32 %v2377, %v2384
        %v2400 = vadd.f32 %v2378, %v2384
        %v2401 = vadd.f32 %v2379, %v2384
        %2402 = vst [vmem:[%s271] sm:$0xff] %v2386
        %2403 = vst [vmem:[%s271 + $0x8] sm:$0xff] %v2387
        %2404 = vst [vmem:[%s271 + $0x10] sm:$0xff] %v2388
        %2405 = vst [vmem:[%s271 + $0x18] sm:$0xff] %v2389
        %2406 = vst [vmem:[%s271 + $0x20] sm:$0xff] %v2390
        %2407 = vst [vmem:[%s271 + $0x28] sm:$0xff] %v2391
        %2408 = vst [vmem:[%s271 + $0x30] sm:$0xff] %v2392
        %2409 = vst [vmem:[%s271 + $0x38] sm:$0xff] %v2393
        %2410 = vst [vmem:[%s271 + $0x40] sm:$0xff] %v2394
        %2411 = vst [vmem:[%s271 + $0x48] sm:$0xff] %v2395
        %2412 = vst [vmem:[%s271 + $0x50] sm:$0xff] %v2396
        %2413 = vst [vmem:[%s271 + $0x58] sm:$0xff] %v2397
        %2414 = vst [vmem:[%s271 + $0x60] sm:$0xff] %v2398
        %2415 = vst [vmem:[%s271 + $0x68] sm:$0xff] %v2399
        %2416 = vst [vmem:[%s271 + $0x70] sm:$0xff] %v2400
        %2417 = vst [vmem:[%s271 + $0x78] sm:$0xff] %v2401
        %v2418 = vld [vmem:[#allocation2 + $0x80] sm:$0xff]
        %v2419 = vld [vmem:[#allocation2 + $0x88] sm:$0xff]
        %v2420 = vld [vmem:[#allocation2 + $0x90] sm:$0xff]
        %v2421 = vld [vmem:[#allocation2 + $0x98] sm:$0xff]
        %v2422 = vld [vmem:[#allocation2 + $0xa0] sm:$0xff]
        %v2423 = vld [vmem:[#allocation2 + $0xa8] sm:$0xff]
        %v2424 = vld [vmem:[#allocation2 + $0xb0] sm:$0xff]
        %v2425 = vld [vmem:[#allocation2 + $0xb8] sm:$0xff]
        %v2426 = vld [vmem:[#allocation8] sm:$0xff]
        %v2427 = vld [vmem:[#allocation8 + $0x8] sm:$0xff]
        %v2428 = vld [vmem:[#allocation8 + $0x10] sm:$0xff]
        %v2429 = vld [vmem:[#allocation8 + $0x18] sm:$0xff]
        %v2430 = vld [vmem:[#allocation8 + $0x20] sm:$0xff]
        %v2431 = vld [vmem:[#allocation8 + $0x28] sm:$0xff]
        %v2432 = vld [vmem:[#allocation8 + $0x30] sm:$0xff]
        %v2433 = vld [vmem:[#allocation8 + $0x38] sm:$0xff]
        %v2434 = vld [vmem:[#allocation8 + $0x40] sm:$0xff]
        %v2435 = vld [vmem:[#allocation8 + $0x48] sm:$0xff]
        %v2436 = vld [vmem:[#allocation8 + $0x50] sm:$0xff]
        %v2437 = vld [vmem:[#allocation8 + $0x58] sm:$0xff]
        %v2438 = vld [vmem:[#allocation8 + $0x60] sm:$0xff]
        %v2439 = vld [vmem:[#allocation8 + $0x68] sm:$0xff]
        %v2440 = vld [vmem:[#allocation8 + $0x70] sm:$0xff]
        %v2441 = vld [vmem:[#allocation8 + $0x78] sm:$0xff]
        %v2442 = vld [vmem:[#allocation2 + $0x81] sm:$0xff]
        %v2443 = vld [vmem:[#allocation2 + $0x89] sm:$0xff]
        %v2444 = vld [vmem:[#allocation2 + $0x91] sm:$0xff]
        %v2445 = vld [vmem:[#allocation2 + $0x99] sm:$0xff]
        %v2446 = vld [vmem:[#allocation2 + $0xa1] sm:$0xff]
        %v2447 = vld [vmem:[#allocation2 + $0xa9] sm:$0xff]
        %v2448 = vld [vmem:[#allocation2 + $0xb1] sm:$0xff]
        %v2449 = vld [vmem:[#allocation2 + $0xb9] sm:$0xff]
        %v2450 = vld [vmem:[%s715] sm:$0xff]
        %v2451 = vld [vmem:[%s715 + $0x8] sm:$0xff]
        %v2452 = vld [vmem:[%s715 + $0x10] sm:$0xff]
        %v2453 = vld [vmem:[%s715 + $0x18] sm:$0xff]
        %v2454 = vld [vmem:[%s715 + $0x20] sm:$0xff]
        %v2455 = vld [vmem:[%s715 + $0x28] sm:$0xff]
        %v2456 = vld [vmem:[%s715 + $0x30] sm:$0xff]
        %v2457 = vld [vmem:[%s715 + $0x38] sm:$0xff]
        %v2458 = vld [vmem:[%s715 + $0x40] sm:$0xff]
        %v2459 = vld [vmem:[%s715 + $0x48] sm:$0xff]
        %v2460 = vld [vmem:[%s715 + $0x50] sm:$0xff]
        %v2461 = vld [vmem:[%s715 + $0x58] sm:$0xff]
        %v2462 = vld [vmem:[%s715 + $0x60] sm:$0xff]
        %v2463 = vld [vmem:[%s715 + $0x68] sm:$0xff]
        %v2464 = vld [vmem:[%s715 + $0x70] sm:$0xff]
        %v2465 = vld [vmem:[%s715 + $0x78] sm:$0xff]
        %2466 = vmatprep.subr.mxu0 0.0
        %2467 = vmatpush1.msra.mxu0 %v2450
        %2468 = vmatprep.subr.mxu0 0.0
        %2469 = vmatpush1.msra.mxu0 %v2451
        %2470 = vmatprep.subr.mxu0 0.0
        %2471 = vmatpush1.msra.mxu0 %v2452
        %2472 = vmatprep.subr.mxu0 0.0
        %2473 = vmatpush1.msra.mxu0 %v2453
        %2474 = vmatprep.subr.mxu0 0.0
        %2475 = vmatpush1.msra.mxu0 %v2454
        %2476 = vmatprep.subr.mxu0 0.0
        %2477 = vmatpush1.msra.mxu0 %v2455
        %2478 = vmatprep.subr.mxu0 0.0
        %2479 = vmatpush1.msra.mxu0 %v2456
        %2480 = vmatprep.subr.mxu0 0.0
        %2481 = vmatpush1.msra.mxu0 %v2457
        %2482 = vmatprep.subr.mxu0 0.0
        %2483 = vmatpush1.msra.mxu0 %v2458
        %2484 = vmatprep.subr.mxu0 0.0
        %2485 = vmatpush1.msra.mxu0 %v2459
        %2486 = vmatprep.subr.mxu0 0.0
        %2487 = vmatpush1.msra.mxu0 %v2460
        %2488 = vmatprep.subr.mxu0 0.0
        %2489 = vmatpush1.msra.mxu0 %v2461
        %2490 = vmatprep.subr.mxu0 0.0
        %2491 = vmatpush1.msra.mxu0 %v2462
        %2492 = vmatprep.subr.mxu0 0.0
        %2493 = vmatpush1.msra.mxu0 %v2463
        %2494 = vmatprep.subr.mxu0 0.0
        %2495 = vmatpush1.msra.mxu0 %v2464
        %2496 = vmatprep.subr.mxu0 0.0
        %2497 = vmatpush1.msra.mxu0 %v2465
        %2498 = vmatprep.subr.mxu0 0.0
        %2499 = vmatpush1.msra.mxu0 0.0
        %2500 = vmatprep.subr.mxu0 0.0
        %2501 = vmatpush1.msra.mxu0 0.0
        %2502 = vmatprep.subr.mxu0 0.0
        %2503 = vmatpush1.msra.mxu0 0.0
        %2504 = vmatprep.subr.mxu0 0.0
        %2505 = vmatpush1.msra.mxu0 0.0
        %2506 = vmatprep.subr.mxu0 0.0
        %2507 = vmatpush1.msra.mxu0 0.0
        %2508 = vmatprep.subr.mxu0 0.0
        %2509 = vmatpush1.msra.mxu0 0.0
        %2510 = vmatprep.subr.mxu0 0.0
        %2511 = vmatpush1.msra.mxu0 0.0
        %2512 = vmatprep.subr.mxu0 0.0
        %2513 = vmatpush1.msra.mxu0 0.0
        %2514 = vmatprep.subr.mxu0 0.0
        %2515 = vmatpush1.msra.mxu0 0.0
        %2516 = vmatprep.subr.mxu0 0.0
        %2517 = vmatpush1.msra.mxu0 0.0
        %2518 = vmatprep.subr.mxu0 0.0
        %2519 = vmatpush1.msra.mxu0 0.0
        %2520 = vmatprep.subr.mxu0 0.0
        %2521 = vmatpush1.msra.mxu0 0.0
        %2522 = vmatprep.subr.mxu0 0.0
        %2523 = vmatpush1.msra.mxu0 0.0
        %2524 = vmatprep.subr.mxu0 0.0
        %2525 = vmatpush1.msra.mxu0 0.0
        %2526 = vmatprep.subr.mxu0 0.0
        %2527 = vmatpush1.msra.mxu0 0.0
        %2528 = vmatprep.subr.mxu0 0.0
        %2529 = vmatpush1.msra.mxu0 0.0
        %2530 = vmatprep.mubr.f32.mxu0 0.0
        %2531 = vmatmul.mubr.f32.gmra.mrb[0].mxu0 %v2442
        %v2532 = vpop.f32.mrb[0].mxu0
        %v2533 = vadd.f32 0.0, %v2532
        %v2534 = vpop.f32.mrb[0].mxu0
        %2535 = vmatprep.mubr.f32.mxu0 0.0
        %2536 = vmatmul.mubr.f32.gmra.mrb[0].mxu0 %v2443
        %v2537 = vpop.f32.mrb[0].mxu0
        %v2538 = vadd.f32 0.0, %v2537
        %v2539 = vpop.f32.mrb[0].mxu0
        %2540 = vmatprep.mubr.f32.mxu0 0.0
        %2541 = vmatmul.mubr.f32.gmra.mrb[0].mxu0 %v2444
        %v2542 = vpop.f32.mrb[0].mxu0
        %v2543 = vadd.f32 0.0, %v2542
        %v2544 = vpop.f32.mrb[0].mxu0
        %2545 = vmatprep.mubr.f32.mxu0 0.0
        %2546 = vmatmul.mubr.f32.gmra.mrb[0].mxu0 %v2445
        %v2547 = vpop.f32.mrb[0].mxu0
        %v2548 = vadd.f32 0.0, %v2547
        %v2549 = vpop.f32.mrb[0].mxu0
        %2550 = vmatprep.mubr.f32.mxu0 0.0
        %2551 = vmatmul.mubr.f32.gmra.mrb[0].mxu0 %v2446
        %v2552 = vpop.f32.mrb[0].mxu0
        %v2553 = vadd.f32 0.0, %v2552
        %v2554 = vpop.f32.mrb[0].mxu0
        %2555 = vmatprep.mubr.f32.mxu0 0.0
        %2556 = vmatmul.mubr.f32.gmra.mrb[0].mxu0 %v2447
        %v2557 = vpop.f32.mrb[0].mxu0
        %v2558 = vadd.f32 0.0, %v2557
        %v2559 = vpop.f32.mrb[0].mxu0
        %2560 = vmatprep.mubr.f32.mxu0 0.0
        %2561 = vmatmul.mubr.f32.gmra.mrb[0].mxu0 %v2448
        %v2562 = vpop.f32.mrb[0].mxu0
        %v2563 = vadd.f32 0.0, %v2562
        %v2564 = vpop.f32.mrb[0].mxu0
        %2565 = vmatprep.mubr.f32.mxu0 0.0
        %2566 = vmatmul.mubr.f32.gmra.mrb[0].mxu0 %v2449
        %v2567 = vpop.f32.mrb[0].mxu0
        %v2568 = vadd.f32 0.0, %v2567
        %v2569 = vpop.f32.mrb[0].mxu0
        %2570 = vdwg.mxu0
        %2571 = vmatprep.subr.mxu0 0.0
        %2572 = vmatpush1.msra.mxu0 %v2426
        %2573 = vmatprep.subr.mxu0 0.0
        %2574 = vmatpush1.msra.mxu0 %v2427
        %2575 = vmatprep.subr.mxu0 0.0
        %2576 = vmatpush1.msra.mxu0 %v2428
        %2577 = vmatprep.subr.mxu0 0.0
        %2578 = vmatpush1.msra.mxu0 %v2429
        %2579 = vmatprep.subr.mxu0 0.0
        %2580 = vmatpush1.msra.mxu0 %v2430
        %2581 = vmatprep.subr.mxu0 0.0
        %2582 = vmatpush1.msra.mxu0 %v2431
        %2583 = vmatprep.subr.mxu0 0.0
        %2584 = vmatpush1.msra.mxu0 %v2432
        %2585 = vmatprep.subr.mxu0 0.0
        %2586 = vmatpush1.msra.mxu0 %v2433
        %2587 = vmatprep.subr.mxu0 0.0
        %2588 = vmatpush1.msra.mxu0 %v2434
        %2589 = vmatprep.subr.mxu0 0.0
        %2590 = vmatpush1.msra.mxu0 %v2435
        %2591 = vmatprep.subr.mxu0 0.0
        %2592 = vmatpush1.msra.mxu0 %v2436
        %2593 = vmatprep.subr.mxu0 0.0
        %2594 = vmatpush1.msra.mxu0 %v2437
        %2595 = vmatprep.subr.mxu0 0.0
        %2596 = vmatpush1.msra.mxu0 %v2438
        %2597 = vmatprep.subr.mxu0 0.0
        %2598 = vmatpush1.msra.mxu0 %v2439
        %2599 = vmatprep.subr.mxu0 0.0
        %2600 = vmatpush1.msra.mxu0 %v2440
        %2601 = vmatprep.subr.mxu0 0.0
        %2602 = vmatpush1.msra.mxu0 %v2441
        %2603 = vmatprep.subr.mxu0 0.0
        %2604 = vmatpush1.msra.mxu0 0.0
        %2605 = vmatprep.subr.mxu0 0.0
        %2606 = vmatpush1.msra.mxu0 0.0
        %2607 = vmatprep.subr.mxu0 0.0
        %2608 = vmatpush1.msra.mxu0 0.0
        %2609 = vmatprep.subr.mxu0 0.0
        %2610 = vmatpush1.msra.mxu0 0.0
        %2611 = vmatprep.subr.mxu0 0.0
        %2612 = vmatpush1.msra.mxu0 0.0
        %2613 = vmatprep.subr.mxu0 0.0
        %2614 = vmatpush1.msra.mxu0 0.0
        %2615 = vmatprep.subr.mxu0 0.0
        %2616 = vmatpush1.msra.mxu0 0.0
        %2617 = vmatprep.subr.mxu0 0.0
        %2618 = vmatpush1.msra.mxu0 0.0
        %2619 = vmatprep.subr.mxu0 0.0
        %2620 = vmatpush1.msra.mxu0 0.0
        %2621 = vmatprep.subr.mxu0 0.0
        %2622 = vmatpush1.msra.mxu0 0.0
        %2623 = vmatprep.subr.mxu0 0.0
        %2624 = vmatpush1.msra.mxu0 0.0
        %2625 = vmatprep.subr.mxu0 0.0
        %2626 = vmatpush1.msra.mxu0 0.0
        %2627 = vmatprep.subr.mxu0 0.0
        %2628 = vmatpush1.msra.mxu0 0.0
        %2629 = vmatprep.subr.mxu0 0.0
        %2630 = vmatpush1.msra.mxu0 0.0
        %2631 = vmatprep.subr.mxu0 0.0
        %2632 = vmatpush1.msra.mxu0 0.0
        %2633 = vmatprep.subr.mxu0 0.0
        %2634 = vmatpush1.msra.mxu0 0.0
        %2635 = vmatprep.mubr.f32.mxu0 0.0
        %2636 = vmatmul.mubr.f32.gmra.mrb[0].mxu0 %v2418
        %v2637 = vpop.f32.mrb[0].mxu0
        %v2638 = vadd.f32 %v2533, %v2637
        %v2639 = vpop.f32.mrb[0].mxu0
        %2640 = vmatprep.mubr.f32.mxu0 0.0
        %2641 = vmatmul.mubr.f32.gmra.mrb[0].mxu0 %v2419
        %v2642 = vpop.f32.mrb[0].mxu0
        %v2643 = vadd.f32 %v2538, %v2642
        %v2644 = vpop.f32.mrb[0].mxu0
        %2645 = vmatprep.mubr.f32.mxu0 0.0
        %2646 = vmatmul.mubr.f32.gmra.mrb[0].mxu0 %v2420
        %v2647 = vpop.f32.mrb[0].mxu0
        %v2648 = vadd.f32 %v2543, %v2647
        %v2649 = vpop.f32.mrb[0].mxu0
        %2650 = vmatprep.mubr.f32.mxu0 0.0
        %2651 = vmatmul.mubr.f32.gmra.mrb[0].mxu0 %v2421
        %v2652 = vpop.f32.mrb[0].mxu0
        %v2653 = vadd.f32 %v2548, %v2652
        %v2654 = vpop.f32.mrb[0].mxu0
        %2655 = vmatprep.mubr.f32.mxu0 0.0
        %2656 = vmatmul.mubr.f32.gmra.mrb[0].mxu0 %v2422
        %v2657 = vpop.f32.mrb[0].mxu0
        %v2658 = vadd.f32 %v2553, %v2657
        %v2659 = vpop.f32.mrb[0].mxu0
        %2660 = vmatprep.mubr.f32.mxu0 0.0
        %2661 = vmatmul.mubr.f32.gmra.mrb[0].mxu0 %v2423
        %v2662 = vpop.f32.mrb[0].mxu0
        %v2663 = vadd.f32 %v2558, %v2662
        %v2664 = vpop.f32.mrb[0].mxu0
        %2665 = vmatprep.mubr.f32.mxu0 0.0
        %2666 = vmatmul.mubr.f32.gmra.mrb[0].mxu0 %v2424
        %v2667 = vpop.f32.mrb[0].mxu0
        %v2668 = vadd.f32 %v2563, %v2667
        %v2669 = vpop.f32.mrb[0].mxu0
        %2670 = vmatprep.mubr.f32.mxu0 0.0
        %2671 = vmatmul.mubr.f32.gmra.mrb[0].mxu0 %v2425
        %v2672 = vpop.f32.mrb[0].mxu0
        %v2673 = vadd.f32 %v2568, %v2672
        %v2674 = vpop.f32.mrb[0].mxu0
        %2675 = vdwg.mxu0
        %v2676 = vld [vmem:[#allocation2 + $0x82] sm:$0xff]
        %v2677 = vld [vmem:[#allocation2 + $0x8a] sm:$0xff]
        %v2678 = vld [vmem:[#allocation2 + $0x92] sm:$0xff]
        %v2679 = vld [vmem:[#allocation2 + $0x9a] sm:$0xff]
        %v2680 = vld [vmem:[#allocation2 + $0xa2] sm:$0xff]
        %v2681 = vld [vmem:[#allocation2 + $0xaa] sm:$0xff]
        %v2682 = vld [vmem:[#allocation2 + $0xb2] sm:$0xff]
        %v2683 = vld [vmem:[#allocation2 + $0xba] sm:$0xff]
        %v2684 = vld [vmem:[%s1038] sm:$0xff]
        %v2685 = vld [vmem:[%s1038 + $0x8] sm:$0xff]
        %v2686 = vld [vmem:[%s1038 + $0x10] sm:$0xff]
        %v2687 = vld [vmem:[%s1038 + $0x18] sm:$0xff]
        %v2688 = vld [vmem:[%s1038 + $0x20] sm:$0xff]
        %v2689 = vld [vmem:[%s1038 + $0x28] sm:$0xff]
        %v2690 = vld [vmem:[%s1038 + $0x30] sm:$0xff]
        %v2691 = vld [vmem:[%s1038 + $0x38] sm:$0xff]
        %v2692 = vld [vmem:[%s1038 + $0x40] sm:$0xff]
        %v2693 = vld [vmem:[%s1038 + $0x48] sm:$0xff]
        %v2694 = vld [vmem:[%s1038 + $0x50] sm:$0xff]
        %v2695 = vld [vmem:[%s1038 + $0x58] sm:$0xff]
        %v2696 = vld [vmem:[%s1038 + $0x60] sm:$0xff]
        %v2697 = vld [vmem:[%s1038 + $0x68] sm:$0xff]
        %v2698 = vld [vmem:[%s1038 + $0x70] sm:$0xff]
        %v2699 = vld [vmem:[%s1038 + $0x78] sm:$0xff]
        %2700 = vmatprep.subr.mxu0 0.0
        %2701 = vmatpush1.msra.mxu0 %v2684
        %2702 = vmatprep.subr.mxu0 0.0
        %2703 = vmatpush1.msra.mxu0 %v2685
        %2704 = vmatprep.subr.mxu0 0.0
        %2705 = vmatpush1.msra.mxu0 %v2686
        %2706 = vmatprep.subr.mxu0 0.0
        %2707 = vmatpush1.msra.mxu0 %v2687
        %2708 = vmatprep.subr.mxu0 0.0
        %2709 = vmatpush1.msra.mxu0 %v2688
        %2710 = vmatprep.subr.mxu0 0.0
        %2711 = vmatpush1.msra.mxu0 %v2689
        %2712 = vmatprep.subr.mxu0 0.0
        %2713 = vmatpush1.msra.mxu0 %v2690
        %2714 = vmatprep.subr.mxu0 0.0
        %2715 = vmatpush1.msra.mxu0 %v2691
        %2716 = vmatprep.subr.mxu0 0.0
        %2717 = vmatpush1.msra.mxu0 %v2692
        %2718 = vmatprep.subr.mxu0 0.0
        %2719 = vmatpush1.msra.mxu0 %v2693
        %2720 = vmatprep.subr.mxu0 0.0
        %2721 = vmatpush1.msra.mxu0 %v2694
        %2722 = vmatprep.subr.mxu0 0.0
        %2723 = vmatpush1.msra.mxu0 %v2695
        %2724 = vmatprep.subr.mxu0 0.0
        %2725 = vmatpush1.msra.mxu0 %v2696
        %2726 = vmatprep.subr.mxu0 0.0
        %2727 = vmatpush1.msra.mxu0 %v2697
        %2728 = vmatprep.subr.mxu0 0.0
        %2729 = vmatpush1.msra.mxu0 %v2698
        %2730 = vmatprep.subr.mxu0 0.0
        %2731 = vmatpush1.msra.mxu0 %v2699
        %2732 = vmatprep.subr.mxu0 0.0
        %2733 = vmatpush1.msra.mxu0 0.0
        %2734 = vmatprep.subr.mxu0 0.0
        %2735 = vmatpush1.msra.mxu0 0.0
        %2736 = vmatprep.subr.mxu0 0.0
        %2737 = vmatpush1.msra.mxu0 0.0
        %2738 = vmatprep.subr.mxu0 0.0
        %2739 = vmatpush1.msra.mxu0 0.0
        %2740 = vmatprep.subr.mxu0 0.0
        %2741 = vmatpush1.msra.mxu0 0.0
        %2742 = vmatprep.subr.mxu0 0.0
        %2743 = vmatpush1.msra.mxu0 0.0
        %2744 = vmatprep.subr.mxu0 0.0
        %2745 = vmatpush1.msra.mxu0 0.0
        %2746 = vmatprep.subr.mxu0 0.0
        %2747 = vmatpush1.msra.mxu0 0.0
        %2748 = vmatprep.subr.mxu0 0.0
        %2749 = vmatpush1.msra.mxu0 0.0
        %2750 = vmatprep.subr.mxu0 0.0
        %2751 = vmatpush1.msra.mxu0 0.0
        %2752 = vmatprep.subr.mxu0 0.0
        %2753 = vmatpush1.msra.mxu0 0.0
        %2754 = vmatprep.subr.mxu0 0.0
        %2755 = vmatpush1.msra.mxu0 0.0
        %2756 = vmatprep.subr.mxu0 0.0
        %2757 = vmatpush1.msra.mxu0 0.0
        %2758 = vmatprep.subr.mxu0 0.0
        %2759 = vmatpush1.msra.mxu0 0.0
        %2760 = vmatprep.subr.mxu0 0.0
        %2761 = vmatpush1.msra.mxu0 0.0
        %2762 = vmatprep.subr.mxu0 0.0
        %2763 = vmatpush1.msra.mxu0 0.0
        %2764 = vmatprep.mubr.f32.mxu0 0.0
        %2765 = vmatmul.mubr.f32.gmra.mrb[0].mxu0 %v2676
        %v2766 = vpop.f32.mrb[0].mxu0
        %v2767 = vadd.f32 0.0, %v2766
        %v2768 = vpop.f32.mrb[0].mxu0
        %2769 = vmatprep.mubr.f32.mxu0 0.0
        %2770 = vmatmul.mubr.f32.gmra.mrb[0].mxu0 %v2677
        %v2771 = vpop.f32.mrb[0].mxu0
        %v2772 = vadd.f32 0.0, %v2771
        %v2773 = vpop.f32.mrb[0].mxu0
        %2774 = vmatprep.mubr.f32.mxu0 0.0
        %2775 = vmatmul.mubr.f32.gmra.mrb[0].mxu0 %v2678
        %v2776 = vpop.f32.mrb[0].mxu0
        %v2777 = vadd.f32 0.0, %v2776
        %v2778 = vpop.f32.mrb[0].mxu0
        %2779 = vmatprep.mubr.f32.mxu0 0.0
        %2780 = vmatmul.mubr.f32.gmra.mrb[0].mxu0 %v2679
        %v2781 = vpop.f32.mrb[0].mxu0
        %v2782 = vadd.f32 0.0, %v2781
        %v2783 = vpop.f32.mrb[0].mxu0
        %2784 = vmatprep.mubr.f32.mxu0 0.0
        %2785 = vmatmul.mubr.f32.gmra.mrb[0].mxu0 %v2680
        %v2786 = vpop.f32.mrb[0].mxu0
        %v2787 = vadd.f32 0.0, %v2786
        %v2788 = vpop.f32.mrb[0].mxu0
        %2789 = vmatprep.mubr.f32.mxu0 0.0
        %2790 = vmatmul.mubr.f32.gmra.mrb[0].mxu0 %v2681
        %v2791 = vpop.f32.mrb[0].mxu0
        %v2792 = vadd.f32 0.0, %v2791
        %v2793 = vpop.f32.mrb[0].mxu0
        %2794 = vmatprep.mubr.f32.mxu0 0.0
        %2795 = vmatmul.mubr.f32.gmra.mrb[0].mxu0 %v2682
        %v2796 = vpop.f32.mrb[0].mxu0
        %v2797 = vadd.f32 0.0, %v2796
        %v2798 = vpop.f32.mrb[0].mxu0
        %2799 = vmatprep.mubr.f32.mxu0 0.0
        %2800 = vmatmul.mubr.f32.gmra.mrb[0].mxu0 %v2683
        %v2801 = vpop.f32.mrb[0].mxu0
        %v2802 = vadd.f32 0.0, %v2801
        %v2803 = vpop.f32.mrb[0].mxu0
        %2804 = vdwg.mxu0
        %v2805 = vadd.f32 %v2638, %v2767
        %v2806 = vadd.f32 %v2643, %v2772
        %v2807 = vadd.f32 %v2648, %v2777
        %v2808 = vadd.f32 %v2653, %v2782
        %v2809 = vadd.f32 %v2658, %v2787
        %v2810 = vadd.f32 %v2663, %v2792
        %v2811 = vadd.f32 %v2668, %v2797
        %v2812 = vadd.f32 %v2673, %v2802
        %v2813 = vld [vmem:[#allocation2 + $0x90] sm:$0xff]
        %v2814 = vld [vmem:[#allocation2 + $0x98] sm:$0xff]
        %v2815 = vld [vmem:[#allocation2 + $0xa0] sm:$0xff]
        %v2816 = vld [vmem:[#allocation2 + $0xa8] sm:$0xff]
        %v2817 = vld [vmem:[#allocation2 + $0xb0] sm:$0xff]
        %v2818 = vld [vmem:[#allocation2 + $0xb8] sm:$0xff]
        %v2819 = vld [vmem:[#allocation2 + $0xc0] sm:$0xff]
        %v2820 = vld [vmem:[#allocation2 + $0xc8] sm:$0xff]
        %v2821 = vld [vmem:[%s1232] sm:$0xff]
        %v2822 = vld [vmem:[%s1232 + $0x8] sm:$0xff]
        %v2823 = vld [vmem:[%s1232 + $0x10] sm:$0xff]
        %v2824 = vld [vmem:[%s1232 + $0x18] sm:$0xff]
        %v2825 = vld [vmem:[%s1232 + $0x20] sm:$0xff]
        %v2826 = vld [vmem:[%s1232 + $0x28] sm:$0xff]
        %v2827 = vld [vmem:[%s1232 + $0x30] sm:$0xff]
        %v2828 = vld [vmem:[%s1232 + $0x38] sm:$0xff]
        %v2829 = vld [vmem:[%s1232 + $0x40] sm:$0xff]
        %v2830 = vld [vmem:[%s1232 + $0x48] sm:$0xff]
        %v2831 = vld [vmem:[%s1232 + $0x50] sm:$0xff]
        %v2832 = vld [vmem:[%s1232 + $0x58] sm:$0xff]
        %v2833 = vld [vmem:[%s1232 + $0x60] sm:$0xff]
        %v2834 = vld [vmem:[%s1232 + $0x68] sm:$0xff]
        %v2835 = vld [vmem:[%s1232 + $0x70] sm:$0xff]
        %v2836 = vld [vmem:[%s1232 + $0x78] sm:$0xff]
        %2837 = vmatprep.subr.mxu0 0.0
        %2838 = vmatpush1.msra.mxu0 %v2821
        %2839 = vmatprep.subr.mxu0 0.0
        %2840 = vmatpush1.msra.mxu0 %v2822
        %2841 = vmatprep.subr.mxu0 0.0
        %2842 = vmatpush1.msra.mxu0 %v2823
        %2843 = vmatprep.subr.mxu0 0.0
        %2844 = vmatpush1.msra.mxu0 %v2824
        %2845 = vmatprep.subr.mxu0 0.0
        %2846 = vmatpush1.msra.mxu0 %v2825
        %2847 = vmatprep.subr.mxu0 0.0
        %2848 = vmatpush1.msra.mxu0 %v2826
        %2849 = vmatprep.subr.mxu0 0.0
        %2850 = vmatpush1.msra.mxu0 %v2827
        %2851 = vmatprep.subr.mxu0 0.0
        %2852 = vmatpush1.msra.mxu0 %v2828
        %2853 = vmatprep.subr.mxu0 0.0
        %2854 = vmatpush1.msra.mxu0 %v2829
        %2855 = vmatprep.subr.mxu0 0.0
        %2856 = vmatpush1.msra.mxu0 %v2830
        %2857 = vmatprep.subr.mxu0 0.0
        %2858 = vmatpush1.msra.mxu0 %v2831
        %2859 = vmatprep.subr.mxu0 0.0
        %2860 = vmatpush1.msra.mxu0 %v2832
        %2861 = vmatprep.subr.mxu0 0.0
        %2862 = vmatpush1.msra.mxu0 %v2833
        %2863 = vmatprep.subr.mxu0 0.0
        %2864 = vmatpush1.msra.mxu0 %v2834
        %2865 = vmatprep.subr.mxu0 0.0
        %2866 = vmatpush1.msra.mxu0 %v2835
        %2867 = vmatprep.subr.mxu0 0.0
        %2868 = vmatpush1.msra.mxu0 %v2836
        %2869 = vmatprep.subr.mxu0 0.0
        %2870 = vmatpush1.msra.mxu0 0.0
        %2871 = vmatprep.subr.mxu0 0.0
        %2872 = vmatpush1.msra.mxu0 0.0
        %2873 = vmatprep.subr.mxu0 0.0
        %2874 = vmatpush1.msra.mxu0 0.0
        %2875 = vmatprep.subr.mxu0 0.0
        %2876 = vmatpush1.msra.mxu0 0.0
        %2877 = vmatprep.subr.mxu0 0.0
        %2878 = vmatpush1.msra.mxu0 0.0
        %2879 = vmatprep.subr.mxu0 0.0
        %2880 = vmatpush1.msra.mxu0 0.0
        %2881 = vmatprep.subr.mxu0 0.0
        %2882 = vmatpush1.msra.mxu0 0.0
        %2883 = vmatprep.subr.mxu0 0.0
        %2884 = vmatpush1.msra.mxu0 0.0
        %2885 = vmatprep.subr.mxu0 0.0
        %2886 = vmatpush1.msra.mxu0 0.0
        %2887 = vmatprep.subr.mxu0 0.0
        %2888 = vmatpush1.msra.mxu0 0.0
        %2889 = vmatprep.subr.mxu0 0.0
        %2890 = vmatpush1.msra.mxu0 0.0
        %2891 = vmatprep.subr.mxu0 0.0
        %2892 = vmatpush1.msra.mxu0 0.0
        %2893 = vmatprep.subr.mxu0 0.0
        %2894 = vmatpush1.msra.mxu0 0.0
        %2895 = vmatprep.subr.mxu0 0.0
        %2896 = vmatpush1.msra.mxu0 0.0
        %2897 = vmatprep.subr.mxu0 0.0
        %2898 = vmatpush1.msra.mxu0 0.0
        %2899 = vmatprep.subr.mxu0 0.0
        %2900 = vmatpush1.msra.mxu0 0.0
        %2901 = vmatprep.mubr.f32.mxu0 0.0
        %2902 = vmatmul.mubr.f32.gmra.mrb[0].mxu0 %v2813
        %v2903 = vpop.f32.mrb[0].mxu0
        %v2904 = vadd.f32 0.0, %v2903
        %v2905 = vpop.f32.mrb[0].mxu0
        %2906 = vmatprep.mubr.f32.mxu0 0.0
        %2907 = vmatmul.mubr.f32.gmra.mrb[0].mxu0 %v2814
        %v2908 = vpop.f32.mrb[0].mxu0
        %v2909 = vadd.f32 0.0, %v2908
        %v2910 = vpop.f32.mrb[0].mxu0
        %2911 = vmatprep.mubr.f32.mxu0 0.0
        %2912 = vmatmul.mubr.f32.gmra.mrb[0].mxu0 %v2815
        %v2913 = vpop.f32.mrb[0].mxu0
        %v2914 = vadd.f32 0.0, %v2913
        %v2915 = vpop.f32.mrb[0].mxu0
        %2916 = vmatprep.mubr.f32.mxu0 0.0
        %2917 = vmatmul.mubr.f32.gmra.mrb[0].mxu0 %v2816
        %v2918 = vpop.f32.mrb[0].mxu0
        %v2919 = vadd.f32 0.0, %v2918
        %v2920 = vpop.f32.mrb[0].mxu0
        %2921 = vmatprep.mubr.f32.mxu0 0.0
        %2922 = vmatmul.mubr.f32.gmra.mrb[0].mxu0 %v2817
        %v2923 = vpop.f32.mrb[0].mxu0
        %v2924 = vadd.f32 0.0, %v2923
        %v2925 = vpop.f32.mrb[0].mxu0
        %2926 = vmatprep.mubr.f32.mxu0 0.0
        %2927 = vmatmul.mubr.f32.gmra.mrb[0].mxu0 %v2818
        %v2928 = vpop.f32.mrb[0].mxu0
        %v2929 = vadd.f32 0.0, %v2928
        %v2930 = vpop.f32.mrb[0].mxu0
        %2931 = vmatprep.mubr.f32.mxu0 0.0
        %2932 = vmatmul.mubr.f32.gmra.mrb[0].mxu0 %v2819
        %v2933 = vpop.f32.mrb[0].mxu0
        %v2934 = vadd.f32 0.0, %v2933
        %v2935 = vpop.f32.mrb[0].mxu0
        %2936 = vmatprep.mubr.f32.mxu0 0.0
        %2937 = vmatmul.mubr.f32.gmra.mrb[0].mxu0 %v2820
        %v2938 = vpop.f32.mrb[0].mxu0
        %v2939 = vadd.f32 0.0, %v2938
        %v2940 = vpop.f32.mrb[0].mxu0
        %2941 = vdwg.mxu0
        %v2942 = vadd.f32 %v2805, %v2904
        %v2943 = vadd.f32 %v2806, %v2909
        %v2944 = vadd.f32 %v2807, %v2914
        %v2945 = vadd.f32 %v2808, %v2919
        %v2946 = vadd.f32 %v2809, %v2924
        %v2947 = vadd.f32 %v2810, %v2929
        %v2948 = vadd.f32 %v2811, %v2934
        %v2949 = vadd.f32 %v2812, %v2939
        %v2950 = vld [vmem:[#allocation2 + $0x91] sm:$0xff]
        %v2951 = vld [vmem:[#allocation2 + $0x99] sm:$0xff]
        %v2952 = vld [vmem:[#allocation2 + $0xa1] sm:$0xff]
        %v2953 = vld [vmem:[#allocation2 + $0xa9] sm:$0xff]
        %v2954 = vld [vmem:[#allocation2 + $0xb1] sm:$0xff]
        %v2955 = vld [vmem:[#allocation2 + $0xb9] sm:$0xff]
        %v2956 = vld [vmem:[#allocation2 + $0xc1] sm:$0xff]
        %v2957 = vld [vmem:[#allocation2 + $0xc9] sm:$0xff]
        %v2958 = vld [vmem:[%s1426] sm:$0xff]
        %v2959 = vld [vmem:[%s1426 + $0x8] sm:$0xff]
        %v2960 = vld [vmem:[%s1426 + $0x10] sm:$0xff]
        %v2961 = vld [vmem:[%s1426 + $0x18] sm:$0xff]
        %v2962 = vld [vmem:[%s1426 + $0x20] sm:$0xff]
        %v2963 = vld [vmem:[%s1426 + $0x28] sm:$0xff]
        %v2964 = vld [vmem:[%s1426 + $0x30] sm:$0xff]
        %v2965 = vld [vmem:[%s1426 + $0x38] sm:$0xff]
        %v2966 = vld [vmem:[%s1426 + $0x40] sm:$0xff]
        %v2967 = vld [vmem:[%s1426 + $0x48] sm:$0xff]
        %v2968 = vld [vmem:[%s1426 + $0x50] sm:$0xff]
        %v2969 = vld [vmem:[%s1426 + $0x58] sm:$0xff]
        %v2970 = vld [vmem:[%s1426 + $0x60] sm:$0xff]
        %v2971 = vld [vmem:[%s1426 + $0x68] sm:$0xff]
        %v2972 = vld [vmem:[%s1426 + $0x70] sm:$0xff]
        %v2973 = vld [vmem:[%s1426 + $0x78] sm:$0xff]
        %2974 = vmatprep.subr.mxu0 0.0
        %2975 = vmatpush1.msra.mxu0 %v2958
        %2976 = vmatprep.subr.mxu0 0.0
        %2977 = vmatpush1.msra.mxu0 %v2959
        %2978 = vmatprep.subr.mxu0 0.0
        %2979 = vmatpush1.msra.mxu0 %v2960
        %2980 = vmatprep.subr.mxu0 0.0
        %2981 = vmatpush1.msra.mxu0 %v2961
        %2982 = vmatprep.subr.mxu0 0.0
        %2983 = vmatpush1.msra.mxu0 %v2962
        %2984 = vmatprep.subr.mxu0 0.0
        %2985 = vmatpush1.msra.mxu0 %v2963
        %2986 = vmatprep.subr.mxu0 0.0
        %2987 = vmatpush1.msra.mxu0 %v2964
        %2988 = vmatprep.subr.mxu0 0.0
        %2989 = vmatpush1.msra.mxu0 %v2965
        %2990 = vmatprep.subr.mxu0 0.0
        %2991 = vmatpush1.msra.mxu0 %v2966
        %2992 = vmatprep.subr.mxu0 0.0
        %2993 = vmatpush1.msra.mxu0 %v2967
        %2994 = vmatprep.subr.mxu0 0.0
        %2995 = vmatpush1.msra.mxu0 %v2968
        %2996 = vmatprep.subr.mxu0 0.0
        %2997 = vmatpush1.msra.mxu0 %v2969
        %2998 = vmatprep.subr.mxu0 0.0
        %2999 = vmatpush1.msra.mxu0 %v2970
        %3000 = vmatprep.subr.mxu0 0.0
        %3001 = vmatpush1.msra.mxu0 %v2971
        %3002 = vmatprep.subr.mxu0 0.0
        %3003 = vmatpush1.msra.mxu0 %v2972
        %3004 = vmatprep.subr.mxu0 0.0
        %3005 = vmatpush1.msra.mxu0 %v2973
        %3006 = vmatprep.subr.mxu0 0.0
        %3007 = vmatpush1.msra.mxu0 0.0
        %3008 = vmatprep.subr.mxu0 0.0
        %3009 = vmatpush1.msra.mxu0 0.0
        %3010 = vmatprep.subr.mxu0 0.0
        %3011 = vmatpush1.msra.mxu0 0.0
        %3012 = vmatprep.subr.mxu0 0.0
        %3013 = vmatpush1.msra.mxu0 0.0
        %3014 = vmatprep.subr.mxu0 0.0
        %3015 = vmatpush1.msra.mxu0 0.0
        %3016 = vmatprep.subr.mxu0 0.0
        %3017 = vmatpush1.msra.mxu0 0.0
        %3018 = vmatprep.subr.mxu0 0.0
        %3019 = vmatpush1.msra.mxu0 0.0
        %3020 = vmatprep.subr.mxu0 0.0
        %3021 = vmatpush1.msra.mxu0 0.0
        %3022 = vmatprep.subr.mxu0 0.0
        %3023 = vmatpush1.msra.mxu0 0.0
        %3024 = vmatprep.subr.mxu0 0.0
        %3025 = vmatpush1.msra.mxu0 0.0
        %3026 = vmatprep.subr.mxu0 0.0
        %3027 = vmatpush1.msra.mxu0 0.0
        %3028 = vmatprep.subr.mxu0 0.0
        %3029 = vmatpush1.msra.mxu0 0.0
        %3030 = vmatprep.subr.mxu0 0.0
        %3031 = vmatpush1.msra.mxu0 0.0
        %3032 = vmatprep.subr.mxu0 0.0
        %3033 = vmatpush1.msra.mxu0 0.0
        %3034 = vmatprep.subr.mxu0 0.0
        %3035 = vmatpush1.msra.mxu0 0.0
        %3036 = vmatprep.subr.mxu0 0.0
        %3037 = vmatpush1.msra.mxu0 0.0
        %3038 = vmatprep.mubr.f32.mxu0 0.0
        %3039 = vmatmul.mubr.f32.gmra.mrb[0].mxu0 %v2950
        %v3040 = vpop.f32.mrb[0].mxu0
        %v3041 = vadd.f32 0.0, %v3040
        %v3042 = vpop.f32.mrb[0].mxu0
        %3043 = vmatprep.mubr.f32.mxu0 0.0
        %3044 = vmatmul.mubr.f32.gmra.mrb[0].mxu0 %v2951
        %v3045 = vpop.f32.mrb[0].mxu0
        %v3046 = vadd.f32 0.0, %v3045
        %v3047 = vpop.f32.mrb[0].mxu0
        %3048 = vmatprep.mubr.f32.mxu0 0.0
        %3049 = vmatmul.mubr.f32.gmra.mrb[0].mxu0 %v2952
        %v3050 = vpop.f32.mrb[0].mxu0
        %v3051 = vadd.f32 0.0, %v3050
        %v3052 = vpop.f32.mrb[0].mxu0
        %3053 = vmatprep.mubr.f32.mxu0 0.0
        %3054 = vmatmul.mubr.f32.gmra.mrb[0].mxu0 %v2953
        %v3055 = vpop.f32.mrb[0].mxu0
        %v3056 = vadd.f32 0.0, %v3055
        %v3057 = vpop.f32.mrb[0].mxu0
        %3058 = vmatprep.mubr.f32.mxu0 0.0
        %3059 = vmatmul.mubr.f32.gmra.mrb[0].mxu0 %v2954
        %v3060 = vpop.f32.mrb[0].mxu0
        %v3061 = vadd.f32 0.0, %v3060
        %v3062 = vpop.f32.mrb[0].mxu0
        %3063 = vmatprep.mubr.f32.mxu0 0.0
        %3064 = vmatmul.mubr.f32.gmra.mrb[0].mxu0 %v2955
        %v3065 = vpop.f32.mrb[0].mxu0
        %v3066 = vadd.f32 0.0, %v3065
        %v3067 = vpop.f32.mrb[0].mxu0
        %3068 = vmatprep.mubr.f32.mxu0 0.0
        %3069 = vmatmul.mubr.f32.gmra.mrb[0].mxu0 %v2956
        %v3070 = vpop.f32.mrb[0].mxu0
        %v3071 = vadd.f32 0.0, %v3070
        %v3072 = vpop.f32.mrb[0].mxu0
        %3073 = vmatprep.mubr.f32.mxu0 0.0
        %3074 = vmatmul.mubr.f32.gmra.mrb[0].mxu0 %v2957
        %v3075 = vpop.f32.mrb[0].mxu0
        %v3076 = vadd.f32 0.0, %v3075
        %v3077 = vpop.f32.mrb[0].mxu0
        %3078 = vdwg.mxu0
        %v3079 = vadd.f32 %v2942, %v3041
        %v3080 = vadd.f32 %v2943, %v3046
        %v3081 = vadd.f32 %v2944, %v3051
        %v3082 = vadd.f32 %v2945, %v3056
        %v3083 = vadd.f32 %v2946, %v3061
        %v3084 = vadd.f32 %v2947, %v3066
        %v3085 = vadd.f32 %v2948, %v3071
        %v3086 = vadd.f32 %v2949, %v3076
        %v3087 = vld [vmem:[#allocation2 + $0x92] sm:$0xff]
        %v3088 = vld [vmem:[#allocation2 + $0x9a] sm:$0xff]
        %v3089 = vld [vmem:[#allocation2 + $0xa2] sm:$0xff]
        %v3090 = vld [vmem:[#allocation2 + $0xaa] sm:$0xff]
        %v3091 = vld [vmem:[#allocation2 + $0xb2] sm:$0xff]
        %v3092 = vld [vmem:[#allocation2 + $0xba] sm:$0xff]
        %v3093 = vld [vmem:[#allocation2 + $0xc2] sm:$0xff]
        %v3094 = vld [vmem:[#allocation2 + $0xca] sm:$0xff]
        %v3095 = vld [vmem:[%s1620] sm:$0xff]
        %v3096 = vld [vmem:[%s1620 + $0x8] sm:$0xff]
        %v3097 = vld [vmem:[%s1620 + $0x10] sm:$0xff]
        %v3098 = vld [vmem:[%s1620 + $0x18] sm:$0xff]
        %v3099 = vld [vmem:[%s1620 + $0x20] sm:$0xff]
        %v3100 = vld [vmem:[%s1620 + $0x28] sm:$0xff]
        %v3101 = vld [vmem:[%s1620 + $0x30] sm:$0xff]
        %v3102 = vld [vmem:[%s1620 + $0x38] sm:$0xff]
        %v3103 = vld [vmem:[%s1620 + $0x40] sm:$0xff]
        %v3104 = vld [vmem:[%s1620 + $0x48] sm:$0xff]
        %v3105 = vld [vmem:[%s1620 + $0x50] sm:$0xff]
        %v3106 = vld [vmem:[%s1620 + $0x58] sm:$0xff]
        %v3107 = vld [vmem:[%s1620 + $0x60] sm:$0xff]
        %v3108 = vld [vmem:[%s1620 + $0x68] sm:$0xff]
        %v3109 = vld [vmem:[%s1620 + $0x70] sm:$0xff]
        %v3110 = vld [vmem:[%s1620 + $0x78] sm:$0xff]
        %3111 = vmatprep.subr.mxu0 0.0
        %3112 = vmatpush1.msra.mxu0 %v3095
        %3113 = vmatprep.subr.mxu0 0.0
        %3114 = vmatpush1.msra.mxu0 %v3096
        %3115 = vmatprep.subr.mxu0 0.0
        %3116 = vmatpush1.msra.mxu0 %v3097
        %3117 = vmatprep.subr.mxu0 0.0
        %3118 = vmatpush1.msra.mxu0 %v3098
        %3119 = vmatprep.subr.mxu0 0.0
        %3120 = vmatpush1.msra.mxu0 %v3099
        %3121 = vmatprep.subr.mxu0 0.0
        %3122 = vmatpush1.msra.mxu0 %v3100
        %3123 = vmatprep.subr.mxu0 0.0
        %3124 = vmatpush1.msra.mxu0 %v3101
        %3125 = vmatprep.subr.mxu0 0.0
        %3126 = vmatpush1.msra.mxu0 %v3102
        %3127 = vmatprep.subr.mxu0 0.0
        %3128 = vmatpush1.msra.mxu0 %v3103
        %3129 = vmatprep.subr.mxu0 0.0
        %3130 = vmatpush1.msra.mxu0 %v3104
        %3131 = vmatprep.subr.mxu0 0.0
        %3132 = vmatpush1.msra.mxu0 %v3105
        %3133 = vmatprep.subr.mxu0 0.0
        %3134 = vmatpush1.msra.mxu0 %v3106
        %3135 = vmatprep.subr.mxu0 0.0
        %3136 = vmatpush1.msra.mxu0 %v3107
        %3137 = vmatprep.subr.mxu0 0.0
        %3138 = vmatpush1.msra.mxu0 %v3108
        %3139 = vmatprep.subr.mxu0 0.0
        %3140 = vmatpush1.msra.mxu0 %v3109
        %3141 = vmatprep.subr.mxu0 0.0
        %3142 = vmatpush1.msra.mxu0 %v3110
        %3143 = vmatprep.subr.mxu0 0.0
        %3144 = vmatpush1.msra.mxu0 0.0
        %3145 = vmatprep.subr.mxu0 0.0
        %3146 = vmatpush1.msra.mxu0 0.0
        %3147 = vmatprep.subr.mxu0 0.0
        %3148 = vmatpush1.msra.mxu0 0.0
        %3149 = vmatprep.subr.mxu0 0.0
        %3150 = vmatpush1.msra.mxu0 0.0
        %3151 = vmatprep.subr.mxu0 0.0
        %3152 = vmatpush1.msra.mxu0 0.0
        %3153 = vmatprep.subr.mxu0 0.0
        %3154 = vmatpush1.msra.mxu0 0.0
        %3155 = vmatprep.subr.mxu0 0.0
        %3156 = vmatpush1.msra.mxu0 0.0
        %3157 = vmatprep.subr.mxu0 0.0
        %3158 = vmatpush1.msra.mxu0 0.0
        %3159 = vmatprep.subr.mxu0 0.0
        %3160 = vmatpush1.msra.mxu0 0.0
        %3161 = vmatprep.subr.mxu0 0.0
        %3162 = vmatpush1.msra.mxu0 0.0
        %3163 = vmatprep.subr.mxu0 0.0
        %3164 = vmatpush1.msra.mxu0 0.0
        %3165 = vmatprep.subr.mxu0 0.0
        %3166 = vmatpush1.msra.mxu0 0.0
        %3167 = vmatprep.subr.mxu0 0.0
        %3168 = vmatpush1.msra.mxu0 0.0
        %3169 = vmatprep.subr.mxu0 0.0
        %3170 = vmatpush1.msra.mxu0 0.0
        %3171 = vmatprep.subr.mxu0 0.0
        %3172 = vmatpush1.msra.mxu0 0.0
        %3173 = vmatprep.subr.mxu0 0.0
        %3174 = vmatpush1.msra.mxu0 0.0
        %3175 = vmatprep.mubr.f32.mxu0 0.0
        %3176 = vmatmul.mubr.f32.gmra.mrb[0].mxu0 %v3087
        %v3177 = vpop.f32.mrb[0].mxu0
        %v3178 = vadd.f32 0.0, %v3177
        %v3179 = vpop.f32.mrb[0].mxu0
        %3180 = vmatprep.mubr.f32.mxu0 0.0
        %3181 = vmatmul.mubr.f32.gmra.mrb[0].mxu0 %v3088
        %v3182 = vpop.f32.mrb[0].mxu0
        %v3183 = vadd.f32 0.0, %v3182
        %v3184 = vpop.f32.mrb[0].mxu0
        %3185 = vmatprep.mubr.f32.mxu0 0.0
        %3186 = vmatmul.mubr.f32.gmra.mrb[0].mxu0 %v3089
        %v3187 = vpop.f32.mrb[0].mxu0
        %v3188 = vadd.f32 0.0, %v3187
        %v3189 = vpop.f32.mrb[0].mxu0
        %3190 = vmatprep.mubr.f32.mxu0 0.0
        %3191 = vmatmul.mubr.f32.gmra.mrb[0].mxu0 %v3090
        %v3192 = vpop.f32.mrb[0].mxu0
        %v3193 = vadd.f32 0.0, %v3192
        %v3194 = vpop.f32.mrb[0].mxu0
        %3195 = vmatprep.mubr.f32.mxu0 0.0
        %3196 = vmatmul.mubr.f32.gmra.mrb[0].mxu0 %v3091
        %v3197 = vpop.f32.mrb[0].mxu0
        %v3198 = vadd.f32 0.0, %v3197
        %v3199 = vpop.f32.mrb[0].mxu0
        %3200 = vmatprep.mubr.f32.mxu0 0.0
        %3201 = vmatmul.mubr.f32.gmra.mrb[0].mxu0 %v3092
        %v3202 = vpop.f32.mrb[0].mxu0
        %v3203 = vadd.f32 0.0, %v3202
        %v3204 = vpop.f32.mrb[0].mxu0
        %3205 = vmatprep.mubr.f32.mxu0 0.0
        %3206 = vmatmul.mubr.f32.gmra.mrb[0].mxu0 %v3093
        %v3207 = vpop.f32.mrb[0].mxu0
        %v3208 = vadd.f32 0.0, %v3207
        %v3209 = vpop.f32.mrb[0].mxu0
        %3210 = vmatprep.mubr.f32.mxu0 0.0
        %3211 = vmatmul.mubr.f32.gmra.mrb[0].mxu0 %v3094
        %v3212 = vpop.f32.mrb[0].mxu0
        %v3213 = vadd.f32 0.0, %v3212
        %v3214 = vpop.f32.mrb[0].mxu0
        %3215 = vdwg.mxu0
        %v3216 = vadd.f32 %v3079, %v3178
        %v3217 = vadd.f32 %v3080, %v3183
        %v3218 = vadd.f32 %v3081, %v3188
        %v3219 = vadd.f32 %v3082, %v3193
        %v3220 = vadd.f32 %v3083, %v3198
        %v3221 = vadd.f32 %v3084, %v3203
        %v3222 = vadd.f32 %v3085, %v3208
        %v3223 = vadd.f32 %v3086, %v3213
        %v3224 = vld [vmem:[#allocation2 + $0xa0] sm:$0xff]
        %v3225 = vld [vmem:[#allocation2 + $0xa8] sm:$0xff]
        %v3226 = vld [vmem:[#allocation2 + $0xb0] sm:$0xff]
        %v3227 = vld [vmem:[#allocation2 + $0xb8] sm:$0xff]
        %v3228 = vld [vmem:[#allocation2 + $0xc0] sm:$0xff]
        %v3229 = vld [vmem:[#allocation2 + $0xc8] sm:$0xff]
        %v3230 = vld [vmem:[#allocation2 + $0xd0] sm:$0xff]
        %v3231 = vld [vmem:[#allocation2 + $0xd8] sm:$0xff]
        %v3232 = vld [vmem:[%s1814] sm:$0xff]
        %v3233 = vld [vmem:[%s1814 + $0x8] sm:$0xff]
        %v3234 = vld [vmem:[%s1814 + $0x10] sm:$0xff]
        %v3235 = vld [vmem:[%s1814 + $0x18] sm:$0xff]
        %v3236 = vld [vmem:[%s1814 + $0x20] sm:$0xff]
        %v3237 = vld [vmem:[%s1814 + $0x28] sm:$0xff]
        %v3238 = vld [vmem:[%s1814 + $0x30] sm:$0xff]
        %v3239 = vld [vmem:[%s1814 + $0x38] sm:$0xff]
        %v3240 = vld [vmem:[%s1814 + $0x40] sm:$0xff]
        %v3241 = vld [vmem:[%s1814 + $0x48] sm:$0xff]
        %v3242 = vld [vmem:[%s1814 + $0x50] sm:$0xff]
        %v3243 = vld [vmem:[%s1814 + $0x58] sm:$0xff]
        %v3244 = vld [vmem:[%s1814 + $0x60] sm:$0xff]
        %v3245 = vld [vmem:[%s1814 + $0x68] sm:$0xff]
        %v3246 = vld [vmem:[%s1814 + $0x70] sm:$0xff]
        %v3247 = vld [vmem:[%s1814 + $0x78] sm:$0xff]
        %3248 = vmatprep.subr.mxu0 0.0
        %3249 = vmatpush1.msra.mxu0 %v3232
        %3250 = vmatprep.subr.mxu0 0.0
        %3251 = vmatpush1.msra.mxu0 %v3233
        %3252 = vmatprep.subr.mxu0 0.0
        %3253 = vmatpush1.msra.mxu0 %v3234
        %3254 = vmatprep.subr.mxu0 0.0
        %3255 = vmatpush1.msra.mxu0 %v3235
        %3256 = vmatprep.subr.mxu0 0.0
        %3257 = vmatpush1.msra.mxu0 %v3236
        %3258 = vmatprep.subr.mxu0 0.0
        %3259 = vmatpush1.msra.mxu0 %v3237
        %3260 = vmatprep.subr.mxu0 0.0
        %3261 = vmatpush1.msra.mxu0 %v3238
        %3262 = vmatprep.subr.mxu0 0.0
        %3263 = vmatpush1.msra.mxu0 %v3239
        %3264 = vmatprep.subr.mxu0 0.0
        %3265 = vmatpush1.msra.mxu0 %v3240
        %3266 = vmatprep.subr.mxu0 0.0
        %3267 = vmatpush1.msra.mxu0 %v3241
        %3268 = vmatprep.subr.mxu0 0.0
        %3269 = vmatpush1.msra.mxu0 %v3242
        %3270 = vmatprep.subr.mxu0 0.0
        %3271 = vmatpush1.msra.mxu0 %v3243
        %3272 = vmatprep.subr.mxu0 0.0
        %3273 = vmatpush1.msra.mxu0 %v3244
        %3274 = vmatprep.subr.mxu0 0.0
        %3275 = vmatpush1.msra.mxu0 %v3245
        %3276 = vmatprep.subr.mxu0 0.0
        %3277 = vmatpush1.msra.mxu0 %v3246
        %3278 = vmatprep.subr.mxu0 0.0
        %3279 = vmatpush1.msra.mxu0 %v3247
        %3280 = vmatprep.subr.mxu0 0.0
        %3281 = vmatpush1.msra.mxu0 0.0
        %3282 = vmatprep.subr.mxu0 0.0
        %3283 = vmatpush1.msra.mxu0 0.0
        %3284 = vmatprep.subr.mxu0 0.0
        %3285 = vmatpush1.msra.mxu0 0.0
        %3286 = vmatprep.subr.mxu0 0.0
        %3287 = vmatpush1.msra.mxu0 0.0
        %3288 = vmatprep.subr.mxu0 0.0
        %3289 = vmatpush1.msra.mxu0 0.0
        %3290 = vmatprep.subr.mxu0 0.0
        %3291 = vmatpush1.msra.mxu0 0.0
        %3292 = vmatprep.subr.mxu0 0.0
        %3293 = vmatpush1.msra.mxu0 0.0
        %3294 = vmatprep.subr.mxu0 0.0
        %3295 = vmatpush1.msra.mxu0 0.0
        %3296 = vmatprep.subr.mxu0 0.0
        %3297 = vmatpush1.msra.mxu0 0.0
        %3298 = vmatprep.subr.mxu0 0.0
        %3299 = vmatpush1.msra.mxu0 0.0
        %3300 = vmatprep.subr.mxu0 0.0
        %3301 = vmatpush1.msra.mxu0 0.0
        %3302 = vmatprep.subr.mxu0 0.0
        %3303 = vmatpush1.msra.mxu0 0.0
        %3304 = vmatprep.subr.mxu0 0.0
        %3305 = vmatpush1.msra.mxu0 0.0
        %3306 = vmatprep.subr.mxu0 0.0
        %3307 = vmatpush1.msra.mxu0 0.0
        %3308 = vmatprep.subr.mxu0 0.0
        %3309 = vmatpush1.msra.mxu0 0.0
        %3310 = vmatprep.subr.mxu0 0.0
        %3311 = vmatpush1.msra.mxu0 0.0
        %3312 = vmatprep.mubr.f32.mxu0 0.0
        %3313 = vmatmul.mubr.f32.gmra.mrb[0].mxu0 %v3224
        %v3314 = vpop.f32.mrb[0].mxu0
        %v3315 = vadd.f32 0.0, %v3314
        %v3316 = vpop.f32.mrb[0].mxu0
        %3317 = vmatprep.mubr.f32.mxu0 0.0
        %3318 = vmatmul.mubr.f32.gmra.mrb[0].mxu0 %v3225
        %v3319 = vpop.f32.mrb[0].mxu0
        %v3320 = vadd.f32 0.0, %v3319
        %v3321 = vpop.f32.mrb[0].mxu0
        %3322 = vmatprep.mubr.f32.mxu0 0.0
        %3323 = vmatmul.mubr.f32.gmra.mrb[0].mxu0 %v3226
        %v3324 = vpop.f32.mrb[0].mxu0
        %v3325 = vadd.f32 0.0, %v3324
        %v3326 = vpop.f32.mrb[0].mxu0
        %3327 = vmatprep.mubr.f32.mxu0 0.0
        %3328 = vmatmul.mubr.f32.gmra.mrb[0].mxu0 %v3227
        %v3329 = vpop.f32.mrb[0].mxu0
        %v3330 = vadd.f32 0.0, %v3329
        %v3331 = vpop.f32.mrb[0].mxu0
        %3332 = vmatprep.mubr.f32.mxu0 0.0
        %3333 = vmatmul.mubr.f32.gmra.mrb[0].mxu0 %v3228
        %v3334 = vpop.f32.mrb[0].mxu0
        %v3335 = vadd.f32 0.0, %v3334
        %v3336 = vpop.f32.mrb[0].mxu0
        %3337 = vmatprep.mubr.f32.mxu0 0.0
        %3338 = vmatmul.mubr.f32.gmra.mrb[0].mxu0 %v3229
        %v3339 = vpop.f32.mrb[0].mxu0
        %v3340 = vadd.f32 0.0, %v3339
        %v3341 = vpop.f32.mrb[0].mxu0
        %3342 = vmatprep.mubr.f32.mxu0 0.0
        %3343 = vmatmul.mubr.f32.gmra.mrb[0].mxu0 %v3230
        %v3344 = vpop.f32.mrb[0].mxu0
        %v3345 = vadd.f32 0.0, %v3344
        %v3346 = vpop.f32.mrb[0].mxu0
        %3347 = vmatprep.mubr.f32.mxu0 0.0
        %3348 = vmatmul.mubr.f32.gmra.mrb[0].mxu0 %v3231
        %v3349 = vpop.f32.mrb[0].mxu0
        %v3350 = vadd.f32 0.0, %v3349
        %v3351 = vpop.f32.mrb[0].mxu0
        %3352 = vdwg.mxu0
        %v3353 = vadd.f32 %v3216, %v3315
        %v3354 = vadd.f32 %v3217, %v3320
        %v3355 = vadd.f32 %v3218, %v3325
        %v3356 = vadd.f32 %v3219, %v3330
        %v3357 = vadd.f32 %v3220, %v3335
        %v3358 = vadd.f32 %v3221, %v3340
        %v3359 = vadd.f32 %v3222, %v3345
        %v3360 = vadd.f32 %v3223, %v3350
        %v3361 = vld [vmem:[#allocation2 + $0xa1] sm:$0xff]
        %v3362 = vld [vmem:[#allocation2 + $0xa9] sm:$0xff]
        %v3363 = vld [vmem:[#allocation2 + $0xb1] sm:$0xff]
        %v3364 = vld [vmem:[#allocation2 + $0xb9] sm:$0xff]
        %v3365 = vld [vmem:[#allocation2 + $0xc1] sm:$0xff]
        %v3366 = vld [vmem:[#allocation2 + $0xc9] sm:$0xff]
        %v3367 = vld [vmem:[#allocation2 + $0xd1] sm:$0xff]
        %v3368 = vld [vmem:[#allocation2 + $0xd9] sm:$0xff]
        %v3369 = vld [vmem:[%s2008] sm:$0xff]
        %v3370 = vld [vmem:[%s2008 + $0x8] sm:$0xff]
        %v3371 = vld [vmem:[%s2008 + $0x10] sm:$0xff]
        %v3372 = vld [vmem:[%s2008 + $0x18] sm:$0xff]
        %v3373 = vld [vmem:[%s2008 + $0x20] sm:$0xff]
        %v3374 = vld [vmem:[%s2008 + $0x28] sm:$0xff]
        %v3375 = vld [vmem:[%s2008 + $0x30] sm:$0xff]
        %v3376 = vld [vmem:[%s2008 + $0x38] sm:$0xff]
        %v3377 = vld [vmem:[%s2008 + $0x40] sm:$0xff]
        %v3378 = vld [vmem:[%s2008 + $0x48] sm:$0xff]
        %v3379 = vld [vmem:[%s2008 + $0x50] sm:$0xff]
        %v3380 = vld [vmem:[%s2008 + $0x58] sm:$0xff]
        %v3381 = vld [vmem:[%s2008 + $0x60] sm:$0xff]
        %v3382 = vld [vmem:[%s2008 + $0x68] sm:$0xff]
        %v3383 = vld [vmem:[%s2008 + $0x70] sm:$0xff]
        %v3384 = vld [vmem:[%s2008 + $0x78] sm:$0xff]
        %3385 = vmatprep.subr.mxu0 0.0
        %3386 = vmatpush1.msra.mxu0 %v3369
        %3387 = vmatprep.subr.mxu0 0.0
        %3388 = vmatpush1.msra.mxu0 %v3370
        %3389 = vmatprep.subr.mxu0 0.0
        %3390 = vmatpush1.msra.mxu0 %v3371
        %3391 = vmatprep.subr.mxu0 0.0
        %3392 = vmatpush1.msra.mxu0 %v3372
        %3393 = vmatprep.subr.mxu0 0.0
        %3394 = vmatpush1.msra.mxu0 %v3373
        %3395 = vmatprep.subr.mxu0 0.0
        %3396 = vmatpush1.msra.mxu0 %v3374
        %3397 = vmatprep.subr.mxu0 0.0
        %3398 = vmatpush1.msra.mxu0 %v3375
        %3399 = vmatprep.subr.mxu0 0.0
        %3400 = vmatpush1.msra.mxu0 %v3376
        %3401 = vmatprep.subr.mxu0 0.0
        %3402 = vmatpush1.msra.mxu0 %v3377
        %3403 = vmatprep.subr.mxu0 0.0
        %3404 = vmatpush1.msra.mxu0 %v3378
        %3405 = vmatprep.subr.mxu0 0.0
        %3406 = vmatpush1.msra.mxu0 %v3379
        %3407 = vmatprep.subr.mxu0 0.0
        %3408 = vmatpush1.msra.mxu0 %v3380
        %3409 = vmatprep.subr.mxu0 0.0
        %3410 = vmatpush1.msra.mxu0 %v3381
        %3411 = vmatprep.subr.mxu0 0.0
        %3412 = vmatpush1.msra.mxu0 %v3382
        %3413 = vmatprep.subr.mxu0 0.0
        %3414 = vmatpush1.msra.mxu0 %v3383
        %3415 = vmatprep.subr.mxu0 0.0
        %3416 = vmatpush1.msra.mxu0 %v3384
        %3417 = vmatprep.subr.mxu0 0.0
        %3418 = vmatpush1.msra.mxu0 0.0
        %3419 = vmatprep.subr.mxu0 0.0
        %3420 = vmatpush1.msra.mxu0 0.0
        %3421 = vmatprep.subr.mxu0 0.0
        %3422 = vmatpush1.msra.mxu0 0.0
        %3423 = vmatprep.subr.mxu0 0.0
        %3424 = vmatpush1.msra.mxu0 0.0
        %3425 = vmatprep.subr.mxu0 0.0
        %3426 = vmatpush1.msra.mxu0 0.0
        %3427 = vmatprep.subr.mxu0 0.0
        %3428 = vmatpush1.msra.mxu0 0.0
        %3429 = vmatprep.subr.mxu0 0.0
        %3430 = vmatpush1.msra.mxu0 0.0
        %3431 = vmatprep.subr.mxu0 0.0
        %3432 = vmatpush1.msra.mxu0 0.0
        %3433 = vmatprep.subr.mxu0 0.0
        %3434 = vmatpush1.msra.mxu0 0.0
        %3435 = vmatprep.subr.mxu0 0.0
        %3436 = vmatpush1.msra.mxu0 0.0
        %3437 = vmatprep.subr.mxu0 0.0
        %3438 = vmatpush1.msra.mxu0 0.0
        %3439 = vmatprep.subr.mxu0 0.0
        %3440 = vmatpush1.msra.mxu0 0.0
        %3441 = vmatprep.subr.mxu0 0.0
        %3442 = vmatpush1.msra.mxu0 0.0
        %3443 = vmatprep.subr.mxu0 0.0
        %3444 = vmatpush1.msra.mxu0 0.0
        %3445 = vmatprep.subr.mxu0 0.0
        %3446 = vmatpush1.msra.mxu0 0.0
        %3447 = vmatprep.subr.mxu0 0.0
        %3448 = vmatpush1.msra.mxu0 0.0
        %3449 = vmatprep.mubr.f32.mxu0 0.0
        %3450 = vmatmul.mubr.f32.gmra.mrb[0].mxu0 %v3361
        %v3451 = vpop.f32.mrb[0].mxu0
        %v3452 = vadd.f32 0.0, %v3451
        %v3453 = vpop.f32.mrb[0].mxu0
        %3454 = vmatprep.mubr.f32.mxu0 0.0
        %3455 = vmatmul.mubr.f32.gmra.mrb[0].mxu0 %v3362
        %v3456 = vpop.f32.mrb[0].mxu0
        %v3457 = vadd.f32 0.0, %v3456
        %v3458 = vpop.f32.mrb[0].mxu0
        %3459 = vmatprep.mubr.f32.mxu0 0.0
        %3460 = vmatmul.mubr.f32.gmra.mrb[0].mxu0 %v3363
        %v3461 = vpop.f32.mrb[0].mxu0
        %v3462 = vadd.f32 0.0, %v3461
        %v3463 = vpop.f32.mrb[0].mxu0
        %3464 = vmatprep.mubr.f32.mxu0 0.0
        %3465 = vmatmul.mubr.f32.gmra.mrb[0].mxu0 %v3364
        %v3466 = vpop.f32.mrb[0].mxu0
        %v3467 = vadd.f32 0.0, %v3466
        %v3468 = vpop.f32.mrb[0].mxu0
        %3469 = vmatprep.mubr.f32.mxu0 0.0
        %3470 = vmatmul.mubr.f32.gmra.mrb[0].mxu0 %v3365
        %v3471 = vpop.f32.mrb[0].mxu0
        %v3472 = vadd.f32 0.0, %v3471
        %v3473 = vpop.f32.mrb[0].mxu0
        %3474 = vmatprep.mubr.f32.mxu0 0.0
        %3475 = vmatmul.mubr.f32.gmra.mrb[0].mxu0 %v3366
        %v3476 = vpop.f32.mrb[0].mxu0
        %v3477 = vadd.f32 0.0, %v3476
        %v3478 = vpop.f32.mrb[0].mxu0
        %3479 = vmatprep.mubr.f32.mxu0 0.0
        %3480 = vmatmul.mubr.f32.gmra.mrb[0].mxu0 %v3367
        %v3481 = vpop.f32.mrb[0].mxu0
        %v3482 = vadd.f32 0.0, %v3481
        %v3483 = vpop.f32.mrb[0].mxu0
        %3484 = vmatprep.mubr.f32.mxu0 0.0
        %3485 = vmatmul.mubr.f32.gmra.mrb[0].mxu0 %v3368
        %v3486 = vpop.f32.mrb[0].mxu0
        %v3487 = vadd.f32 0.0, %v3486
        %v3488 = vpop.f32.mrb[0].mxu0
        %3489 = vdwg.mxu0
        %v3490 = vadd.f32 %v3353, %v3452
        %v3491 = vadd.f32 %v3354, %v3457
        %v3492 = vadd.f32 %v3355, %v3462
        %v3493 = vadd.f32 %v3356, %v3467
        %v3494 = vadd.f32 %v3357, %v3472
        %v3495 = vadd.f32 %v3358, %v3477
        %v3496 = vadd.f32 %v3359, %v3482
        %v3497 = vadd.f32 %v3360, %v3487
        %v3498 = vld [vmem:[#allocation2 + $0xa2] sm:$0xff]
        %v3499 = vld [vmem:[#allocation2 + $0xaa] sm:$0xff]
        %v3500 = vld [vmem:[#allocation2 + $0xb2] sm:$0xff]
        %v3501 = vld [vmem:[#allocation2 + $0xba] sm:$0xff]
        %v3502 = vld [vmem:[#allocation2 + $0xc2] sm:$0xff]
        %v3503 = vld [vmem:[#allocation2 + $0xca] sm:$0xff]
        %v3504 = vld [vmem:[#allocation2 + $0xd2] sm:$0xff]
        %v3505 = vld [vmem:[#allocation2 + $0xda] sm:$0xff]
        %v3506 = vld [vmem:[%s2202] sm:$0xff]
        %v3507 = vld [vmem:[%s2202 + $0x8] sm:$0xff]
        %v3508 = vld [vmem:[%s2202 + $0x10] sm:$0xff]
        %v3509 = vld [vmem:[%s2202 + $0x18] sm:$0xff]
        %v3510 = vld [vmem:[%s2202 + $0x20] sm:$0xff]
        %v3511 = vld [vmem:[%s2202 + $0x28] sm:$0xff]
        %v3512 = vld [vmem:[%s2202 + $0x30] sm:$0xff]
        %v3513 = vld [vmem:[%s2202 + $0x38] sm:$0xff]
        %v3514 = vld [vmem:[%s2202 + $0x40] sm:$0xff]
        %v3515 = vld [vmem:[%s2202 + $0x48] sm:$0xff]
        %v3516 = vld [vmem:[%s2202 + $0x50] sm:$0xff]
        %v3517 = vld [vmem:[%s2202 + $0x58] sm:$0xff]
        %v3518 = vld [vmem:[%s2202 + $0x60] sm:$0xff]
        %v3519 = vld [vmem:[%s2202 + $0x68] sm:$0xff]
        %v3520 = vld [vmem:[%s2202 + $0x70] sm:$0xff]
        %v3521 = vld [vmem:[%s2202 + $0x78] sm:$0xff]
        %3522 = vmatprep.subr.mxu0 0.0
        %3523 = vmatpush1.msra.mxu0 %v3506
        %3524 = vmatprep.subr.mxu0 0.0
        %3525 = vmatpush1.msra.mxu0 %v3507
        %3526 = vmatprep.subr.mxu0 0.0
        %3527 = vmatpush1.msra.mxu0 %v3508
        %3528 = vmatprep.subr.mxu0 0.0
        %3529 = vmatpush1.msra.mxu0 %v3509
        %3530 = vmatprep.subr.mxu0 0.0
        %3531 = vmatpush1.msra.mxu0 %v3510
        %3532 = vmatprep.subr.mxu0 0.0
        %3533 = vmatpush1.msra.mxu0 %v3511
        %3534 = vmatprep.subr.mxu0 0.0
        %3535 = vmatpush1.msra.mxu0 %v3512
        %3536 = vmatprep.subr.mxu0 0.0
        %3537 = vmatpush1.msra.mxu0 %v3513
        %3538 = vmatprep.subr.mxu0 0.0
        %3539 = vmatpush1.msra.mxu0 %v3514
        %3540 = vmatprep.subr.mxu0 0.0
        %3541 = vmatpush1.msra.mxu0 %v3515
        %3542 = vmatprep.subr.mxu0 0.0
        %3543 = vmatpush1.msra.mxu0 %v3516
        %3544 = vmatprep.subr.mxu0 0.0
        %3545 = vmatpush1.msra.mxu0 %v3517
        %3546 = vmatprep.subr.mxu0 0.0
        %3547 = vmatpush1.msra.mxu0 %v3518
        %3548 = vmatprep.subr.mxu0 0.0
        %3549 = vmatpush1.msra.mxu0 %v3519
        %3550 = vmatprep.subr.mxu0 0.0
        %3551 = vmatpush1.msra.mxu0 %v3520
        %3552 = vmatprep.subr.mxu0 0.0
        %3553 = vmatpush1.msra.mxu0 %v3521
        %3554 = vmatprep.subr.mxu0 0.0
        %3555 = vmatpush1.msra.mxu0 0.0
        %3556 = vmatprep.subr.mxu0 0.0
        %3557 = vmatpush1.msra.mxu0 0.0
        %3558 = vmatprep.subr.mxu0 0.0
        %3559 = vmatpush1.msra.mxu0 0.0
        %3560 = vmatprep.subr.mxu0 0.0
        %3561 = vmatpush1.msra.mxu0 0.0
        %3562 = vmatprep.subr.mxu0 0.0
        %3563 = vmatpush1.msra.mxu0 0.0
        %3564 = vmatprep.subr.mxu0 0.0
        %3565 = vmatpush1.msra.mxu0 0.0
        %3566 = vmatprep.subr.mxu0 0.0
        %3567 = vmatpush1.msra.mxu0 0.0
        %3568 = vmatprep.subr.mxu0 0.0
        %3569 = vmatpush1.msra.mxu0 0.0
        %3570 = vmatprep.subr.mxu0 0.0
        %3571 = vmatpush1.msra.mxu0 0.0
        %3572 = vmatprep.subr.mxu0 0.0
        %3573 = vmatpush1.msra.mxu0 0.0
        %3574 = vmatprep.subr.mxu0 0.0
        %3575 = vmatpush1.msra.mxu0 0.0
        %3576 = vmatprep.subr.mxu0 0.0
        %3577 = vmatpush1.msra.mxu0 0.0
        %3578 = vmatprep.subr.mxu0 0.0
        %3579 = vmatpush1.msra.mxu0 0.0
        %3580 = vmatprep.subr.mxu0 0.0
        %3581 = vmatpush1.msra.mxu0 0.0
        %3582 = vmatprep.subr.mxu0 0.0
        %3583 = vmatpush1.msra.mxu0 0.0
        %3584 = vmatprep.subr.mxu0 0.0
        %3585 = vmatpush1.msra.mxu0 0.0
        %3586 = vmatprep.mubr.f32.mxu0 0.0
        %3587 = vmatmul.mubr.f32.gmra.mrb[0].mxu0 %v3498
        %v3588 = vpop.f32.mrb[0].mxu0
        %v3589 = vadd.f32 0.0, %v3588
        %v3590 = vpop.f32.mrb[0].mxu0
        %3591 = vmatprep.mubr.f32.mxu0 0.0
        %3592 = vmatmul.mubr.f32.gmra.mrb[0].mxu0 %v3499
        %v3593 = vpop.f32.mrb[0].mxu0
        %v3594 = vadd.f32 0.0, %v3593
        %v3595 = vpop.f32.mrb[0].mxu0
        %3596 = vmatprep.mubr.f32.mxu0 0.0
        %3597 = vmatmul.mubr.f32.gmra.mrb[0].mxu0 %v3500
        %v3598 = vpop.f32.mrb[0].mxu0
        %v3599 = vadd.f32 0.0, %v3598
        %v3600 = vpop.f32.mrb[0].mxu0
        %3601 = vmatprep.mubr.f32.mxu0 0.0
        %3602 = vmatmul.mubr.f32.gmra.mrb[0].mxu0 %v3501
        %v3603 = vpop.f32.mrb[0].mxu0
        %v3604 = vadd.f32 0.0, %v3603
        %v3605 = vpop.f32.mrb[0].mxu0
        %3606 = vmatprep.mubr.f32.mxu0 0.0
        %3607 = vmatmul.mubr.f32.gmra.mrb[0].mxu0 %v3502
        %v3608 = vpop.f32.mrb[0].mxu0
        %v3609 = vadd.f32 0.0, %v3608
        %v3610 = vpop.f32.mrb[0].mxu0
        %3611 = vmatprep.mubr.f32.mxu0 0.0
        %3612 = vmatmul.mubr.f32.gmra.mrb[0].mxu0 %v3503
        %v3613 = vpop.f32.mrb[0].mxu0
        %v3614 = vadd.f32 0.0, %v3613
        %v3615 = vpop.f32.mrb[0].mxu0
        %3616 = vmatprep.mubr.f32.mxu0 0.0
        %3617 = vmatmul.mubr.f32.gmra.mrb[0].mxu0 %v3504
        %v3618 = vpop.f32.mrb[0].mxu0
        %v3619 = vadd.f32 0.0, %v3618
        %v3620 = vpop.f32.mrb[0].mxu0
        %3621 = vmatprep.mubr.f32.mxu0 0.0
        %3622 = vmatmul.mubr.f32.gmra.mrb[0].mxu0 %v3505
        %v3623 = vpop.f32.mrb[0].mxu0
        %v3624 = vadd.f32 0.0, %v3623
        %v3625 = vpop.f32.mrb[0].mxu0
        %3626 = vdwg.mxu0
        %v3627 = vadd.f32 %v3490, %v3589
        %v3628 = vadd.f32 %v3491, %v3594
        %v3629 = vadd.f32 %v3492, %v3599
        %v3630 = vadd.f32 %v3493, %v3604
        %v3631 = vadd.f32 %v3494, %v3609
        %v3632 = vadd.f32 %v3495, %v3614
        %v3633 = vadd.f32 %v3496, %v3619
        %v3634 = vadd.f32 %v3497, %v3624
        %v3635 = vadd.f32 %v3627, %v2384
        %v3636 = vadd.f32 %v3628, %v2384
        %v3637 = vadd.f32 %v3629, %v2384
        %v3638 = vadd.f32 %v3630, %v2384
        %v3639 = vadd.f32 %v3631, %v2384
        %v3640 = vadd.f32 %v3632, %v2384
        %v3641 = vadd.f32 %v3633, %v2384
        %v3642 = vadd.f32 %v3634, %v2384
        %3643 = vst [vmem:[%s271 + $0x80] sm:$0xff] %v3635
        %3644 = vst [vmem:[%s271 + $0x88] sm:$0xff] %v3636
        %3645 = vst [vmem:[%s271 + $0x90] sm:$0xff] %v3637
        %3646 = vst [vmem:[%s271 + $0x98] sm:$0xff] %v3638
        %3647 = vst [vmem:[%s271 + $0xa0] sm:$0xff] %v3639
        %3648 = vst [vmem:[%s271 + $0xa8] sm:$0xff] %v3640
        %3649 = vst [vmem:[%s271 + $0xb0] sm:$0xff] %v3641
        %3650 = vst [vmem:[%s271 + $0xb8] sm:$0xff] %v3642
        %s3651 = sand.u32 %s141, 1
        %s3652 = scalar_lea.sflag [#allocation5], %s3651
        %s3653 = sand.u32 %s141, 1
        %s3654 = smul.addr %s3653, 192
        %s3655 = scalar_lea.vmem [#allocation9], %s3654
        // Predicated region
        $region53: #{tpu_custom_call.1} parent=39 // pred_check
          %p3656 = pneg %p151
        $region54: #{tpu_custom_call.1} parent=39 // pred_check_branch
          %3658 = sbr.rel (%p3656) target = $region56
        $region55: #{tpu_custom_call.1} parent=39 // pred_region
          %s3660 = ssub.s32 3072, 3072
          %3661 = vsyncadd %s3652, %s3660
          %s3662 = smul.addr %s23, 24
          %s3663 = smul.addr %s3662, 128
          %s3664 = scalar_lea.hbm %s5, %s3663
          %s3665 = sshll.u32 %s3655, 4
          %s3666 = int_to_ptr.vmem [resolvable:$true] %s3665
          %3671 = dma.vmem_to_hbm [thread:$0]  %s3666, 3072, %s3664, %s3652, 128, 128, 8
        $region56: #{tpu_custom_call.1} parent=39 // pred_fallthru
          _
      $region40: #{tpu_custom_call.1} parent=5 // pred_fallthru
        _
      %p3672 = scmp.le.s32.totalorder 2, %s18
      // Predicated region
      $region57: #{tpu_custom_call.1} parent=5 // pred_check
        %p3673 = pneg %p3672
      $region58: #{tpu_custom_call.1} parent=5 // pred_check_branch
        %3675 = sbr.rel (%p3673) target = $region60
      $region59: #{tpu_custom_call.1} parent=5 // pred_region
        %s3676 = ssub.s32 %s18, 2
        // Predicated region
        $region61: #{tpu_custom_call.1} parent=59 // pred_check
          %p3677 = pneg %p157
        $region62: #{tpu_custom_call.1} parent=59 // pred_check_branch
          %3679 = sbr.rel (%p3677) target = $region64
        $region63: #{tpu_custom_call.1} parent=59 // pred_region
          %s3680 = sand.u32 %s142, 1
          %s3681 = scalar_lea.sflag [#allocation5], %s3680
          %s3682 = sand.u32 %s142, 1
          %s3683 = smul.addr %s3682, 192
          %s3684 = scalar_lea.vmem [#allocation9], %s3683
          %3685 = dma.done %s3681, 3072
        $region64: #{tpu_custom_call.1} parent=59 // pred_fallthru
          _
      $region60: #{tpu_custom_call.1} parent=5 // pred_fallthru
        _
    $region6: #{tpu_custom_call.1} parent=1 // loop_footer
      %s22 = sadd.s32 1, %s18
    $region7: #{tpu_custom_call.1} parent=1 // loop_footer_branch
      %17 = sbr.rel target = $region3
    $region8: #{tpu_custom_call.1} parent=1 // loop_exit
      _
    %3686 = vsyncpa [#allocation4], 1
    %s3687 = scalar_lea.sflag [#allocation4], 1
    %3688 = vsyncpa %s3687, 1
    %3689 = vsyncpa [#allocation7], 1
    %3690 = vsyncpa [#allocation5], 1
    %s3691 = scalar_lea.sflag [#allocation5], 1
    %3692 = vsyncpa %s3691, 1

</llo_original>
